<compile_context>
chip_gen: v7x
topology: tpu7x:2x2x1
jax: 0.10.0
libtpu: 0.0.40
codegen_flags: <defaults>
</compile_context>

<pallas_src>
import jax
import jax.numpy as jnp
from jax.experimental import pallas as pl
from jax.experimental.pallas import tpu as pltpu

# Hyperparameters (small but consistent with the module)
BERT_DIM = 768
HIDDEN   = 32
HEADS    = 8
C        = HIDDEN // HEADS          # per-head channels
OUT_CH   = 5
LAYERS   = 2
TYPES    = 2                        # ('spatial', 'directed') edge types
N_NODES  = 16
SLAB     = HEADS * N_NODES          # 128 lanes: head-major (lane = head*N + src)
OUT_PAD  = 128                      # lane-dense output width (sliced to OUT_CH outside)
NEG_INF  = -1e30


def layoutgnn_kernel(
    text_ref,    # [1, N, 768]  bf16   per-graph BERT embeddings
    spat_ref,    # [1, N, 32]   f32    precomputed LayoutLM spatial embeddings
    ea_ref,      # [1, L, T, N, 128] f32  edge_attr*coef + (-1e30 where no edge)
    w_text_ref,  # [768, 32]    bf16   proj_w folded through concat_projection
    w_mats_ref,  # [32, 512]    f32    W_spat | W_layer0 | W_layer1 | out_w (lane-padded)
    rowp_ref,    # [8, 128]     f32    b_in, gat biases, ln gamma/beta, out bias
    consts_ref,  # [136, 128]   f32    Expand | head_mask | seg_sum  /  E_h2lane
    o_ref,       # [1, N, 128]  f32
):
    f32 = jnp.float32
    N = N_NODES

    # ---- structural constants (head-major lane layout) -----------------------
    expand   = consts_ref[0:SLAB, 0:N]                              # [128, 16]
    head_msk = consts_ref[0:SLAB, N:N + HIDDEN]                     # [128, 32]
    seg_sum  = consts_ref[0:SLAB, N + HIDDEN:N + HIDDEN + HEADS]    # [128, 8]
    e_h2lane = consts_ref[SLAB:SLAB + HEADS, :]                     # [8, 128]

    # ---- folded input projection (bf16 matmul on the MXU, f32 accumulate) ----
    x = jnp.dot(text_ref[0], w_text_ref[...], preferred_element_type=f32)
    x = x + jnp.dot(spat_ref[0], w_mats_ref[:, 0:HIDDEN], preferred_element_type=f32)
    x = x + rowp_ref[0:1, 0:HIDDEN]
    x = jnp.maximum(x, 0.0)                 # ReLU (dropout = identity in eval)
    x0 = x

    # ---- heterogeneous GAT layers --------------------------------------------
    for l in range(LAYERS):
        base = 128 * (l + 1)
        # one matmul gives h / a_dst / a_src for BOTH edge types:
        # columns: h0[0:32] adst0[32:40] h1[40:72] adst1[72:80] asrc_all[80:96]
        feats = jnp.dot(x, w_mats_ref[:, base:base + 96],
                        preferred_element_type=f32)                 # [16, 96]
        asrc_T = jnp.transpose(feats[:, 80:96])                     # [16(t*8+h), 16(src)]

        agg = rowp_ref[1 + l:2 + l, 0:HIDDEN]                       # sum of both GAT biases

        for t in range(TYPES):
            h_t  = feats[:, t * 40:t * 40 + 32]                     # [16, 32]
            adst = feats[:, t * 40 + 32:t * 40 + 40]                # [16, 8]
            # a_src laid out along lanes: [1, 128], lane = head*16 + src
            asrc_row = jnp.concatenate(
                [asrc_T[t * HEADS + h:t * HEADS + h + 1, :] for h in range(HEADS)],
                axis=1)

            # alpha[dst, head*16+src] = a_dst + a_src + edge_attr*coef  (mask baked in)
            alpha = (jnp.dot(adst, e_h2lane, preferred_element_type=f32)
                     + asrc_row + ea_ref[0, l, t])                  # [16, 128]
            alpha = jnp.where(alpha > 0, alpha, 0.2 * alpha)        # LeakyReLU(0.2)
            alpha = alpha - jnp.max(alpha, axis=1, keepdims=True)   # stability (masked -> 0)
            e = jnp.exp(alpha)

            denom = jnp.dot(e, seg_sum, preferred_element_type=f32)            # [16, 8]
            recip = pl.reciprocal(jnp.maximum(denom, 1e-30), approx=True)
            attn = e * jnp.dot(recip, e_h2lane, preferred_element_type=f32)    # softmax

            # block-structured value matmul: [16,128] @ [128,32] replaces 8 tiny matmuls
            h_block = jnp.dot(expand, h_t, preferred_element_type=f32) * head_msk
            agg = agg + jnp.dot(attn, h_block, preferred_element_type=f32)     # [16, 32]

        y = jnp.maximum(agg, 0.0)                                   # ReLU
        mean = jnp.mean(y, axis=1, keepdims=True)                   # LayerNorm(eps=1e-5)
        var = jnp.mean((y - mean) ** 2, axis=1, keepdims=True)
        y = (y - mean) * jax.lax.rsqrt(var + 1e-5)
        y = y * rowp_ref[3 + l:4 + l, 0:HIDDEN] + rowp_ref[5 + l:6 + l, 0:HIDDEN]
        x = y + x0 if l == LAYERS - 1 else y                        # residual (last layer)

    # lane-dense (128-wide) output; sliced to OUT_CH in the wrapper
    o_ref[0] = (jnp.dot(x, w_mats_ref[:, 384:512], preferred_element_type=f32)
                + rowp_ref[7:8, :])


def layoutgnn_forward(text_bf16, spat, ea_slab, w_text_bf16, w_mats, row_params, consts):
    g = text_bf16.shape[0]
    n = N_NODES
    in_specs = [
        pl.BlockSpec((1, n, BERT_DIM), lambda i: (i, 0, 0)),
        pl.BlockSpec((1, n, HIDDEN), lambda i: (i, 0, 0)),
        pl.BlockSpec((1, LAYERS, TYPES, n, SLAB), lambda i: (i, 0, 0, 0, 0)),
        pl.BlockSpec((BERT_DIM, HIDDEN), lambda i: (0, 0)),
        pl.BlockSpec((HIDDEN, 512), lambda i: (0, 0)),
        pl.BlockSpec((8, 128), lambda i: (0, 0)),
        pl.BlockSpec((SLAB + HEADS, 128), lambda i: (0, 0)),
    ]
    out = pl.pallas_call(
        layoutgnn_kernel,
        out_shape=jax.ShapeDtypeStruct((g, n, OUT_PAD), jnp.float32),
        grid=(g,),
        in_specs=in_specs,
        out_specs=pl.BlockSpec((1, n, OUT_PAD), lambda i: (i, 0, 0)),
        compiler_params=pltpu.CompilerParams(dimension_semantics=("parallel",)),
    )(text_bf16, spat, ea_slab, w_text_bf16, w_mats, row_params, consts)
    return out[:, :, :OUT_CH]


# --------------------------- host-side parameter prep ---------------------------

def init_raw_params(key):
    ks = jax.random.split(key, 16)
    sd = 0.05
    f32 = jnp.float32
    raw = dict(
        proj_w=jax.random.normal(ks[0], (BERT_DIM, HIDDEN // 2), f32) * sd,
        proj_b=jax.random.normal(ks[1], (1, HIDDEN // 2), f32) * sd,
        cat_w=jax.random.normal(ks[4], (HIDDEN // 2 + HIDDEN, HIDDEN), f32) * sd,
        cat_b=jax.random.normal(ks[5], (1, HIDDEN), f32) * sd,
        lin_w=jax.random.normal(ks[6], (LAYERS, TYPES, HIDDEN, HIDDEN), f32) * sd,
        att_src=jax.random.normal(ks[7], (LAYERS, TYPES, HEADS, C), f32) * sd,
        att_dst=jax.random.normal(ks[8], (LAYERS, TYPES, HEADS, C), f32) * sd,
        lin_edge_w=jax.random.normal(ks[9], (LAYERS, TYPES, HIDDEN), f32) * sd,   # Linear(1, H)
        att_edge=jax.random.normal(ks[10], (LAYERS, TYPES, HEADS, C), f32) * sd,
        gat_b=jax.random.normal(ks[11], (LAYERS, TYPES, HIDDEN), f32) * sd,
        ln_g=jnp.ones((LAYERS, HIDDEN), f32),
        ln_b=jnp.zeros((LAYERS, HIDDEN), f32),
        out_w=jax.random.normal(ks[12], (HIDDEN, OUT_CH), f32) * sd,
        out_b=jax.random.normal(ks[13], (1, OUT_CH), f32) * sd,
    )
    x_tab = jax.random.normal(ks[2], (1001, HIDDEN // 4), f32) * sd   # nn.Embedding(1001, H/4)
    y_tab = jax.random.normal(ks[3], (1001, HIDDEN // 4), f32) * sd
    return raw, x_tab, y_tab


def fold_params(raw):
    """Fold & pack raw module parameters into the kernel operand set."""
    f32 = jnp.float32
    # input projection folding: x = relu(text @ W_text + spat @ W_spat + b_in)
    w_text = raw['proj_w'] @ raw['cat_w'][:HIDDEN // 2, :]                       # [768, 32]
    w_spat = raw['cat_w'][HIDDEN // 2:, :]                                       # [32, 32]
    b_in = raw['proj_b'] @ raw['cat_w'][:HIDDEN // 2, :] + raw['cat_b']          # [1, 32]

    # fold block-diagonal att_src/att_dst through lin_w
    lin_r = raw['lin_w'].reshape(LAYERS, TYPES, HIDDEN, HEADS, C)
    w_asrc = jnp.einsum('ltihc,lthc->ltih', lin_r, raw['att_src'])               # [L,T,32,8]
    w_adst = jnp.einsum('ltihc,lthc->ltih', lin_r, raw['att_dst'])               # [L,T,32,8]
    # edge_dim=1  =>  per-head scalar coefficient on edge_attr
    coef = (raw['lin_edge_w'].reshape(LAYERS, TYPES, HEADS, C) * raw['att_edge']).sum(-1)

    # one [32, 96] weight per layer: h0 | adst0 | h1 | adst1 | asrc0 | asrc1
    w_layers = [jnp.concatenate(
        [raw['lin_w'][l, 0], w_adst[l, 0], raw['lin_w'][l, 1], w_adst[l, 1],
         w_asrc[l, 0], w_asrc[l, 1]], axis=1) for l in range(LAYERS)]

    w_mats = jnp.zeros((HIDDEN, 512), f32)
    w_mats = w_mats.at[:, 0:HIDDEN].set(w_spat)
    w_mats = w_mats.at[:, 128:128 + 96].set(w_layers[0])
    w_mats = w_mats.at[:, 256:256 + 96].set(w_layers[1])
    w_mats = w_mats.at[:, 384:384 + OUT_CH].set(raw['out_w'])        # lane-padded out head

    rowp = jnp.zeros((8, 128), f32)
    rowp = rowp.at[0, 0:HIDDEN].set(b_in[0])
    rowp = rowp.at[1, 0:HIDDEN].set(raw['gat_b'][0, 0] + raw['gat_b'][0, 1])
    rowp = rowp.at[2, 0:HIDDEN].set(raw['gat_b'][1, 0] + raw['gat_b'][1, 1])
    rowp = rowp.at[3, 0:HIDDEN].set(raw['ln_g'][0])
    rowp = rowp.at[4, 0:HIDDEN].set(raw['ln_g'][1])
    rowp = rowp.at[5, 0:HIDDEN].set(raw['ln_b'][0])
    rowp = rowp.at[6, 0:HIDDEN].set(raw['ln_b'][1])
    rowp = rowp.at[7, 0:OUT_CH].set(raw['out_b'][0])

    # structural constants (head-major lane layout: lane = head*N + src)
    eye_n = jnp.eye(N_NODES, dtype=f32)
    eye_h = jnp.eye(HEADS, dtype=f32)
    expand   = jnp.tile(eye_n, (HEADS, 1))                           # [128, 16]
    head_msk = jnp.kron(eye_h, jnp.ones((N_NODES, C), f32))          # [128, 32]
    seg_sum  = jnp.kron(eye_h, jnp.ones((N_NODES, 1), f32))          # [128, 8]
    e_h2lane = jnp.kron(eye_h, jnp.ones((1, N_NODES), f32))          # [8, 128]
    consts = jnp.zeros((SLAB + HEADS, 128), f32)
    consts = consts.at[0:SLAB, 0:N_NODES].set(expand)
    consts = consts.at[0:SLAB, N_NODES:N_NODES + HIDDEN].set(head_msk)
    consts = consts.at[0:SLAB, N_NODES + HIDDEN:N_NODES + HIDDEN + HEADS].set(seg_sum)
    consts = consts.at[SLAB:, :].set(e_h2lane)

    return w_text.astype(jnp.bfloat16), w_mats, rowp, consts, coef


def build_edge_slab(adj, eattr, coef):
    """[G,T,N,N] adjacency / edge attrs -> [G,L,T,N,HEADS*N] slab with mask baked in."""
    base = (eattr[:, None, :, :, None, :] *
            coef[None, :, :, None, :, None])                        # [G,L,T,N,H,N]
    mask = jnp.where(adj[:, None, :, :, None, :] > 0, 0.0, NEG_INF)
    slab = base + mask
    return slab.reshape(adj.shape[0], LAYERS, TYPES, N_NODES, SLAB).astype(jnp.float32)


def build_graph(key, n):
    """Dense adjacency/edge-attr per edge type, mimicking GATConv(add_self_loops=True,
    fill_value='mean'): existing self loops removed, re-added with mean incoming attr."""
    k_a0, k_a1, k_e0, k_e1 = jax.random.split(key, 4)
    adjs, eattrs = [], []
    for k_a, k_e in ((k_a0, k_e0), (k_a1, k_e1)):
        a = (jax.random.uniform(k_a, (n, n)) < 0.35).astype(jnp.float32)
        a = a * (1.0 - jnp.eye(n, dtype=jnp.float32))
        ea = jax.random.uniform(k_e, (n, n)) * a
        deg = a.sum(axis=1)
        mean_attr = ea.sum(axis=1) / jnp.maximum(deg, 1.0)
        a = a + jnp.eye(n, dtype=jnp.float32)
        ea = ea + jnp.diag(mean_attr)
        adjs.append(a)
        eattrs.append(ea)
    return jnp.stack(adjs), jnp.stack(eattrs)


if __name__ == "__main__":
    key = jax.random.PRNGKey(0)
    k_par, k_txt, k_box, k_graph = jax.random.split(key, 4)
    raw, x_tab, y_tab = init_raw_params(k_par)
    w_text_bf16, w_mats, rowp, consts, coef = fold_params(raw)

    G = 4                                           # graphs per call (parallel grid axis)
    text_emb = jax.random.normal(k_txt, (G, N_NODES, BERT_DIM), jnp.float32)
    bbox = jax.random.randint(k_box, (G, N_NODES, 4), 0, 1001)   # LayoutLM (x0,y0,x1,y1)

    # TODO(synk): embedding-table gather (1001 rows) kept in plain JAX glue; no clean
    # dense Pallas equivalent at this table size.
    spatial_emb = jnp.concatenate(
        [jnp.take(x_tab, bbox[..., 0], axis=0),
         jnp.take(y_tab, bbox[..., 1], axis=0),
         jnp.take(x_tab, bbox[..., 2], axis=0),
         jnp.take(y_tab, bbox[..., 3], axis=0)], axis=-1)        # [G, N, HIDDEN]

    adjs, eattrs = [], []
    for kk in jax.random.split(k_graph, G):
        a, e = build_graph(kk, N_NODES)
        adjs.append(a)
        eattrs.append(e)
    adj = jnp.stack(adjs)          # [G, TYPES, N, N]
    eattr = jnp.stack(eattrs)      # [G, TYPES, N, N]
    ea_slab = build_edge_slab(adj, eattr, coef)

    out = layoutgnn_forward(text_emb.astype(jnp.bfloat16), spatial_emb, ea_slab,
                            w_text_bf16, w_mats, rowp, consts)
    out = jax.block_until_ready(out)
    assert out.shape == (G, N_NODES, OUT_CH)
    assert bool(jnp.all(jnp.isfinite(out)))
    print("KERNEL_OK")
</pallas_src>

<mosaic_0001>
module attributes {stable_mosaic.version = 11 : i64} {
  func.func @layoutgnn_kernel(%arg0: i32, %arg1: memref<1x16x768xbf16, #tpu.memory_space<vmem>>, %arg2: memref<1x16x32xf32, #tpu.memory_space<vmem>>, %arg3: memref<1x2x2x16x128xf32, #tpu.memory_space<vmem>>, %arg4: memref<768x32xbf16, #tpu.memory_space<vmem>>, %arg5: memref<32x512xf32, #tpu.memory_space<vmem>>, %arg6: memref<8x128xf32, #tpu.memory_space<vmem>>, %arg7: memref<136x128xf32, #tpu.memory_space<vmem>>, %arg8: memref<1x16x128xf32, #tpu.memory_space<vmem>>) attributes {dimension_semantics = [#tpu.dimension_semantics<parallel>], iteration_bounds = array<i64: 4>, scalar_prefetch = 0 : i64, scratch_operands = 0 : i64, tpu.core_type = #tpu.core_type<tc>, window_params = [{transform_indices = @transform_0, window_bounds = array<i64: 1, 16, 768>}, {transform_indices = @transform_1, window_bounds = array<i64: 1, 16, 32>}, {transform_indices = @transform_2, window_bounds = array<i64: 1, 2, 2, 16, 128>}, {pipeline_mode = #tpu.pipeline_mode<synchronous>, transform_indices = @transform_3, window_bounds = array<i64: 768, 32>}, {pipeline_mode = #tpu.pipeline_mode<synchronous>, transform_indices = @transform_4, window_bounds = array<i64: 32, 512>}, {pipeline_mode = #tpu.pipeline_mode<synchronous>, transform_indices = @transform_5, window_bounds = array<i64: 8, 128>}, {pipeline_mode = #tpu.pipeline_mode<synchronous>, transform_indices = @transform_6, window_bounds = array<i64: 136, 128>}, {transform_indices = @transform_7, window_bounds = array<i64: 1, 16, 128>}]} {
    %c0 = arith.constant 0 : index
    %c0_0 = arith.constant 0 : index
    %0 = vector.load %arg7[%c0, %c0_0] : memref<136x128xf32, #tpu.memory_space<vmem>>, vector<128x16xf32>
    %c0_1 = arith.constant 0 : index
    %c16 = arith.constant 16 : index
    %1 = vector.load %arg7[%c0_1, %c16] : memref<136x128xf32, #tpu.memory_space<vmem>>, vector<128x32xf32>
    %c0_2 = arith.constant 0 : index
    %c48 = arith.constant 48 : index
    %2 = vector.load %arg7[%c0_2, %c48] : memref<136x128xf32, #tpu.memory_space<vmem>>, vector<128x8xf32>
    %c128 = arith.constant 128 : index
    %c0_3 = arith.constant 0 : index
    %3 = vector.load %arg7[%c128, %c0_3] : memref<136x128xf32, #tpu.memory_space<vmem>>, vector<8x128xf32>
    %c0_4 = arith.constant 0 : index
    %c0_5 = arith.constant 0 : index
    %c0_6 = arith.constant 0 : index
    %4 = vector.load %arg1[%c0_4, %c0_5, %c0_6] : memref<1x16x768xbf16, #tpu.memory_space<vmem>>, vector<1x16x768xbf16>
    %5 = vector.shape_cast %4 : vector<1x16x768xbf16> to vector<16x768xbf16>
    %c0_7 = arith.constant 0 : index
    %c0_8 = arith.constant 0 : index
    %6 = vector.load %arg4[%c0_7, %c0_8] : memref<768x32xbf16, #tpu.memory_space<vmem>>, vector<768x32xbf16>
    %cst = arith.constant dense<0.000000e+00> : vector<16x32xf32>
    %7 = tpu.matmul %5, %6, %cst {dimension_numbers = #tpu.dot_dimension_numbers<[1], [0], [0], [1], [0, 0, 1, 1], [], []>} : vector<16x768xbf16>, vector<768x32xbf16>, vector<16x32xf32> -> vector<16x32xf32>
    %c0_9 = arith.constant 0 : index
    %c0_10 = arith.constant 0 : index
    %c0_11 = arith.constant 0 : index
    %8 = vector.load %arg2[%c0_9, %c0_10, %c0_11] : memref<1x16x32xf32, #tpu.memory_space<vmem>>, vector<1x16x32xf32>
    %9 = vector.shape_cast %8 : vector<1x16x32xf32> to vector<16x32xf32>
    %c0_12 = arith.constant 0 : index
    %c0_13 = arith.constant 0 : index
    %10 = vector.load %arg5[%c0_12, %c0_13] : memref<32x512xf32, #tpu.memory_space<vmem>>, vector<32x32xf32>
    %cst_14 = arith.constant dense<0.000000e+00> : vector<16x32xf32>
    %11 = tpu.matmul %9, %10, %cst_14 {dimension_numbers = #tpu.dot_dimension_numbers<[1], [0], [0], [1], [0, 0, 1, 1], [], []>} : vector<16x32xf32>, vector<32x32xf32>, vector<16x32xf32> -> vector<16x32xf32>
    %12 = arith.addf %7, %11 : vector<16x32xf32>
    %c0_15 = arith.constant 0 : index
    %c0_16 = arith.constant 0 : index
    %13 = vector.load %arg6[%c0_15, %c0_16] : memref<8x128xf32, #tpu.memory_space<vmem>>, vector<1x32xf32>
    %14 = vector.broadcast %13 : vector<1x32xf32> to vector<16x32xf32>
    %15 = arith.addf %12, %14 : vector<16x32xf32>
    %cst_17 = arith.constant 0.000000e+00 : f32
    %16 = vector.broadcast %cst_17 : f32 to vector<16x32xf32>
    %17 = arith.maximumf %15, %16 : vector<16x32xf32>
    %c0_18 = arith.constant 0 : index
    %c128_19 = arith.constant 128 : index
    %18 = vector.load %arg5[%c0_18, %c128_19] : memref<32x512xf32, #tpu.memory_space<vmem>>, vector<32x96xf32>
    %cst_20 = arith.constant dense<0.000000e+00> : vector<16x96xf32>
    %19 = tpu.matmul %17, %18, %cst_20 {dimension_numbers = #tpu.dot_dimension_numbers<[1], [0], [0], [1], [0, 0, 1, 1], [], []>} : vector<16x32xf32>, vector<32x96xf32>, vector<16x96xf32> -> vector<16x96xf32>
    %20 = vector.extract_strided_slice %19 {offsets = [0, 80], sizes = [16, 16], strides = [1, 1]} : vector<16x96xf32> to vector<16x16xf32>
    %21 = tpu.transpose %20, [1, 0] : vector<16x16xf32> -> vector<16x16xf32>
    %c1 = arith.constant 1 : index
    %c0_21 = arith.constant 0 : index
    %22 = vector.load %arg6[%c1, %c0_21] : memref<8x128xf32, #tpu.memory_space<vmem>>, vector<1x32xf32>
    %23 = vector.extract_strided_slice %19 {offsets = [0, 0], sizes = [16, 32], strides = [1, 1]} : vector<16x96xf32> to vector<16x32xf32>
    %24 = vector.extract_strided_slice %19 {offsets = [0, 32], sizes = [16, 8], strides = [1, 1]} : vector<16x96xf32> to vector<16x8xf32>
    %25 = vector.extract_strided_slice %21 {offsets = [0, 0], sizes = [1, 16], strides = [1, 1]} : vector<16x16xf32> to vector<1x16xf32>
    %26 = vector.extract_strided_slice %21 {offsets = [1, 0], sizes = [1, 16], strides = [1, 1]} : vector<16x16xf32> to vector<1x16xf32>
    %27 = vector.extract_strided_slice %21 {offsets = [2, 0], sizes = [1, 16], strides = [1, 1]} : vector<16x16xf32> to vector<1x16xf32>
    %28 = vector.extract_strided_slice %21 {offsets = [3, 0], sizes = [1, 16], strides = [1, 1]} : vector<16x16xf32> to vector<1x16xf32>
    %29 = vector.extract_strided_slice %21 {offsets = [4, 0], sizes = [1, 16], strides = [1, 1]} : vector<16x16xf32> to vector<1x16xf32>
    %30 = vector.extract_strided_slice %21 {offsets = [5, 0], sizes = [1, 16], strides = [1, 1]} : vector<16x16xf32> to vector<1x16xf32>
    %31 = vector.extract_strided_slice %21 {offsets = [6, 0], sizes = [1, 16], strides = [1, 1]} : vector<16x16xf32> to vector<1x16xf32>
    %32 = vector.extract_strided_slice %21 {offsets = [7, 0], sizes = [1, 16], strides = [1, 1]} : vector<16x16xf32> to vector<1x16xf32>
    %33 = tpu.concatenate %25, %26, %27, %28, %29, %30, %31, %32 in 1 : vector<1x16xf32>, vector<1x16xf32>, vector<1x16xf32>, vector<1x16xf32>, vector<1x16xf32>, vector<1x16xf32>, vector<1x16xf32>, vector<1x16xf32> -> vector<1x128xf32>
    %cst_22 = arith.constant dense<0.000000e+00> : vector<16x128xf32>
    %34 = tpu.matmul %24, %3, %cst_22 {dimension_numbers = #tpu.dot_dimension_numbers<[1], [0], [0], [1], [0, 0, 1, 1], [], []>} : vector<16x8xf32>, vector<8x128xf32>, vector<16x128xf32> -> vector<16x128xf32>
    %35 = vector.broadcast %33 : vector<1x128xf32> to vector<16x128xf32>
    %36 = arith.addf %34, %35 : vector<16x128xf32>
    %c0_23 = arith.constant 0 : index
    %c0_24 = arith.constant 0 : index
    %c0_25 = arith.constant 0 : index
    %c0_26 = arith.constant 0 : index
    %c0_27 = arith.constant 0 : index
    %37 = vector.load %arg3[%c0_23, %c0_24, %c0_25, %c0_26, %c0_27] : memref<1x2x2x16x128xf32, #tpu.memory_space<vmem>>, vector<1x1x1x16x128xf32>
    %38 = vector.shape_cast %37 : vector<1x1x1x16x128xf32> to vector<16x128xf32>
    %39 = arith.addf %36, %38 : vector<16x128xf32>
    %cst_28 = arith.constant 0.000000e+00 : f32
    %40 = vector.broadcast %cst_28 : f32 to vector<16x128xf32>
    %41 = arith.cmpf ogt, %39, %40 : vector<16x128xf32>
    %cst_29 = arith.constant 2.000000e-01 : f32
    %42 = vector.broadcast %cst_29 : f32 to vector<16x128xf32>
    %43 = arith.mulf %42, %39 : vector<16x128xf32>
    %44 = arith.select %41, %39, %43 : vector<16x128xi1>, vector<16x128xf32>
    %cst_30 = arith.constant dense<0xFF800000> : vector<16xf32>
    %45 = vector.multi_reduction <maximumf>, %44, %cst_30 [1] : vector<16x128xf32> to vector<16xf32>
    %46 = vector.shape_cast %45 : vector<16xf32> to vector<16x1xf32>
    %47 = vector.broadcast %46 : vector<16x1xf32> to vector<16x128xf32>
    %48 = arith.subf %44, %47 : vector<16x128xf32>
    %49 = math.exp %48 : vector<16x128xf32>
    %cst_31 = arith.constant dense<0.000000e+00> : vector<16x8xf32>
    %50 = tpu.matmul %49, %2, %cst_31 {dimension_numbers = #tpu.dot_dimension_numbers<[1], [0], [0], [1], [0, 0, 1, 1], [], []>} : vector<16x128xf32>, vector<128x8xf32>, vector<16x8xf32> -> vector<16x8xf32>
    %cst_32 = arith.constant 1.000000e-30 : f32
    %51 = vector.broadcast %cst_32 : f32 to vector<16x8xf32>
    %52 = arith.maximumf %50, %51 : vector<16x8xf32>
    %53 = tpu.reciprocal %52 {approx = true} : vector<16x8xf32> -> vector<16x8xf32>
    %cst_33 = arith.constant dense<0.000000e+00> : vector<16x128xf32>
    %54 = tpu.matmul %53, %3, %cst_33 {dimension_numbers = #tpu.dot_dimension_numbers<[1], [0], [0], [1], [0, 0, 1, 1], [], []>} : vector<16x8xf32>, vector<8x128xf32>, vector<16x128xf32> -> vector<16x128xf32>
    %55 = arith.mulf %49, %54 : vector<16x128xf32>
    %cst_34 = arith.constant dense<0.000000e+00> : vector<128x32xf32>
    %56 = tpu.matmul %0, %23, %cst_34 {dimension_numbers = #tpu.dot_dimension_numbers<[1], [0], [0], [1], [0, 0, 1, 1], [], []>} : vector<128x16xf32>, vector<16x32xf32>, vector<128x32xf32> -> vector<128x32xf32>
    %57 = arith.mulf %56, %1 : vector<128x32xf32>
    %cst_35 = arith.constant dense<0.000000e+00> : vector<16x32xf32>
    %58 = tpu.matmul %55, %57, %cst_35 {dimension_numbers = #tpu.dot_dimension_numbers<[1], [0], [0], [1], [0, 0, 1, 1], [], []>} : vector<16x128xf32>, vector<128x32xf32>, vector<16x32xf32> -> vector<16x32xf32>
    %59 = vector.broadcast %22 : vector<1x32xf32> to vector<16x32xf32>
    %60 = arith.addf %59, %58 : vector<16x32xf32>
    %61 = vector.extract_strided_slice %19 {offsets = [0, 40], sizes = [16, 32], strides = [1, 1]} : vector<16x96xf32> to vector<16x32xf32>
    %62 = vector.extract_strided_slice %19 {offsets = [0, 72], sizes = [16, 8], strides = [1, 1]} : vector<16x96xf32> to vector<16x8xf32>
    %63 = vector.extract_strided_slice %21 {offsets = [8, 0], sizes = [1, 16], strides = [1, 1]} : vector<16x16xf32> to vector<1x16xf32>
    %64 = vector.extract_strided_slice %21 {offsets = [9, 0], sizes = [1, 16], strides = [1, 1]} : vector<16x16xf32> to vector<1x16xf32>
    %65 = vector.extract_strided_slice %21 {offsets = [10, 0], sizes = [1, 16], strides = [1, 1]} : vector<16x16xf32> to vector<1x16xf32>
    %66 = vector.extract_strided_slice %21 {offsets = [11, 0], sizes = [1, 16], strides = [1, 1]} : vector<16x16xf32> to vector<1x16xf32>
    %67 = vector.extract_strided_slice %21 {offsets = [12, 0], sizes = [1, 16], strides = [1, 1]} : vector<16x16xf32> to vector<1x16xf32>
    %68 = vector.extract_strided_slice %21 {offsets = [13, 0], sizes = [1, 16], strides = [1, 1]} : vector<16x16xf32> to vector<1x16xf32>
    %69 = vector.extract_strided_slice %21 {offsets = [14, 0], sizes = [1, 16], strides = [1, 1]} : vector<16x16xf32> to vector<1x16xf32>
    %70 = vector.extract_strided_slice %21 {offsets = [15, 0], sizes = [1, 16], strides = [1, 1]} : vector<16x16xf32> to vector<1x16xf32>
    %71 = tpu.concatenate %63, %64, %65, %66, %67, %68, %69, %70 in 1 : vector<1x16xf32>, vector<1x16xf32>, vector<1x16xf32>, vector<1x16xf32>, vector<1x16xf32>, vector<1x16xf32>, vector<1x16xf32>, vector<1x16xf32> -> vector<1x128xf32>
    %cst_36 = arith.constant dense<0.000000e+00> : vector<16x128xf32>
    %72 = tpu.matmul %62, %3, %cst_36 {dimension_numbers = #tpu.dot_dimension_numbers<[1], [0], [0], [1], [0, 0, 1, 1], [], []>} : vector<16x8xf32>, vector<8x128xf32>, vector<16x128xf32> -> vector<16x128xf32>
    %73 = vector.broadcast %71 : vector<1x128xf32> to vector<16x128xf32>
    %74 = arith.addf %72, %73 : vector<16x128xf32>
    %c0_37 = arith.constant 0 : index
    %c0_38 = arith.constant 0 : index
    %c1_39 = arith.constant 1 : index
    %c0_40 = arith.constant 0 : index
    %c0_41 = arith.constant 0 : index
    %75 = vector.load %arg3[%c0_37, %c0_38, %c1_39, %c0_40, %c0_41] : memref<1x2x2x16x128xf32, #tpu.memory_space<vmem>>, vector<1x1x1x16x128xf32>
    %76 = vector.shape_cast %75 : vector<1x1x1x16x128xf32> to vector<16x128xf32>
    %77 = arith.addf %74, %76 : vector<16x128xf32>
    %cst_42 = arith.constant 0.000000e+00 : f32
    %78 = vector.broadcast %cst_42 : f32 to vector<16x128xf32>
    %79 = arith.cmpf ogt, %77, %78 : vector<16x128xf32>
    %cst_43 = arith.constant 2.000000e-01 : f32
    %80 = vector.broadcast %cst_43 : f32 to vector<16x128xf32>
    %81 = arith.mulf %80, %77 : vector<16x128xf32>
    %82 = arith.select %79, %77, %81 : vector<16x128xi1>, vector<16x128xf32>
    %cst_44 = arith.constant dense<0xFF800000> : vector<16xf32>
    %83 = vector.multi_reduction <maximumf>, %82, %cst_44 [1] : vector<16x128xf32> to vector<16xf32>
    %84 = vector.shape_cast %83 : vector<16xf32> to vector<16x1xf32>
    %85 = vector.broadcast %84 : vector<16x1xf32> to vector<16x128xf32>
    %86 = arith.subf %82, %85 : vector<16x128xf32>
    %87 = math.exp %86 : vector<16x128xf32>
    %cst_45 = arith.constant dense<0.000000e+00> : vector<16x8xf32>
    %88 = tpu.matmul %87, %2, %cst_45 {dimension_numbers = #tpu.dot_dimension_numbers<[1], [0], [0], [1], [0, 0, 1, 1], [], []>} : vector<16x128xf32>, vector<128x8xf32>, vector<16x8xf32> -> vector<16x8xf32>
    %cst_46 = arith.constant 1.000000e-30 : f32
    %89 = vector.broadcast %cst_46 : f32 to vector<16x8xf32>
    %90 = arith.maximumf %88, %89 : vector<16x8xf32>
    %91 = tpu.reciprocal %90 {approx = true} : vector<16x8xf32> -> vector<16x8xf32>
    %cst_47 = arith.constant dense<0.000000e+00> : vector<16x128xf32>
    %92 = tpu.matmul %91, %3, %cst_47 {dimension_numbers = #tpu.dot_dimension_numbers<[1], [0], [0], [1], [0, 0, 1, 1], [], []>} : vector<16x8xf32>, vector<8x128xf32>, vector<16x128xf32> -> vector<16x128xf32>
    %93 = arith.mulf %87, %92 : vector<16x128xf32>
    %cst_48 = arith.constant dense<0.000000e+00> : vector<128x32xf32>
    %94 = tpu.matmul %0, %61, %cst_48 {dimension_numbers = #tpu.dot_dimension_numbers<[1], [0], [0], [1], [0, 0, 1, 1], [], []>} : vector<128x16xf32>, vector<16x32xf32>, vector<128x32xf32> -> vector<128x32xf32>
    %95 = arith.mulf %94, %1 : vector<128x32xf32>
    %cst_49 = arith.constant dense<0.000000e+00> : vector<16x32xf32>
    %96 = tpu.matmul %93, %95, %cst_49 {dimension_numbers = #tpu.dot_dimension_numbers<[1], [0], [0], [1], [0, 0, 1, 1], [], []>} : vector<16x128xf32>, vector<128x32xf32>, vector<16x32xf32> -> vector<16x32xf32>
    %97 = arith.addf %60, %96 : vector<16x32xf32>
    %cst_50 = arith.constant 0.000000e+00 : f32
    %98 = vector.broadcast %cst_50 : f32 to vector<16x32xf32>
    %99 = arith.maximumf %97, %98 : vector<16x32xf32>
    %cst_51 = arith.constant dense<0.000000e+00> : vector<16xf32>
    %100 = vector.multi_reduction <add>, %99, %cst_51 [1] : vector<16x32xf32> to vector<16xf32>
    %101 = vector.shape_cast %100 : vector<16xf32> to vector<16x1xf32>
    %cst_52 = arith.constant 3.200000e+01 : f32
    %102 = vector.broadcast %cst_52 : f32 to vector<16x1xf32>
    %103 = arith.divf %101, %102 : vector<16x1xf32>
    %104 = vector.broadcast %103 : vector<16x1xf32> to vector<16x32xf32>
    %105 = arith.subf %99, %104 : vector<16x32xf32>
    %106 = arith.mulf %105, %105 : vector<16x32xf32>
    %cst_53 = arith.constant dense<0.000000e+00> : vector<16xf32>
    %107 = vector.multi_reduction <add>, %106, %cst_53 [1] : vector<16x32xf32> to vector<16xf32>
    %108 = vector.shape_cast %107 : vector<16xf32> to vector<16x1xf32>
    %cst_54 = arith.constant 3.200000e+01 : f32
    %109 = vector.broadcast %cst_54 : f32 to vector<16x1xf32>
    %110 = arith.divf %108, %109 : vector<16x1xf32>
    %111 = vector.broadcast %103 : vector<16x1xf32> to vector<16x32xf32>
    %112 = arith.subf %99, %111 : vector<16x32xf32>
    %cst_55 = arith.constant 9.99999974E-6 : f32
    %113 = vector.broadcast %cst_55 : f32 to vector<16x1xf32>
    %114 = arith.addf %110, %113 : vector<16x1xf32>
    %115 = math.rsqrt %114 : vector<16x1xf32>
    %116 = vector.broadcast %115 : vector<16x1xf32> to vector<16x32xf32>
    %117 = arith.mulf %112, %116 : vector<16x32xf32>
    %c3 = arith.constant 3 : index
    %c0_56 = arith.constant 0 : index
    %118 = vector.load %arg6[%c3, %c0_56] : memref<8x128xf32, #tpu.memory_space<vmem>>, vector<1x32xf32>
    %119 = vector.broadcast %118 : vector<1x32xf32> to vector<16x32xf32>
    %120 = arith.mulf %117, %119 : vector<16x32xf32>
    %c5 = arith.constant 5 : index
    %c0_57 = arith.constant 0 : index
    %121 = vector.load %arg6[%c5, %c0_57] : memref<8x128xf32, #tpu.memory_space<vmem>>, vector<1x32xf32>
    %122 = vector.broadcast %121 : vector<1x32xf32> to vector<16x32xf32>
    %123 = arith.addf %120, %122 : vector<16x32xf32>
    %c0_58 = arith.constant 0 : index
    %c256 = arith.constant 256 : index
    %124 = vector.load %arg5[%c0_58, %c256] : memref<32x512xf32, #tpu.memory_space<vmem>>, vector<32x96xf32>
    %cst_59 = arith.constant dense<0.000000e+00> : vector<16x96xf32>
    %125 = tpu.matmul %123, %124, %cst_59 {dimension_numbers = #tpu.dot_dimension_numbers<[1], [0], [0], [1], [0, 0, 1, 1], [], []>} : vector<16x32xf32>, vector<32x96xf32>, vector<16x96xf32> -> vector<16x96xf32>
    %126 = vector.extract_strided_slice %125 {offsets = [0, 80], sizes = [16, 16], strides = [1, 1]} : vector<16x96xf32> to vector<16x16xf32>
    %127 = tpu.transpose %126, [1, 0] : vector<16x16xf32> -> vector<16x16xf32>
    %c2 = arith.constant 2 : index
    %c0_60 = arith.constant 0 : index
    %128 = vector.load %arg6[%c2, %c0_60] : memref<8x128xf32, #tpu.memory_space<vmem>>, vector<1x32xf32>
    %129 = vector.extract_strided_slice %125 {offsets = [0, 0], sizes = [16, 32], strides = [1, 1]} : vector<16x96xf32> to vector<16x32xf32>
    %130 = vector.extract_strided_slice %125 {offsets = [0, 32], sizes = [16, 8], strides = [1, 1]} : vector<16x96xf32> to vector<16x8xf32>
    %131 = vector.extract_strided_slice %127 {offsets = [0, 0], sizes = [1, 16], strides = [1, 1]} : vector<16x16xf32> to vector<1x16xf32>
    %132 = vector.extract_strided_slice %127 {offsets = [1, 0], sizes = [1, 16], strides = [1, 1]} : vector<16x16xf32> to vector<1x16xf32>
    %133 = vector.extract_strided_slice %127 {offsets = [2, 0], sizes = [1, 16], strides = [1, 1]} : vector<16x16xf32> to vector<1x16xf32>
    %134 = vector.extract_strided_slice %127 {offsets = [3, 0], sizes = [1, 16], strides = [1, 1]} : vector<16x16xf32> to vector<1x16xf32>
    %135 = vector.extract_strided_slice %127 {offsets = [4, 0], sizes = [1, 16], strides = [1, 1]} : vector<16x16xf32> to vector<1x16xf32>
    %136 = vector.extract_strided_slice %127 {offsets = [5, 0], sizes = [1, 16], strides = [1, 1]} : vector<16x16xf32> to vector<1x16xf32>
    %137 = vector.extract_strided_slice %127 {offsets = [6, 0], sizes = [1, 16], strides = [1, 1]} : vector<16x16xf32> to vector<1x16xf32>
    %138 = vector.extract_strided_slice %127 {offsets = [7, 0], sizes = [1, 16], strides = [1, 1]} : vector<16x16xf32> to vector<1x16xf32>
    %139 = tpu.concatenate %131, %132, %133, %134, %135, %136, %137, %138 in 1 : vector<1x16xf32>, vector<1x16xf32>, vector<1x16xf32>, vector<1x16xf32>, vector<1x16xf32>, vector<1x16xf32>, vector<1x16xf32>, vector<1x16xf32> -> vector<1x128xf32>
    %cst_61 = arith.constant dense<0.000000e+00> : vector<16x128xf32>
    %140 = tpu.matmul %130, %3, %cst_61 {dimension_numbers = #tpu.dot_dimension_numbers<[1], [0], [0], [1], [0, 0, 1, 1], [], []>} : vector<16x8xf32>, vector<8x128xf32>, vector<16x128xf32> -> vector<16x128xf32>
    %141 = vector.broadcast %139 : vector<1x128xf32> to vector<16x128xf32>
    %142 = arith.addf %140, %141 : vector<16x128xf32>
    %c0_62 = arith.constant 0 : index
    %c1_63 = arith.constant 1 : index
    %c0_64 = arith.constant 0 : index
    %c0_65 = arith.constant 0 : index
    %c0_66 = arith.constant 0 : index
    %143 = vector.load %arg3[%c0_62, %c1_63, %c0_64, %c0_65, %c0_66] : memref<1x2x2x16x128xf32, #tpu.memory_space<vmem>>, vector<1x1x1x16x128xf32>
    %144 = vector.shape_cast %143 : vector<1x1x1x16x128xf32> to vector<16x128xf32>
    %145 = arith.addf %142, %144 : vector<16x128xf32>
    %cst_67 = arith.constant 0.000000e+00 : f32
    %146 = vector.broadcast %cst_67 : f32 to vector<16x128xf32>
    %147 = arith.cmpf ogt, %145, %146 : vector<16x128xf32>
    %cst_68 = arith.constant 2.000000e-01 : f32
    %148 = vector.broadcast %cst_68 : f32 to vector<16x128xf32>
    %149 = arith.mulf %148, %145 : vector<16x128xf32>
    %150 = arith.select %147, %145, %149 : vector<16x128xi1>, vector<16x128xf32>
    %cst_69 = arith.constant dense<0xFF800000> : vector<16xf32>
    %151 = vector.multi_reduction <maximumf>, %150, %cst_69 [1] : vector<16x128xf32> to vector<16xf32>
    %152 = vector.shape_cast %151 : vector<16xf32> to vector<16x1xf32>
    %153 = vector.broadcast %152 : vector<16x1xf32> to vector<16x128xf32>
    %154 = arith.subf %150, %153 : vector<16x128xf32>
    %155 = math.exp %154 : vector<16x128xf32>
    %cst_70 = arith.constant dense<0.000000e+00> : vector<16x8xf32>
    %156 = tpu.matmul %155, %2, %cst_70 {dimension_numbers = #tpu.dot_dimension_numbers<[1], [0], [0], [1], [0, 0, 1, 1], [], []>} : vector<16x128xf32>, vector<128x8xf32>, vector<16x8xf32> -> vector<16x8xf32>
    %cst_71 = arith.constant 1.000000e-30 : f32
    %157 = vector.broadcast %cst_71 : f32 to vector<16x8xf32>
    %158 = arith.maximumf %156, %157 : vector<16x8xf32>
    %159 = tpu.reciprocal %158 {approx = true} : vector<16x8xf32> -> vector<16x8xf32>
    %cst_72 = arith.constant dense<0.000000e+00> : vector<16x128xf32>
    %160 = tpu.matmul %159, %3, %cst_72 {dimension_numbers = #tpu.dot_dimension_numbers<[1], [0], [0], [1], [0, 0, 1, 1], [], []>} : vector<16x8xf32>, vector<8x128xf32>, vector<16x128xf32> -> vector<16x128xf32>
    %161 = arith.mulf %155, %160 : vector<16x128xf32>
    %cst_73 = arith.constant dense<0.000000e+00> : vector<128x32xf32>
    %162 = tpu.matmul %0, %129, %cst_73 {dimension_numbers = #tpu.dot_dimension_numbers<[1], [0], [0], [1], [0, 0, 1, 1], [], []>} : vector<128x16xf32>, vector<16x32xf32>, vector<128x32xf32> -> vector<128x32xf32>
    %163 = arith.mulf %162, %1 : vector<128x32xf32>
    %cst_74 = arith.constant dense<0.000000e+00> : vector<16x32xf32>
    %164 = tpu.matmul %161, %163, %cst_74 {dimension_numbers = #tpu.dot_dimension_numbers<[1], [0], [0], [1], [0, 0, 1, 1], [], []>} : vector<16x128xf32>, vector<128x32xf32>, vector<16x32xf32> -> vector<16x32xf32>
    %165 = vector.broadcast %128 : vector<1x32xf32> to vector<16x32xf32>
    %166 = arith.addf %165, %164 : vector<16x32xf32>
    %167 = vector.extract_strided_slice %125 {offsets = [0, 40], sizes = [16, 32], strides = [1, 1]} : vector<16x96xf32> to vector<16x32xf32>
    %168 = vector.extract_strided_slice %125 {offsets = [0, 72], sizes = [16, 8], strides = [1, 1]} : vector<16x96xf32> to vector<16x8xf32>
    %169 = vector.extract_strided_slice %127 {offsets = [8, 0], sizes = [1, 16], strides = [1, 1]} : vector<16x16xf32> to vector<1x16xf32>
    %170 = vector.extract_strided_slice %127 {offsets = [9, 0], sizes = [1, 16], strides = [1, 1]} : vector<16x16xf32> to vector<1x16xf32>
    %171 = vector.extract_strided_slice %127 {offsets = [10, 0], sizes = [1, 16], strides = [1, 1]} : vector<16x16xf32> to vector<1x16xf32>
    %172 = vector.extract_strided_slice %127 {offsets = [11, 0], sizes = [1, 16], strides = [1, 1]} : vector<16x16xf32> to vector<1x16xf32>
    %173 = vector.extract_strided_slice %127 {offsets = [12, 0], sizes = [1, 16], strides = [1, 1]} : vector<16x16xf32> to vector<1x16xf32>
    %174 = vector.extract_strided_slice %127 {offsets = [13, 0], sizes = [1, 16], strides = [1, 1]} : vector<16x16xf32> to vector<1x16xf32>
    %175 = vector.extract_strided_slice %127 {offsets = [14, 0], sizes = [1, 16], strides = [1, 1]} : vector<16x16xf32> to vector<1x16xf32>
    %176 = vector.extract_strided_slice %127 {offsets = [15, 0], sizes = [1, 16], strides = [1, 1]} : vector<16x16xf32> to vector<1x16xf32>
    %177 = tpu.concatenate %169, %170, %171, %172, %173, %174, %175, %176 in 1 : vector<1x16xf32>, vector<1x16xf32>, vector<1x16xf32>, vector<1x16xf32>, vector<1x16xf32>, vector<1x16xf32>, vector<1x16xf32>, vector<1x16xf32> -> vector<1x128xf32>
    %cst_75 = arith.constant dense<0.000000e+00> : vector<16x128xf32>
    %178 = tpu.matmul %168, %3, %cst_75 {dimension_numbers = #tpu.dot_dimension_numbers<[1], [0], [0], [1], [0, 0, 1, 1], [], []>} : vector<16x8xf32>, vector<8x128xf32>, vector<16x128xf32> -> vector<16x128xf32>
    %179 = vector.broadcast %177 : vector<1x128xf32> to vector<16x128xf32>
    %180 = arith.addf %178, %179 : vector<16x128xf32>
    %c0_76 = arith.constant 0 : index
    %c1_77 = arith.constant 1 : index
    %c1_78 = arith.constant 1 : index
    %c0_79 = arith.constant 0 : index
    %c0_80 = arith.constant 0 : index
    %181 = vector.load %arg3[%c0_76, %c1_77, %c1_78, %c0_79, %c0_80] : memref<1x2x2x16x128xf32, #tpu.memory_space<vmem>>, vector<1x1x1x16x128xf32>
    %182 = vector.shape_cast %181 : vector<1x1x1x16x128xf32> to vector<16x128xf32>
    %183 = arith.addf %180, %182 : vector<16x128xf32>
    %cst_81 = arith.constant 0.000000e+00 : f32
    %184 = vector.broadcast %cst_81 : f32 to vector<16x128xf32>
    %185 = arith.cmpf ogt, %183, %184 : vector<16x128xf32>
    %cst_82 = arith.constant 2.000000e-01 : f32
    %186 = vector.broadcast %cst_82 : f32 to vector<16x128xf32>
    %187 = arith.mulf %186, %183 : vector<16x128xf32>
    %188 = arith.select %185, %183, %187 : vector<16x128xi1>, vector<16x128xf32>
    %cst_83 = arith.constant dense<0xFF800000> : vector<16xf32>
    %189 = vector.multi_reduction <maximumf>, %188, %cst_83 [1] : vector<16x128xf32> to vector<16xf32>
    %190 = vector.shape_cast %189 : vector<16xf32> to vector<16x1xf32>
    %191 = vector.broadcast %190 : vector<16x1xf32> to vector<16x128xf32>
    %192 = arith.subf %188, %191 : vector<16x128xf32>
    %193 = math.exp %192 : vector<16x128xf32>
    %cst_84 = arith.constant dense<0.000000e+00> : vector<16x8xf32>
    %194 = tpu.matmul %193, %2, %cst_84 {dimension_numbers = #tpu.dot_dimension_numbers<[1], [0], [0], [1], [0, 0, 1, 1], [], []>} : vector<16x128xf32>, vector<128x8xf32>, vector<16x8xf32> -> vector<16x8xf32>
    %cst_85 = arith.constant 1.000000e-30 : f32
    %195 = vector.broadcast %cst_85 : f32 to vector<16x8xf32>
    %196 = arith.maximumf %194, %195 : vector<16x8xf32>
    %197 = tpu.reciprocal %196 {approx = true} : vector<16x8xf32> -> vector<16x8xf32>
    %cst_86 = arith.constant dense<0.000000e+00> : vector<16x128xf32>
    %198 = tpu.matmul %197, %3, %cst_86 {dimension_numbers = #tpu.dot_dimension_numbers<[1], [0], [0], [1], [0, 0, 1, 1], [], []>} : vector<16x8xf32>, vector<8x128xf32>, vector<16x128xf32> -> vector<16x128xf32>
    %199 = arith.mulf %193, %198 : vector<16x128xf32>
    %cst_87 = arith.constant dense<0.000000e+00> : vector<128x32xf32>
    %200 = tpu.matmul %0, %167, %cst_87 {dimension_numbers = #tpu.dot_dimension_numbers<[1], [0], [0], [1], [0, 0, 1, 1], [], []>} : vector<128x16xf32>, vector<16x32xf32>, vector<128x32xf32> -> vector<128x32xf32>
    %201 = arith.mulf %200, %1 : vector<128x32xf32>
    %cst_88 = arith.constant dense<0.000000e+00> : vector<16x32xf32>
    %202 = tpu.matmul %199, %201, %cst_88 {dimension_numbers = #tpu.dot_dimension_numbers<[1], [0], [0], [1], [0, 0, 1, 1], [], []>} : vector<16x128xf32>, vector<128x32xf32>, vector<16x32xf32> -> vector<16x32xf32>
    %203 = arith.addf %166, %202 : vector<16x32xf32>
    %cst_89 = arith.constant 0.000000e+00 : f32
    %204 = vector.broadcast %cst_89 : f32 to vector<16x32xf32>
    %205 = arith.maximumf %203, %204 : vector<16x32xf32>
    %cst_90 = arith.constant dense<0.000000e+00> : vector<16xf32>
    %206 = vector.multi_reduction <add>, %205, %cst_90 [1] : vector<16x32xf32> to vector<16xf32>
    %207 = vector.shape_cast %206 : vector<16xf32> to vector<16x1xf32>
    %cst_91 = arith.constant 3.200000e+01 : f32
    %208 = vector.broadcast %cst_91 : f32 to vector<16x1xf32>
    %209 = arith.divf %207, %208 : vector<16x1xf32>
    %210 = vector.broadcast %209 : vector<16x1xf32> to vector<16x32xf32>
    %211 = arith.subf %205, %210 : vector<16x32xf32>
    %212 = arith.mulf %211, %211 : vector<16x32xf32>
    %cst_92 = arith.constant dense<0.000000e+00> : vector<16xf32>
    %213 = vector.multi_reduction <add>, %212, %cst_92 [1] : vector<16x32xf32> to vector<16xf32>
    %214 = vector.shape_cast %213 : vector<16xf32> to vector<16x1xf32>
    %cst_93 = arith.constant 3.200000e+01 : f32
    %215 = vector.broadcast %cst_93 : f32 to vector<16x1xf32>
    %216 = arith.divf %214, %215 : vector<16x1xf32>
    %217 = vector.broadcast %209 : vector<16x1xf32> to vector<16x32xf32>
    %218 = arith.subf %205, %217 : vector<16x32xf32>
    %cst_94 = arith.constant 9.99999974E-6 : f32
    %219 = vector.broadcast %cst_94 : f32 to vector<16x1xf32>
    %220 = arith.addf %216, %219 : vector<16x1xf32>
    %221 = math.rsqrt %220 : vector<16x1xf32>
    %222 = vector.broadcast %221 : vector<16x1xf32> to vector<16x32xf32>
    %223 = arith.mulf %218, %222 : vector<16x32xf32>
    %c4 = arith.constant 4 : index
    %c0_95 = arith.constant 0 : index
    %224 = vector.load %arg6[%c4, %c0_95] : memref<8x128xf32, #tpu.memory_space<vmem>>, vector<1x32xf32>
    %225 = vector.broadcast %224 : vector<1x32xf32> to vector<16x32xf32>
    %226 = arith.mulf %223, %225 : vector<16x32xf32>
    %c6 = arith.constant 6 : index
    %c0_96 = arith.constant 0 : index
    %227 = vector.load %arg6[%c6, %c0_96] : memref<8x128xf32, #tpu.memory_space<vmem>>, vector<1x32xf32>
    %228 = vector.broadcast %227 : vector<1x32xf32> to vector<16x32xf32>
    %229 = arith.addf %226, %228 : vector<16x32xf32>
    %230 = arith.addf %229, %17 : vector<16x32xf32>
    %c0_97 = arith.constant 0 : index
    %c384 = arith.constant 384 : index
    %231 = vector.load %arg5[%c0_97, %c384] : memref<32x512xf32, #tpu.memory_space<vmem>>, vector<32x128xf32>
    %cst_98 = arith.constant dense<0.000000e+00> : vector<16x128xf32>
    %232 = tpu.matmul %230, %231, %cst_98 {dimension_numbers = #tpu.dot_dimension_numbers<[1], [0], [0], [1], [0, 0, 1, 1], [], []>} : vector<16x32xf32>, vector<32x128xf32>, vector<16x128xf32> -> vector<16x128xf32>
    %c7 = arith.constant 7 : index
    %c0_99 = arith.constant 0 : index
    %233 = vector.load %arg6[%c7, %c0_99] : memref<8x128xf32, #tpu.memory_space<vmem>>, vector<1x128xf32>
    %234 = vector.broadcast %233 : vector<1x128xf32> to vector<16x128xf32>
    %235 = arith.addf %232, %234 : vector<16x128xf32>
    %c0_100 = arith.constant 0 : index
    %c0_101 = arith.constant 0 : index
    %c0_102 = arith.constant 0 : index
    %236 = vector.load %arg8[%c0_100, %c0_101, %c0_102] : memref<1x16x128xf32, #tpu.memory_space<vmem>>, vector<1x16x128xf32>
    %237 = vector.shape_cast %236 : vector<1x16x128xf32> to vector<16x128xf32>
    %238 = vector.shape_cast %235 : vector<16x128xf32> to vector<1x16x128xf32>
    tpu.vector_store %arg8[%c0_100, %c0_101, %c0_102], %238 {strides = array<i32>} : memref<1x16x128xf32, #tpu.memory_space<vmem>>, vector<1x16x128xf32>,
    return
  }
  func.func @transform_0(%arg0: i32) -> (i32, i32, i32) {
    %c0_i32 = arith.constant 0 : i32
    %c0_i32_0 = arith.constant 0 : i32
    %c0_i32_1 = arith.constant 0 : i32
    return %arg0, %c0_i32, %c0_i32_0 : i32, i32, i32
  }
  func.func @transform_1(%arg0: i32) -> (i32, i32, i32) {
    %c0_i32 = arith.constant 0 : i32
    %c0_i32_0 = arith.constant 0 : i32
    %c0_i32_1 = arith.constant 0 : i32
    return %arg0, %c0_i32, %c0_i32_0 : i32, i32, i32
  }
  func.func @transform_2(%arg0: i32) -> (i32, i32, i32, i32, i32) {
    %c0_i32 = arith.constant 0 : i32
    %c0_i32_0 = arith.constant 0 : i32
    %c0_i32_1 = arith.constant 0 : i32
    %c0_i32_2 = arith.constant 0 : i32
    %c0_i32_3 = arith.constant 0 : i32
    return %arg0, %c0_i32, %c0_i32_0, %c0_i32_1, %c0_i32_2 : i32, i32, i32, i32, i32
  }
  func.func @transform_3(%arg0: i32) -> (i32, i32) {
    %c0_i32 = arith.constant 0 : i32
    %c0_i32_0 = arith.constant 0 : i32
    %c0_i32_1 = arith.constant 0 : i32
    return %c0_i32, %c0_i32_0 : i32, i32
  }
  func.func @transform_4(%arg0: i32) -> (i32, i32) {
    %c0_i32 = arith.constant 0 : i32
    %c0_i32_0 = arith.constant 0 : i32
    %c0_i32_1 = arith.constant 0 : i32
    return %c0_i32, %c0_i32_0 : i32, i32
  }
  func.func @transform_5(%arg0: i32) -> (i32, i32) {
    %c0_i32 = arith.constant 0 : i32
    %c0_i32_0 = arith.constant 0 : i32
    %c0_i32_1 = arith.constant 0 : i32
    return %c0_i32, %c0_i32_0 : i32, i32
  }
  func.func @transform_6(%arg0: i32) -> (i32, i32) {
    %c0_i32 = arith.constant 0 : i32
    %c0_i32_0 = arith.constant 0 : i32
    %c0_i32_1 = arith.constant 0 : i32
    return %c0_i32, %c0_i32_0 : i32, i32
  }
  func.func @transform_7(%arg0: i32) -> (i32, i32, i32) {
    %c0_i32 = arith.constant 0 : i32
    %c0_i32_0 = arith.constant 0 : i32
    %c0_i32_1 = arith.constant 0 : i32
    return %arg0, %c0_i32, %c0_i32_0 : i32, i32, i32
  }
}

</mosaic_0001>

<llo_original>
// kernel: tpu_custom_call.1
$region0: #{tpu_custom_call.1}
  #allocation0 [shape = 'u32[]', space=smem, size = 0x4, offset = 0x4, fixed_abs, tag = 'smem constant byte address 0x4 - core index']
  #allocation1 [shape = 'u32[144,128]{1,0:T(1,128)}', space=vmem, size = 0x12000, scoped, tag = 'internal scratch']
  %s0 = inlined_call_operand.vmem [shape: bf16[4,16,768], index: 0, kind: input, shape index: {}]
  %s1 = inlined_call_operand.hbm [shape: f32[4,16,32], index: 1, kind: input, shape index: {}]
  %s2 = inlined_call_operand.vmem [shape: f32[4,2,2,16,128], index: 2, kind: input, shape index: {}]
  %s3 = inlined_call_operand.vmem [shape: bf16[768,32], index: 3, kind: input, shape index: {}]
  %s4 = inlined_call_operand.hbm [shape: f32[32,512], index: 4, kind: input, shape index: {}]
  %s5 = inlined_call_operand.vmem [shape: f32[8,128], index: 5, kind: input, shape index: {}]
  %s6 = inlined_call_operand.hbm [shape: f32[136,128], index: 6, kind: input, shape index: {}]
  %s7 = inlined_call_operand.hbm [shape: f32[4,16,128], index: 7, kind: output, shape index: {}]
  %s8 = sld [smem:[#allocation0]]
  $region73: #{tpu_custom_call.1} parent=0
    _
  %s10 = ssub.s32 1, %s8
  %s11 = scalar_select 0, %s10, %s8
  $region1: #{tpu_custom_call.1} parent=0
    #allocation2 [shape = 'u8[16384]{0}', space=vmem, size = 0x4000, scoped, tag = 'input window, operand 1']
    #allocation3 [shape = 's32[2]{0}', space=sflag, size = 0x8, scoped, tag = 'scoped memory for tpu_custom_call.1']
    #allocation4 [shape = 's32[2]{0}', space=sflag, size = 0x8, scoped, tag = 'scoped memory for tpu_custom_call.1']
    #allocation5 [shape = 'u8[65536]{0}', space=vmem, size = 0x10000, scoped, tag = 'input window, operand 4, single buffered']
    #allocation6 [shape = 's32[1]{0}', space=sflag, size = 0x4, scoped, tag = 'scoped memory for tpu_custom_call.1']
    #allocation7 [shape = 'u8[69632]{0}', space=vmem, size = 0x11000, scoped, tag = 'input window, operand 6, single buffered']
    #allocation8 [shape = 'u8[16384]{0}', space=vmem, size = 0x4000, scoped, tag = 'output window, operand 0']
    %12 = vsyncpa [#allocation3], 0
    %s13 = scalar_lea.sflag [#allocation3], 1
    %14 = vsyncpa %s13, 0
    %15 = vsyncpa [#allocation6], 0
    %16 = vsyncpa [#allocation4], 0
    %s17 = scalar_lea.sflag [#allocation4], 1
    %18 = vsyncpa %s17, 0
    loop: start=0, step=1, limit=6
    $region2: #{tpu_custom_call.1} parent=1 // loop_pre_header
      _
    $region3: #{tpu_custom_call.1} parent=1 // loop_header
      %s20 = sphi 0, %s24
      %p21 = scmp.ge.s32.totalorder %s20, 6
      %s30 = sphi 0, %s32
      %s33 = sphi 0, %s30
      %s34 = sphi 0, %s33
      %s50 = sphi 0, %s34
      %s56 = sphi 0, %s58
      %s59 = sphi 0, %s56
      %s60 = sphi 0, %s59
      %s76 = sphi 0, %s60
      %s82 = sphi 0, %s84
      %s85 = sphi 0, %s82
      %s86 = sphi 0, %s85
      %s102 = sphi 0, %s86
      %s106 = sphi 0, %s106
      %s108 = sphi 0, %s106
      %s109 = sphi 0, %s108
      %s123 = sphi 0, %s109
      %s127 = sphi 0, %s127
      %s129 = sphi 0, %s127
      %s130 = sphi 0, %s129
      %s144 = sphi 0, %s130
      %s148 = sphi 0, %s148
      %s150 = sphi 0, %s148
      %s151 = sphi 0, %s150
      %s165 = sphi 0, %s151
      %s169 = sphi 0, %s169
      %s171 = sphi 0, %s169
      %s172 = sphi 0, %s171
      %s186 = sphi 0, %s172
      %s192 = sphi 0, %s194
      %s195 = sphi 0, %s192
      %s196 = sphi 0, %s195
      %s212 = sphi 0, %s196
    $region4: #{tpu_custom_call.1} parent=1 // loop_header_branch
      %23 = sbr.rel (%p21) target = $region8
    $region5: #{tpu_custom_call.1} parent=1 // loop_body
      %s25 = ssub.s32 %s20, 1
      %s26 = ssub.s32 %s20, 2
      %s27 = sadd.s32 %s20, 1
      %s28 = ssub.s32 %s20, %s27
      %p29 = scmp.eq.s32.totalorder %s28, 0
      %s31 = sadd.s32 %s30, 1
      %s32 = scalar_select %p29, %s30, %s31
      %p35 = pneg %p29
      %p36 = scmp.eq.s32.totalorder %s20, 3
      %p37 = por %p35, %p36
      %p38 = scmp.ne.s32.totalorder %s30, %s33
      %p39 = scmp.eq.s32.totalorder %s20, 0
      %p40 = por %p38, %p39
      %p41 = scmp.ne.s32.totalorder %s30, %s33
      %p42 = scmp.eq.s32.totalorder %s25, 3
      %p43 = por %p41, %p42
      %p44 = scmp.ne.s32.totalorder %s33, %s34
      %p45 = scmp.eq.s32.totalorder %s25, 0
      %p46 = por %p44, %p45
      %p47 = scmp.ne.s32.totalorder %s33, %s34
      %p48 = scmp.eq.s32.totalorder %s26, 3
      %p49 = por %p47, %p48
      %p51 = scmp.ne.s32.totalorder %s34, %s50
      %p52 = scmp.eq.s32.totalorder %s26, 0
      %p53 = por %p51, %p52
      %s54 = ssub.s32 %s20, %s27
      %p55 = scmp.eq.s32.totalorder %s54, 0
      %s57 = sadd.s32 %s56, 1
      %s58 = scalar_select %p55, %s56, %s57
      %p61 = pneg %p55
      %p62 = scmp.eq.s32.totalorder %s20, 3
      %p63 = por %p61, %p62
      %p64 = scmp.ne.s32.totalorder %s56, %s59
      %p65 = scmp.eq.s32.totalorder %s20, 0
      %p66 = por %p64, %p65
      %p67 = scmp.ne.s32.totalorder %s56, %s59
      %p68 = scmp.eq.s32.totalorder %s25, 3
      %p69 = por %p67, %p68
      %p70 = scmp.ne.s32.totalorder %s59, %s60
      %p71 = scmp.eq.s32.totalorder %s25, 0
      %p72 = por %p70, %p71
      %p73 = scmp.ne.s32.totalorder %s59, %s60
      %p74 = scmp.eq.s32.totalorder %s26, 3
      %p75 = por %p73, %p74
      %p77 = scmp.ne.s32.totalorder %s60, %s76
      %p78 = scmp.eq.s32.totalorder %s26, 0
      %p79 = por %p77, %p78
      %s80 = ssub.s32 %s20, %s27
      %p81 = scmp.eq.s32.totalorder %s80, 0
      %s83 = sadd.s32 %s82, 1
      %s84 = scalar_select %p81, %s82, %s83
      %p87 = pneg %p81
      %p88 = scmp.eq.s32.totalorder %s20, 3
      %p89 = por %p87, %p88
      %p90 = scmp.ne.s32.totalorder %s82, %s85
      %p91 = scmp.eq.s32.totalorder %s20, 0
      %p92 = por %p90, %p91
      %p93 = scmp.ne.s32.totalorder %s82, %s85
      %p94 = scmp.eq.s32.totalorder %s25, 3
      %p95 = por %p93, %p94
      %p96 = scmp.ne.s32.totalorder %s85, %s86
      %p97 = scmp.eq.s32.totalorder %s25, 0
      %p98 = por %p96, %p97
      %p99 = scmp.ne.s32.totalorder %s85, %s86
      %p100 = scmp.eq.s32.totalorder %s26, 3
      %p101 = por %p99, %p100
      %p103 = scmp.ne.s32.totalorder %s86, %s102
      %p104 = scmp.eq.s32.totalorder %s26, 0
      %p105 = por %p103, %p104
      %s107 = sadd.s32 %s106, 1
      %p110 = scmp.eq.s32.totalorder %s20, 3
      %p111 = scmp.ne.s32.totalorder %s106, %s108
      %p112 = scmp.eq.s32.totalorder %s20, 0
      %p113 = por %p111, %p112
      %p114 = scmp.ne.s32.totalorder %s106, %s108
      %p115 = scmp.eq.s32.totalorder %s25, 3
      %p116 = por %p114, %p115
      %p117 = scmp.ne.s32.totalorder %s108, %s109
      %p118 = scmp.eq.s32.totalorder %s25, 0
      %p119 = por %p117, %p118
      %p120 = scmp.ne.s32.totalorder %s108, %s109
      %p121 = scmp.eq.s32.totalorder %s26, 3
      %p122 = por %p120, %p121
      %p124 = scmp.ne.s32.totalorder %s109, %s123
      %p125 = scmp.eq.s32.totalorder %s26, 0
      %p126 = por %p124, %p125
      %s128 = sadd.s32 %s127, 1
      %p131 = scmp.eq.s32.totalorder %s20, 3
      %p132 = scmp.ne.s32.totalorder %s127, %s129
      %p133 = scmp.eq.s32.totalorder %s20, 0
      %p134 = por %p132, %p133
      %p135 = scmp.ne.s32.totalorder %s127, %s129
      %p136 = scmp.eq.s32.totalorder %s25, 3
      %p137 = por %p135, %p136
      %p138 = scmp.ne.s32.totalorder %s129, %s130
      %p139 = scmp.eq.s32.totalorder %s25, 0
      %p140 = por %p138, %p139
      %p141 = scmp.ne.s32.totalorder %s129, %s130
      %p142 = scmp.eq.s32.totalorder %s26, 3
      %p143 = por %p141, %p142
      %p145 = scmp.ne.s32.totalorder %s130, %s144
      %p146 = scmp.eq.s32.totalorder %s26, 0
      %p147 = por %p145, %p146
      %s149 = sadd.s32 %s148, 1
      %p152 = scmp.eq.s32.totalorder %s20, 3
      %p153 = scmp.ne.s32.totalorder %s148, %s150
      %p154 = scmp.eq.s32.totalorder %s20, 0
      %p155 = por %p153, %p154
      %p156 = scmp.ne.s32.totalorder %s148, %s150
      %p157 = scmp.eq.s32.totalorder %s25, 3
      %p158 = por %p156, %p157
      %p159 = scmp.ne.s32.totalorder %s150, %s151
      %p160 = scmp.eq.s32.totalorder %s25, 0
      %p161 = por %p159, %p160
      %p162 = scmp.ne.s32.totalorder %s150, %s151
      %p163 = scmp.eq.s32.totalorder %s26, 3
      %p164 = por %p162, %p163
      %p166 = scmp.ne.s32.totalorder %s151, %s165
      %p167 = scmp.eq.s32.totalorder %s26, 0
      %p168 = por %p166, %p167
      %s170 = sadd.s32 %s169, 1
      %p173 = scmp.eq.s32.totalorder %s20, 3
      %p174 = scmp.ne.s32.totalorder %s169, %s171
      %p175 = scmp.eq.s32.totalorder %s20, 0
      %p176 = por %p174, %p175
      %p177 = scmp.ne.s32.totalorder %s169, %s171
      %p178 = scmp.eq.s32.totalorder %s25, 3
      %p179 = por %p177, %p178
      %p180 = scmp.ne.s32.totalorder %s171, %s172
      %p181 = scmp.eq.s32.totalorder %s25, 0
      %p182 = por %p180, %p181
      %p183 = scmp.ne.s32.totalorder %s171, %s172
      %p184 = scmp.eq.s32.totalorder %s26, 3
      %p185 = por %p183, %p184
      %p187 = scmp.ne.s32.totalorder %s172, %s186
      %p188 = scmp.eq.s32.totalorder %s26, 0
      %p189 = por %p187, %p188
      %s190 = ssub.s32 %s20, %s27
      %p191 = scmp.eq.s32.totalorder %s190, 0
      %s193 = sadd.s32 %s192, 1
      %s194 = scalar_select %p191, %s192, %s193
      %p197 = pneg %p191
      %p198 = scmp.eq.s32.totalorder %s20, 3
      %p199 = por %p197, %p198
      %p200 = scmp.ne.s32.totalorder %s192, %s195
      %p201 = scmp.eq.s32.totalorder %s20, 0
      %p202 = por %p200, %p201
      %p203 = scmp.ne.s32.totalorder %s192, %s195
      %p204 = scmp.eq.s32.totalorder %s25, 3
      %p205 = por %p203, %p204
      %p206 = scmp.ne.s32.totalorder %s195, %s196
      %p207 = scmp.eq.s32.totalorder %s25, 0
      %p208 = por %p206, %p207
      %p209 = scmp.ne.s32.totalorder %s195, %s196
      %p210 = scmp.eq.s32.totalorder %s26, 3
      %p211 = por %p209, %p210
      %p213 = scmp.ne.s32.totalorder %s196, %s212
      %p214 = scmp.eq.s32.totalorder %s26, 0
      %p215 = por %p213, %p214
      %p216 = scmp.le.s32.totalorder 1, %s20
      %p217 = scmp.lt.s32.totalorder %s20, 5
      %p218 = pnand %p216, %p217
      %p219 = pneg %p218
      // Predicated region
      $region9: #{tpu_custom_call.1} parent=5 // pred_check
        _
      $region10: #{tpu_custom_call.1} parent=5 // pred_check_branch
        %221 = sbr.rel (%p218) target = $region12
      $region11: #{tpu_custom_call.1} parent=5 // pred_region
        %s222 = ssub.s32 %s20, 1
        // Predicated region
        $region13: #{tpu_custom_call.1} parent=11 // pred_check
          %p223 = pneg %p119
        $region14: #{tpu_custom_call.1} parent=11 // pred_check_branch
          %225 = sbr.rel (%p223) target = $region16
        $region15: #{tpu_custom_call.1} parent=11 // pred_region
          _
        $region16: #{tpu_custom_call.1} parent=11 // pred_fallthru
          _
        // Predicated region
        $region17: #{tpu_custom_call.1} parent=11 // pred_check
          %p226 = pneg %p140
        $region18: #{tpu_custom_call.1} parent=11 // pred_check_branch
          %228 = sbr.rel (%p226) target = $region20
        $region19: #{tpu_custom_call.1} parent=11 // pred_region
          %s230 = ssub.s32 2048, 2048
          %231 = vsyncadd [#allocation6], %s230
          %s232 = sshll.u32 [#allocation5], 4
          %s233 = int_to_ptr.vmem [resolvable:$true] %s232
          %238 = dma.hbm_to_vmem [thread:$0]  %s4, 2048, %s233, [#allocation6], 512, 512, 32
        $region20: #{tpu_custom_call.1} parent=11 // pred_fallthru
          _
        // Predicated region
        $region21: #{tpu_custom_call.1} parent=11 // pred_check
          %p239 = pneg %p161
        $region22: #{tpu_custom_call.1} parent=11 // pred_check_branch
          %241 = sbr.rel (%p239) target = $region24
        $region23: #{tpu_custom_call.1} parent=11 // pred_region
          _
        $region24: #{tpu_custom_call.1} parent=11 // pred_fallthru
          _
        // Predicated region
        $region25: #{tpu_custom_call.1} parent=11 // pred_check
          %p242 = pneg %p182
        $region26: #{tpu_custom_call.1} parent=11 // pred_check_branch
          %244 = sbr.rel (%p242) target = $region28
        $region27: #{tpu_custom_call.1} parent=11 // pred_region
          %s246 = ssub.s32 2176, 2176
          %247 = vsyncadd [#allocation6], %s246
          %s248 = sshll.u32 [#allocation7], 4
          %s249 = int_to_ptr.vmem [resolvable:$true] %s248
          %254 = dma.hbm_to_vmem [thread:$0]  %s6, 2176, %s249, [#allocation6], 128, 128, 8
        $region28: #{tpu_custom_call.1} parent=11 // pred_fallthru
          _
      $region12: #{tpu_custom_call.1} parent=5 // pred_fallthru
        _
      %p255 = scmp.lt.s32.totalorder %s20, 4
      // Predicated region
      $region29: #{tpu_custom_call.1} parent=5 // pred_check
        %p256 = pneg %p255
      $region30: #{tpu_custom_call.1} parent=5 // pred_check_branch
        %258 = sbr.rel (%p256) target = $region32
      $region31: #{tpu_custom_call.1} parent=5 // pred_region
        // Predicated region
        $region33: #{tpu_custom_call.1} parent=31 // pred_check
          %p259 = pneg %p40
        $region34: #{tpu_custom_call.1} parent=31 // pred_check_branch
          %261 = sbr.rel (%p259) target = $region36
        $region35: #{tpu_custom_call.1} parent=31 // pred_region
          %p262 = scmp.lt.s32.totalorder %s20, 3
          %s263 = scalar_select %p262, %s20, 3
          %s264 = smul.addr %s263, 12
          %s265 = smul.addr %s264, 4
          %s266 = scalar_lea.vmem %s0, %s265
        $region36: #{tpu_custom_call.1} parent=31 // pred_fallthru
          _
        // Predicated region
        $region37: #{tpu_custom_call.1} parent=31 // pred_check
          %p267 = pneg %p66
        $region38: #{tpu_custom_call.1} parent=31 // pred_check_branch
          %269 = sbr.rel (%p267) target = $region40
        $region39: #{tpu_custom_call.1} parent=31 // pred_region
          %s270 = sand.u32 %s56, 1
          %s271 = scalar_lea.sflag [#allocation3], %s270
          %s272 = sand.u32 %s56, 1
          %s273 = smul.addr %s272, 16
          %s274 = scalar_lea.vmem [#allocation2], %s273
          %s276 = ssub.s32 256, 256
          %277 = vsyncadd %s271, %s276
          %s278 = smul.addr %s20, 2
          %s279 = smul.addr %s278, 128
          %s280 = scalar_lea.hbm %s1, %s279
          %s281 = sshll.u32 %s274, 4
          %s282 = int_to_ptr.vmem [resolvable:$true] %s281
          %287 = dma.hbm_to_vmem [thread:$0]  %s280, 256, %s282, %s271, 128, 128, 8
        $region40: #{tpu_custom_call.1} parent=31 // pred_fallthru
          _
        // Predicated region
        $region41: #{tpu_custom_call.1} parent=31 // pred_check
          %p288 = pneg %p92
        $region42: #{tpu_custom_call.1} parent=31 // pred_check_branch
          %290 = sbr.rel (%p288) target = $region44
        $region43: #{tpu_custom_call.1} parent=31 // pred_region
          %p291 = scmp.lt.s32.totalorder %s20, 3
          %s292 = scalar_select %p291, %s20, 3
          %s293 = smul.addr %s292, 8
          %s294 = smul.addr %s293, 8
          %s295 = scalar_lea.vmem %s2, %s294
        $region44: #{tpu_custom_call.1} parent=31 // pred_fallthru
          _
      $region32: #{tpu_custom_call.1} parent=5 // pred_fallthru
        _
      %p296 = scmp.le.s32.totalorder 1, %s20
      %p297 = scmp.lt.s32.totalorder %s20, 5
      %p298 = pnand %p296, %p297
      %p299 = pneg %p298
      // Predicated region
      $region45: #{tpu_custom_call.1} parent=5 // pred_check
        _
      $region46: #{tpu_custom_call.1} parent=5 // pred_check_branch
        %301 = sbr.rel (%p298) target = $region48
      $region47: #{tpu_custom_call.1} parent=5 // pred_region
        %s302 = ssub.s32 %s20, 1
        %s303 = sand.u32 %s59, 1
        %s304 = scalar_lea.sflag [#allocation3], %s303
        %s305 = sand.u32 %s59, 1
        %s306 = smul.addr %s305, 16
        %s307 = scalar_lea.vmem [#allocation2], %s306
        // Predicated region
        $region49: #{tpu_custom_call.1} parent=47 // pred_check
          %p308 = pneg %p72
        $region50: #{tpu_custom_call.1} parent=47 // pred_check_branch
          %310 = sbr.rel (%p308) target = $region52
        $region51: #{tpu_custom_call.1} parent=47 // pred_region
          %311 = dma.done %s304, 256
        $region52: #{tpu_custom_call.1} parent=47 // pred_fallthru
          _
        // Predicated region
        $region53: #{tpu_custom_call.1} parent=47 // pred_check
          %p312 = pneg %p140
        $region54: #{tpu_custom_call.1} parent=47 // pred_check_branch
          %314 = sbr.rel (%p312) target = $region56
        $region55: #{tpu_custom_call.1} parent=47 // pred_region
          %315 = dma.done [#allocation6], 2048
        $region56: #{tpu_custom_call.1} parent=47 // pred_fallthru
          _
        // Predicated region
        $region57: #{tpu_custom_call.1} parent=47 // pred_check
          %p316 = pneg %p182
        $region58: #{tpu_custom_call.1} parent=47 // pred_check_branch
          %318 = sbr.rel (%p316) target = $region60
        $region59: #{tpu_custom_call.1} parent=47 // pred_region
          %319 = dma.done [#allocation6], 2176
        $region60: #{tpu_custom_call.1} parent=47 // pred_fallthru
          _
        %p320 = scmp.lt.s32.totalorder %s25, 3
        %s321 = scalar_select %p320, %s25, 3
        %s322 = smul.addr %s321, 12
        %s323 = smul.addr %s322, 4
        %s324 = scalar_lea.vmem %s0, %s323
        %p325 = pneg %p46
        %p326 = pneg %p43
        %s327 = sand.u32 %s59, 1
        %s328 = scalar_lea.sflag [#allocation3], %s327
        %s329 = sand.u32 %s59, 1
        %s330 = smul.addr %s329, 16
        %s331 = scalar_lea.vmem [#allocation2], %s330
        %p332 = pneg %p72
        %p333 = pneg %p69
        %p334 = scmp.lt.s32.totalorder %s25, 3
        %s335 = scalar_select %p334, %s25, 3
        %s336 = smul.addr %s335, 8
        %s337 = smul.addr %s336, 8
        %s338 = scalar_lea.vmem %s2, %s337
        %p339 = pneg %p98
        %p340 = pneg %p95
        %p341 = pneg %p119
        %p342 = pneg %p116
        %p343 = pneg %p140
        %p344 = pneg %p137
        %p345 = pneg %p161
        %p346 = pneg %p158
        %p347 = pneg %p182
        %p348 = pneg %p179
        %p349 = pneg %p208
        %p350 = pneg %p205
        %s351 = sand.u32 %s195, 1
        %s352 = scalar_lea.sflag [#allocation4], %s351
        %s353 = sand.u32 %s195, 1
        %s354 = smul.addr %s353, 16
        %s355 = scalar_lea.vmem [#allocation8], %s354
        %p356 = scmp.lt.s32.totalorder %s25, 3
        %s357 = scalar_select %p356, %s25, 3
        %s358 = smul.addr %s357, 12
        %s359 = smul.addr %s358, 4
        %s360 = scalar_lea.vmem %s0, %s359
        %p361 = scmp.lt.s32.totalorder %s25, 3
        %s362 = scalar_select %p361, %s25, 3
        %s363 = smul.addr %s362, 8
        %s364 = smul.addr %s363, 8
        %s365 = scalar_lea.vmem %s2, %s364
        %v367 = vld [vmem:[#allocation7] sm:$0xff]
        %v368 = vld [vmem:[#allocation7 + $0x8] sm:$0xff]
        %v369 = vld [vmem:[#allocation7 + $0x10] sm:$0xff]
        %v370 = vld [vmem:[#allocation7 + $0x18] sm:$0xff]
        %v371 = vld [vmem:[#allocation7 + $0x20] sm:$0xff]
        %v372 = vld [vmem:[#allocation7 + $0x28] sm:$0xff]
        %v373 = vld [vmem:[#allocation7 + $0x30] sm:$0xff]
        %v374 = vld [vmem:[#allocation7 + $0x38] sm:$0xff]
        %v375 = vld [vmem:[#allocation7 + $0x40] sm:$0xff]
        %v376 = vld [vmem:[#allocation7 + $0x48] sm:$0xff]
        %v377 = vld [vmem:[#allocation7 + $0x50] sm:$0xff]
        %v378 = vld [vmem:[#allocation7 + $0x58] sm:$0xff]
        %v379 = vld [vmem:[#allocation7 + $0x60] sm:$0xff]
        %v380 = vld [vmem:[#allocation7 + $0x68] sm:$0xff]
        %v381 = vld [vmem:[#allocation7 + $0x70] sm:$0xff]
        %v382 = vld [vmem:[#allocation7 + $0x78] sm:$0xff]
        %v383 = vld [vmem:[#allocation7 + $0x80] sm:$0xff]
        %v384 = vld [vmem:[%s360] sm:$0xff]
        %v385 = vld [vmem:[%s360 + $0x8] sm:$0xff]
        %v386 = vld [vmem:[%s360 + $0x10] sm:$0xff]
        %v387 = vld [vmem:[%s360 + $0x18] sm:$0xff]
        %v388 = vld [vmem:[%s360 + $0x20] sm:$0xff]
        %v389 = vld [vmem:[%s360 + $0x28] sm:$0xff]
        %v390 = vld [vmem:[%s3] sm:$0xf]
        %v391 = vld [vmem:[%s3 + $0x4] sm:$0xf]
        %v392 = vld [vmem:[%s3 + $0x8] sm:$0xf]
        %v393 = vld [vmem:[%s3 + $0xc] sm:$0xf]
        %v394 = vld [vmem:[%s3 + $0x10] sm:$0xf]
        %v395 = vld [vmem:[%s3 + $0x14] sm:$0xf]
        %v396 = vld [vmem:[%s3 + $0x18] sm:$0xf]
        %v397 = vld [vmem:[%s3 + $0x1c] sm:$0xf]
        %v398 = vld [vmem:[%s3 + $0x20] sm:$0xf]
        %v399 = vld [vmem:[%s3 + $0x24] sm:$0xf]
        %v400 = vld [vmem:[%s3 + $0x28] sm:$0xf]
        %v401 = vld [vmem:[%s3 + $0x2c] sm:$0xf]
        %v402 = vld [vmem:[%s3 + $0x30] sm:$0xf]
        %v403 = vld [vmem:[%s3 + $0x34] sm:$0xf]
        %v404 = vld [vmem:[%s3 + $0x38] sm:$0xf]
        %v405 = vld [vmem:[%s3 + $0x3c] sm:$0xf]
        %v406 = vld [vmem:[%s3 + $0x40] sm:$0xf]
        %v407 = vld [vmem:[%s3 + $0x44] sm:$0xf]
        %v408 = vld [vmem:[%s3 + $0x48] sm:$0xf]
        %v409 = vld [vmem:[%s3 + $0x4c] sm:$0xf]
        %v410 = vld [vmem:[%s3 + $0x50] sm:$0xf]
        %v411 = vld [vmem:[%s3 + $0x54] sm:$0xf]
        %v412 = vld [vmem:[%s3 + $0x58] sm:$0xf]
        %v413 = vld [vmem:[%s3 + $0x5c] sm:$0xf]
        %v414 = vld [vmem:[%s3 + $0x60] sm:$0xf]
        %v415 = vld [vmem:[%s3 + $0x64] sm:$0xf]
        %v416 = vld [vmem:[%s3 + $0x68] sm:$0xf]
        %v417 = vld [vmem:[%s3 + $0x6c] sm:$0xf]
        %v418 = vld [vmem:[%s3 + $0x70] sm:$0xf]
        %v419 = vld [vmem:[%s3 + $0x74] sm:$0xf]
        %v420 = vld [vmem:[%s3 + $0x78] sm:$0xf]
        %v421 = vld [vmem:[%s3 + $0x7c] sm:$0xf]
        %v422 = vld [vmem:[%s3 + $0x80] sm:$0xf]
        %v423 = vld [vmem:[%s3 + $0x84] sm:$0xf]
        %v424 = vld [vmem:[%s3 + $0x88] sm:$0xf]
        %v425 = vld [vmem:[%s3 + $0x8c] sm:$0xf]
        %v426 = vld [vmem:[%s3 + $0x90] sm:$0xf]
        %v427 = vld [vmem:[%s3 + $0x94] sm:$0xf]
        %v428 = vld [vmem:[%s3 + $0x98] sm:$0xf]
        %v429 = vld [vmem:[%s3 + $0x9c] sm:$0xf]
        %v430 = vld [vmem:[%s3 + $0xa0] sm:$0xf]
        %v431 = vld [vmem:[%s3 + $0xa4] sm:$0xf]
        %v432 = vld [vmem:[%s3 + $0xa8] sm:$0xf]
        %v433 = vld [vmem:[%s3 + $0xac] sm:$0xf]
        %v434 = vld [vmem:[%s3 + $0xb0] sm:$0xf]
        %v435 = vld [vmem:[%s3 + $0xb4] sm:$0xf]
        %v436 = vld [vmem:[%s3 + $0xb8] sm:$0xf]
        %v437 = vld [vmem:[%s3 + $0xbc] sm:$0xf]
        %v438 = vld [vmem:[%s3 + $0xc0] sm:$0xf]
        %v439 = vld [vmem:[%s3 + $0xc4] sm:$0xf]
        %v440 = vld [vmem:[%s3 + $0xc8] sm:$0xf]
        %v441 = vld [vmem:[%s3 + $0xcc] sm:$0xf]
        %v442 = vld [vmem:[%s3 + $0xd0] sm:$0xf]
        %v443 = vld [vmem:[%s3 + $0xd4] sm:$0xf]
        %v444 = vld [vmem:[%s3 + $0xd8] sm:$0xf]
        %v445 = vld [vmem:[%s3 + $0xdc] sm:$0xf]
        %v446 = vld [vmem:[%s3 + $0xe0] sm:$0xf]
        %v447 = vld [vmem:[%s3 + $0xe4] sm:$0xf]
        %v448 = vld [vmem:[%s3 + $0xe8] sm:$0xf]
        %v449 = vld [vmem:[%s3 + $0xec] sm:$0xf]
        %v450 = vld [vmem:[%s3 + $0xf0] sm:$0xf]
        %v451 = vld [vmem:[%s3 + $0xf4] sm:$0xf]
        %v452 = vld [vmem:[%s3 + $0xf8] sm:$0xf]
        %v453 = vld [vmem:[%s3 + $0xfc] sm:$0xf]
        %v454 = vld [vmem:[%s3 + $0x100] sm:$0xf]
        %v455 = vld [vmem:[%s3 + $0x104] sm:$0xf]
        %v456 = vld [vmem:[%s3 + $0x108] sm:$0xf]
        %v457 = vld [vmem:[%s3 + $0x10c] sm:$0xf]
        %v458 = vld [vmem:[%s3 + $0x110] sm:$0xf]
        %v459 = vld [vmem:[%s3 + $0x114] sm:$0xf]
        %v460 = vld [vmem:[%s3 + $0x118] sm:$0xf]
        %v461 = vld [vmem:[%s3 + $0x11c] sm:$0xf]
        %v462 = vld [vmem:[%s3 + $0x120] sm:$0xf]
        %v463 = vld [vmem:[%s3 + $0x124] sm:$0xf]
        %v464 = vld [vmem:[%s3 + $0x128] sm:$0xf]
        %v465 = vld [vmem:[%s3 + $0x12c] sm:$0xf]
        %v466 = vld [vmem:[%s3 + $0x130] sm:$0xf]
        %v467 = vld [vmem:[%s3 + $0x134] sm:$0xf]
        %v468 = vld [vmem:[%s3 + $0x138] sm:$0xf]
        %v469 = vld [vmem:[%s3 + $0x13c] sm:$0xf]
        %v470 = vld [vmem:[%s3 + $0x140] sm:$0xf]
        %v471 = vld [vmem:[%s3 + $0x144] sm:$0xf]
        %v472 = vld [vmem:[%s3 + $0x148] sm:$0xf]
        %v473 = vld [vmem:[%s3 + $0x14c] sm:$0xf]
        %v474 = vld [vmem:[%s3 + $0x150] sm:$0xf]
        %v475 = vld [vmem:[%s3 + $0x154] sm:$0xf]
        %v476 = vld [vmem:[%s3 + $0x158] sm:$0xf]
        %v477 = vld [vmem:[%s3 + $0x15c] sm:$0xf]
        %v478 = vld [vmem:[%s3 + $0x160] sm:$0xf]
        %v479 = vld [vmem:[%s3 + $0x164] sm:$0xf]
        %v480 = vld [vmem:[%s3 + $0x168] sm:$0xf]
        %v481 = vld [vmem:[%s3 + $0x16c] sm:$0xf]
        %v482 = vld [vmem:[%s3 + $0x170] sm:$0xf]
        %v483 = vld [vmem:[%s3 + $0x174] sm:$0xf]
        %v484 = vld [vmem:[%s3 + $0x178] sm:$0xf]
        %v485 = vld [vmem:[%s3 + $0x17c] sm:$0xf]
        %v486 = vld [vmem:[%s307] sm:$0xff]
        %v487 = vld [vmem:[%s307 + $0x8] sm:$0xff]
        %v488 = vld [vmem:[#allocation5] sm:$0xff]
        %v489 = vld [vmem:[#allocation5 + $0x20] sm:$0xff]
        %v490 = vld [vmem:[#allocation5 + $0x40] sm:$0xff]
        %v491 = vld [vmem:[#allocation5 + $0x60] sm:$0xff]
        %vm492 = vcmask 261120
        %v494 = vsel %vm492, %v486, 0
        %v497 = vsel %vm492, %v487, 0
        %499 = vmatprep.subr.mxu0 0.0
        %500 = vmatpush1.msra.mxu0 %v488
        %501 = vmatprep.subr.mxu0 0.0
        %502 = vmatpush1.msra.mxu0 %v489
        %503 = vmatprep.subr.mxu0 0.0
        %504 = vmatpush1.msra.mxu0 %v490
        %505 = vmatprep.subr.mxu0 0.0
        %506 = vmatpush1.msra.mxu0 %v491
        %507 = vmatprep.subr.mxu0 0.0
        %508 = vmatpush1.msra.mxu0 0.0
        %509 = vmatprep.subr.mxu0 0.0
        %510 = vmatpush1.msra.mxu0 0.0
        %511 = vmatprep.subr.mxu0 0.0
        %512 = vmatpush1.msra.mxu0 0.0
        %513 = vmatprep.subr.mxu0 0.0
        %514 = vmatpush1.msra.mxu0 0.0
        %515 = vmatprep.subr.mxu0 0.0
        %516 = vmatpush1.msra.mxu0 0.0
        %517 = vmatprep.subr.mxu0 0.0
        %518 = vmatpush1.msra.mxu0 0.0
        %519 = vmatprep.subr.mxu0 0.0
        %520 = vmatpush1.msra.mxu0 0.0
        %521 = vmatprep.subr.mxu0 0.0
        %522 = vmatpush1.msra.mxu0 0.0
        %523 = vmatprep.subr.mxu0 0.0
        %524 = vmatpush1.msra.mxu0 0.0
        %525 = vmatprep.subr.mxu0 0.0
        %526 = vmatpush1.msra.mxu0 0.0
        %527 = vmatprep.subr.mxu0 0.0
        %528 = vmatpush1.msra.mxu0 0.0
        %529 = vmatprep.subr.mxu0 0.0
        %530 = vmatpush1.msra.mxu0 0.0
        %531 = vmatprep.subr.mxu0 0.0
        %532 = vmatpush1.msra.mxu0 0.0
        %533 = vmatprep.subr.mxu0 0.0
        %534 = vmatpush1.msra.mxu0 0.0
        %535 = vmatprep.subr.mxu0 0.0
        %536 = vmatpush1.msra.mxu0 0.0
        %537 = vmatprep.subr.mxu0 0.0
        %538 = vmatpush1.msra.mxu0 0.0
        %539 = vmatprep.subr.mxu0 0.0
        %540 = vmatpush1.msra.mxu0 0.0
        %541 = vmatprep.subr.mxu0 0.0
        %542 = vmatpush1.msra.mxu0 0.0
        %543 = vmatprep.subr.mxu0 0.0
        %544 = vmatpush1.msra.mxu0 0.0
        %545 = vmatprep.subr.mxu0 0.0
        %546 = vmatpush1.msra.mxu0 0.0
        %547 = vmatprep.subr.mxu0 0.0
        %548 = vmatpush1.msra.mxu0 0.0
        %549 = vmatprep.subr.mxu0 0.0
        %550 = vmatpush1.msra.mxu0 0.0
        %551 = vmatprep.subr.mxu0 0.0
        %552 = vmatpush1.msra.mxu0 0.0
        %553 = vmatprep.subr.mxu0 0.0
        %554 = vmatpush1.msra.mxu0 0.0
        %555 = vmatprep.subr.mxu0 0.0
        %556 = vmatpush1.msra.mxu0 0.0
        %557 = vmatprep.subr.mxu0 0.0
        %558 = vmatpush1.msra.mxu0 0.0
        %559 = vmatprep.subr.mxu0 0.0
        %560 = vmatpush1.msra.mxu0 0.0
        %561 = vmatprep.subr.mxu0 0.0
        %562 = vmatpush1.msra.mxu0 0.0
        %563 = vmatprep.mubr.f32.mxu0 0.0
        %564 = vmatmul.mubr.f32.gmra.mrb[0].mxu0 %v494
        %v565 = vpop.f32.mrb[0].mxu0
        %v566 = vadd.f32 0.0, %v565
        %v567 = vpop.f32.mrb[0].mxu0
        %568 = vmatprep.mubr.f32.mxu0 0.0
        %569 = vmatmul.mubr.f32.gmra.mrb[0].mxu0 %v497
        %v570 = vpop.f32.mrb[0].mxu0
        %v571 = vadd.f32 0.0, %v570
        %v572 = vpop.f32.mrb[0].mxu0
        %573 = vdwg.mxu0
        %v580 = vunpack.c.l.b16 %v384
        %v581 = vunpack.c.h.b16 %v384
        %v582 = vunpack.c.l.b16 %v385
        %v583 = vunpack.c.h.b16 %v385
        %v584 = vunpack.c.l.b16 %v386
        %v585 = vunpack.c.h.b16 %v386
        %v586 = vunpack.c.l.b16 %v387
        %v587 = vunpack.c.h.b16 %v387
        %v588 = vunpack.c.l.b16 %v388
        %v589 = vunpack.c.h.b16 %v388
        %v590 = vunpack.c.l.b16 %v389
        %v591 = vunpack.c.h.b16 %v389
        %v592 = vpack.c.b16 %v586, %v580
        %v593 = vpack.c.b16 %v587, %v581
        %v594 = vpack.c.b16 %v588, %v582
        %v595 = vpack.c.b16 %v589, %v583
        %v596 = vpack.c.b16 %v590, %v584
        %v597 = vpack.c.b16 %v591, %v585
        %v700 = vunpack.c.l.b16 %v390
        %v701 = vunpack.c.l.b16 %v391
        %v702 = vunpack.c.l.b16 %v392
        %v703 = vunpack.c.l.b16 %v393
        %v704 = vunpack.c.l.b16 %v394
        %v705 = vunpack.c.l.b16 %v395
        %v706 = vunpack.c.l.b16 %v396
        %v707 = vunpack.c.l.b16 %v397
        %v708 = vunpack.c.l.b16 %v398
        %v709 = vunpack.c.l.b16 %v399
        %v710 = vunpack.c.l.b16 %v400
        %v711 = vunpack.c.l.b16 %v401
        %v712 = vunpack.c.l.b16 %v402
        %v713 = vunpack.c.l.b16 %v403
        %v714 = vunpack.c.l.b16 %v404
        %v715 = vunpack.c.l.b16 %v405
        %v716 = vunpack.c.l.b16 %v406
        %v717 = vunpack.c.l.b16 %v407
        %v718 = vunpack.c.l.b16 %v408
        %v719 = vunpack.c.l.b16 %v409
        %v720 = vunpack.c.l.b16 %v410
        %v721 = vunpack.c.l.b16 %v411
        %v722 = vunpack.c.l.b16 %v412
        %v723 = vunpack.c.l.b16 %v413
        %v724 = vunpack.c.l.b16 %v414
        %v725 = vunpack.c.l.b16 %v415
        %v726 = vunpack.c.l.b16 %v416
        %v727 = vunpack.c.l.b16 %v417
        %v728 = vunpack.c.l.b16 %v418
        %v729 = vunpack.c.l.b16 %v419
        %v730 = vunpack.c.l.b16 %v420
        %v731 = vunpack.c.l.b16 %v421
        %v732 = vunpack.c.l.b16 %v422
        %v733 = vunpack.c.l.b16 %v423
        %v734 = vunpack.c.l.b16 %v424
        %v735 = vunpack.c.l.b16 %v425
        %v736 = vunpack.c.l.b16 %v426
        %v737 = vunpack.c.l.b16 %v427
        %v738 = vunpack.c.l.b16 %v428
        %v739 = vunpack.c.l.b16 %v429
        %v740 = vunpack.c.l.b16 %v430
        %v741 = vunpack.c.l.b16 %v431
        %v742 = vunpack.c.l.b16 %v432
        %v743 = vunpack.c.l.b16 %v433
        %v744 = vunpack.c.l.b16 %v434
        %v745 = vunpack.c.l.b16 %v435
        %v746 = vunpack.c.l.b16 %v436
        %v747 = vunpack.c.l.b16 %v437
        %v748 = vunpack.c.l.b16 %v438
        %v749 = vunpack.c.l.b16 %v439
        %v750 = vunpack.c.l.b16 %v440
        %v751 = vunpack.c.l.b16 %v441
        %v752 = vunpack.c.l.b16 %v442
        %v753 = vunpack.c.l.b16 %v443
        %v754 = vunpack.c.l.b16 %v444
        %v755 = vunpack.c.l.b16 %v445
        %v756 = vunpack.c.l.b16 %v446
        %v757 = vunpack.c.l.b16 %v447
        %v758 = vunpack.c.l.b16 %v448
        %v759 = vunpack.c.l.b16 %v449
        %v760 = vunpack.c.l.b16 %v450
        %v761 = vunpack.c.l.b16 %v451
        %v762 = vunpack.c.l.b16 %v452
        %v763 = vunpack.c.l.b16 %v453
        %v764 = vunpack.c.l.b16 %v454
        %v765 = vunpack.c.l.b16 %v455
        %v766 = vunpack.c.l.b16 %v456
        %v767 = vunpack.c.l.b16 %v457
        %v768 = vunpack.c.l.b16 %v458
        %v769 = vunpack.c.l.b16 %v459
        %v770 = vunpack.c.l.b16 %v460
        %v771 = vunpack.c.l.b16 %v461
        %v772 = vunpack.c.l.b16 %v462
        %v773 = vunpack.c.l.b16 %v463
        %v774 = vunpack.c.l.b16 %v464
        %v775 = vunpack.c.l.b16 %v465
        %v776 = vunpack.c.l.b16 %v466
        %v777 = vunpack.c.l.b16 %v467
        %v778 = vunpack.c.l.b16 %v468
        %v779 = vunpack.c.l.b16 %v469
        %v780 = vunpack.c.l.b16 %v470
        %v781 = vunpack.c.l.b16 %v471
        %v782 = vunpack.c.l.b16 %v472
        %v783 = vunpack.c.l.b16 %v473
        %v784 = vunpack.c.l.b16 %v474
        %v785 = vunpack.c.l.b16 %v475
        %v786 = vunpack.c.l.b16 %v476
        %v787 = vunpack.c.l.b16 %v477
        %v788 = vunpack.c.l.b16 %v478
        %v789 = vunpack.c.l.b16 %v479
        %v790 = vunpack.c.l.b16 %v480
        %v791 = vunpack.c.l.b16 %v481
        %v792 = vunpack.c.l.b16 %v482
        %v793 = vunpack.c.l.b16 %v483
        %v794 = vunpack.c.l.b16 %v484
        %v795 = vunpack.c.l.b16 %v485
        %v796 = vpack.c.b16 %v701, %v700
        %v797 = vpack.c.b16 %v703, %v702
        %v798 = vpack.c.b16 %v705, %v704
        %v799 = vpack.c.b16 %v707, %v706
        %v800 = vpack.c.b16 %v709, %v708
        %v801 = vpack.c.b16 %v711, %v710
        %v802 = vpack.c.b16 %v713, %v712
        %v803 = vpack.c.b16 %v715, %v714
        %v804 = vpack.c.b16 %v717, %v716
        %v805 = vpack.c.b16 %v719, %v718
        %v806 = vpack.c.b16 %v721, %v720
        %v807 = vpack.c.b16 %v723, %v722
        %v808 = vpack.c.b16 %v725, %v724
        %v809 = vpack.c.b16 %v727, %v726
        %v810 = vpack.c.b16 %v729, %v728
        %v811 = vpack.c.b16 %v731, %v730
        %v812 = vpack.c.b16 %v733, %v732
        %v813 = vpack.c.b16 %v735, %v734
        %v814 = vpack.c.b16 %v737, %v736
        %v815 = vpack.c.b16 %v739, %v738
        %v816 = vpack.c.b16 %v741, %v740
        %v817 = vpack.c.b16 %v743, %v742
        %v818 = vpack.c.b16 %v745, %v744
        %v819 = vpack.c.b16 %v747, %v746
        %v820 = vpack.c.b16 %v749, %v748
        %v821 = vpack.c.b16 %v751, %v750
        %v822 = vpack.c.b16 %v753, %v752
        %v823 = vpack.c.b16 %v755, %v754
        %v824 = vpack.c.b16 %v757, %v756
        %v825 = vpack.c.b16 %v759, %v758
        %v826 = vpack.c.b16 %v761, %v760
        %v827 = vpack.c.b16 %v763, %v762
        %v828 = vpack.c.b16 %v765, %v764
        %v829 = vpack.c.b16 %v767, %v766
        %v830 = vpack.c.b16 %v769, %v768
        %v831 = vpack.c.b16 %v771, %v770
        %v832 = vpack.c.b16 %v773, %v772
        %v833 = vpack.c.b16 %v775, %v774
        %v834 = vpack.c.b16 %v777, %v776
        %v835 = vpack.c.b16 %v779, %v778
        %v836 = vpack.c.b16 %v781, %v780
        %v837 = vpack.c.b16 %v783, %v782
        %v838 = vpack.c.b16 %v785, %v784
        %v839 = vpack.c.b16 %v787, %v786
        %v840 = vpack.c.b16 %v789, %v788
        %v841 = vpack.c.b16 %v791, %v790
        %v842 = vpack.c.b16 %v793, %v792
        %v843 = vpack.c.b16 %v795, %v794
        %892 = vmatprep.subr.bf16.mxu0 0
        %893 = vmatpush1.bf16.msra.mxu0 %v796
        %894 = vmatprep.subr.bf16.mxu0 0
        %895 = vmatpush1.bf16.msra.mxu0 %v797
        %896 = vmatprep.subr.bf16.mxu0 0
        %897 = vmatpush1.bf16.msra.mxu0 %v798
        %898 = vmatprep.subr.bf16.mxu0 0
        %899 = vmatpush1.bf16.msra.mxu0 %v799
        %900 = vmatprep.subr.bf16.mxu0 0
        %901 = vmatpush1.bf16.msra.mxu0 %v800
        %902 = vmatprep.subr.bf16.mxu0 0
        %903 = vmatpush1.bf16.msra.mxu0 %v801
        %904 = vmatprep.subr.bf16.mxu0 0
        %905 = vmatpush1.bf16.msra.mxu0 %v802
        %906 = vmatprep.subr.bf16.mxu0 0
        %907 = vmatpush1.bf16.msra.mxu0 %v803
        %908 = vmatprep.subr.bf16.mxu0 0
        %909 = vmatpush1.bf16.msra.mxu0 %v804
        %910 = vmatprep.subr.bf16.mxu0 0
        %911 = vmatpush1.bf16.msra.mxu0 %v805
        %912 = vmatprep.subr.bf16.mxu0 0
        %913 = vmatpush1.bf16.msra.mxu0 %v806
        %914 = vmatprep.subr.bf16.mxu0 0
        %915 = vmatpush1.bf16.msra.mxu0 %v807
        %916 = vmatprep.subr.bf16.mxu0 0
        %917 = vmatpush1.bf16.msra.mxu0 %v808
        %918 = vmatprep.subr.bf16.mxu0 0
        %919 = vmatpush1.bf16.msra.mxu0 %v809
        %920 = vmatprep.subr.bf16.mxu0 0
        %921 = vmatpush1.bf16.msra.mxu0 %v810
        %922 = vmatprep.subr.bf16.mxu0 0
        %923 = vmatpush1.bf16.msra.mxu0 %v811
        %924 = vmatprep.mubr.bf16.mxu0 %v593
        %925 = vmatmul.mubr.bf16.gmra.mrb[0].mxu0 %v592
        %v926 = vpop.f32.mrb[0].mxu0
        %v927 = vadd.f32 %v566, %v926
        %v928 = vpop.f32.mrb[0].mxu0
        %v929 = vpop.f32.mrb[0].mxu0
        %v930 = vadd.f32 %v571, %v929
        %v931 = vpop.f32.mrb[0].mxu0
        %932 = vdwg.mxu0
        %933 = vmatprep.subr.bf16.mxu0 0
        %934 = vmatpush1.bf16.msra.mxu0 %v812
        %935 = vmatprep.subr.bf16.mxu0 0
        %936 = vmatpush1.bf16.msra.mxu0 %v813
        %937 = vmatprep.subr.bf16.mxu0 0
        %938 = vmatpush1.bf16.msra.mxu0 %v814
        %939 = vmatprep.subr.bf16.mxu0 0
        %940 = vmatpush1.bf16.msra.mxu0 %v815
        %941 = vmatprep.subr.bf16.mxu0 0
        %942 = vmatpush1.bf16.msra.mxu0 %v816
        %943 = vmatprep.subr.bf16.mxu0 0
        %944 = vmatpush1.bf16.msra.mxu0 %v817
        %945 = vmatprep.subr.bf16.mxu0 0
        %946 = vmatpush1.bf16.msra.mxu0 %v818
        %947 = vmatprep.subr.bf16.mxu0 0
        %948 = vmatpush1.bf16.msra.mxu0 %v819
        %949 = vmatprep.subr.bf16.mxu0 0
        %950 = vmatpush1.bf16.msra.mxu0 %v820
        %951 = vmatprep.subr.bf16.mxu0 0
        %952 = vmatpush1.bf16.msra.mxu0 %v821
        %953 = vmatprep.subr.bf16.mxu0 0
        %954 = vmatpush1.bf16.msra.mxu0 %v822
        %955 = vmatprep.subr.bf16.mxu0 0
        %956 = vmatpush1.bf16.msra.mxu0 %v823
        %957 = vmatprep.subr.bf16.mxu0 0
        %958 = vmatpush1.bf16.msra.mxu0 %v824
        %959 = vmatprep.subr.bf16.mxu0 0
        %960 = vmatpush1.bf16.msra.mxu0 %v825
        %961 = vmatprep.subr.bf16.mxu0 0
        %962 = vmatpush1.bf16.msra.mxu0 %v826
        %963 = vmatprep.subr.bf16.mxu0 0
        %964 = vmatpush1.bf16.msra.mxu0 %v827
        %965 = vmatprep.mubr.bf16.mxu0 %v595
        %966 = vmatmul.mubr.bf16.gmra.mrb[0].mxu0 %v594
        %v967 = vpop.f32.mrb[0].mxu0
        %v968 = vadd.f32 %v927, %v967
        %v969 = vpop.f32.mrb[0].mxu0
        %v970 = vpop.f32.mrb[0].mxu0
        %v971 = vadd.f32 %v930, %v970
        %v972 = vpop.f32.mrb[0].mxu0
        %973 = vdwg.mxu0
        %974 = vmatprep.subr.bf16.mxu0 0
        %975 = vmatpush1.bf16.msra.mxu0 %v828
        %976 = vmatprep.subr.bf16.mxu0 0
        %977 = vmatpush1.bf16.msra.mxu0 %v829
        %978 = vmatprep.subr.bf16.mxu0 0
        %979 = vmatpush1.bf16.msra.mxu0 %v830
        %980 = vmatprep.subr.bf16.mxu0 0
        %981 = vmatpush1.bf16.msra.mxu0 %v831
        %982 = vmatprep.subr.bf16.mxu0 0
        %983 = vmatpush1.bf16.msra.mxu0 %v832
        %984 = vmatprep.subr.bf16.mxu0 0
        %985 = vmatpush1.bf16.msra.mxu0 %v833
        %986 = vmatprep.subr.bf16.mxu0 0
        %987 = vmatpush1.bf16.msra.mxu0 %v834
        %988 = vmatprep.subr.bf16.mxu0 0
        %989 = vmatpush1.bf16.msra.mxu0 %v835
        %990 = vmatprep.subr.bf16.mxu0 0
        %991 = vmatpush1.bf16.msra.mxu0 %v836
        %992 = vmatprep.subr.bf16.mxu0 0
        %993 = vmatpush1.bf16.msra.mxu0 %v837
        %994 = vmatprep.subr.bf16.mxu0 0
        %995 = vmatpush1.bf16.msra.mxu0 %v838
        %996 = vmatprep.subr.bf16.mxu0 0
        %997 = vmatpush1.bf16.msra.mxu0 %v839
        %998 = vmatprep.subr.bf16.mxu0 0
        %999 = vmatpush1.bf16.msra.mxu0 %v840
        %1000 = vmatprep.subr.bf16.mxu0 0
        %1001 = vmatpush1.bf16.msra.mxu0 %v841
        %1002 = vmatprep.subr.bf16.mxu0 0
        %1003 = vmatpush1.bf16.msra.mxu0 %v842
        %1004 = vmatprep.subr.bf16.mxu0 0
        %1005 = vmatpush1.bf16.msra.mxu0 %v843
        %1006 = vmatprep.mubr.bf16.mxu0 %v597
        %1007 = vmatmul.mubr.bf16.gmra.mrb[0].mxu0 %v596
        %v1008 = vpop.f32.mrb[0].mxu0
        %v1009 = vadd.f32 %v968, %v1008
        %v1010 = vpop.f32.mrb[0].mxu0
        %v1011 = vpop.f32.mrb[0].mxu0
        %v1012 = vadd.f32 %v971, %v1011
        %v1013 = vpop.f32.mrb[0].mxu0
        %1014 = vdwg.mxu0
        %v1015 = vld [vmem:[%s5] sm:$0x1]
        %v1016 = vlaneseq
        %v1017 = vshrl.u32 %v1016, 7
        %v1018 = vsub.s32 0, %v1017
        %v1019 = vrot.slane %v1015, %v1018
        %v1020 = vadd.f32 %v1009, %v1019
        %v1021 = vadd.f32 %v1012, %v1019
        %v1022 = vmax.f32 %v1020, 0.0
        %v1023 = vmax.f32 %v1021, 0.0
        %v1024 = vld [vmem:[#allocation5 + $0x8] sm:$0xff]
        %v1025 = vld [vmem:[#allocation5 + $0x28] sm:$0xff]
        %v1026 = vld [vmem:[#allocation5 + $0x48] sm:$0xff]
        %v1027 = vld [vmem:[#allocation5 + $0x68] sm:$0xff]
        %v1029 = vsel %vm492, %v1022, 0
        %v1032 = vsel %vm492, %v1023, 0
        %1034 = vmatprep.subr.mxu0 0.0
        %1035 = vmatpush1.msra.mxu0 %v1024
        %1036 = vmatprep.subr.mxu0 0.0
        %1037 = vmatpush1.msra.mxu0 %v1025
        %1038 = vmatprep.subr.mxu0 0.0
        %1039 = vmatpush1.msra.mxu0 %v1026
        %1040 = vmatprep.subr.mxu0 0.0
        %1041 = vmatpush1.msra.mxu0 %v1027
        %1042 = vmatprep.subr.mxu0 0.0
        %1043 = vmatpush1.msra.mxu0 0.0
        %1044 = vmatprep.subr.mxu0 0.0
        %1045 = vmatpush1.msra.mxu0 0.0
        %1046 = vmatprep.subr.mxu0 0.0
        %1047 = vmatpush1.msra.mxu0 0.0
        %1048 = vmatprep.subr.mxu0 0.0
        %1049 = vmatpush1.msra.mxu0 0.0
        %1050 = vmatprep.subr.mxu0 0.0
        %1051 = vmatpush1.msra.mxu0 0.0
        %1052 = vmatprep.subr.mxu0 0.0
        %1053 = vmatpush1.msra.mxu0 0.0
        %1054 = vmatprep.subr.mxu0 0.0
        %1055 = vmatpush1.msra.mxu0 0.0
        %1056 = vmatprep.subr.mxu0 0.0
        %1057 = vmatpush1.msra.mxu0 0.0
        %1058 = vmatprep.subr.mxu0 0.0
        %1059 = vmatpush1.msra.mxu0 0.0
        %1060 = vmatprep.subr.mxu0 0.0
        %1061 = vmatpush1.msra.mxu0 0.0
        %1062 = vmatprep.subr.mxu0 0.0
        %1063 = vmatpush1.msra.mxu0 0.0
        %1064 = vmatprep.subr.mxu0 0.0
        %1065 = vmatpush1.msra.mxu0 0.0
        %1066 = vmatprep.subr.mxu0 0.0
        %1067 = vmatpush1.msra.mxu0 0.0
        %1068 = vmatprep.subr.mxu0 0.0
        %1069 = vmatpush1.msra.mxu0 0.0
        %1070 = vmatprep.subr.mxu0 0.0
        %1071 = vmatpush1.msra.mxu0 0.0
        %1072 = vmatprep.subr.mxu0 0.0
        %1073 = vmatpush1.msra.mxu0 0.0
        %1074 = vmatprep.subr.mxu0 0.0
        %1075 = vmatpush1.msra.mxu0 0.0
        %1076 = vmatprep.subr.mxu0 0.0
        %1077 = vmatpush1.msra.mxu0 0.0
        %1078 = vmatprep.subr.mxu0 0.0
        %1079 = vmatpush1.msra.mxu0 0.0
        %1080 = vmatprep.subr.mxu0 0.0
        %1081 = vmatpush1.msra.mxu0 0.0
        %1082 = vmatprep.subr.mxu0 0.0
        %1083 = vmatpush1.msra.mxu0 0.0
        %1084 = vmatprep.subr.mxu0 0.0
        %1085 = vmatpush1.msra.mxu0 0.0
        %1086 = vmatprep.subr.mxu0 0.0
        %1087 = vmatpush1.msra.mxu0 0.0
        %1088 = vmatprep.subr.mxu0 0.0
        %1089 = vmatpush1.msra.mxu0 0.0
        %1090 = vmatprep.subr.mxu0 0.0
        %1091 = vmatpush1.msra.mxu0 0.0
        %1092 = vmatprep.subr.mxu0 0.0
        %1093 = vmatpush1.msra.mxu0 0.0
        %1094 = vmatprep.subr.mxu0 0.0
        %1095 = vmatpush1.msra.mxu0 0.0
        %1096 = vmatprep.subr.mxu0 0.0
        %1097 = vmatpush1.msra.mxu0 0.0
        %1098 = vmatprep.mubr.f32.mxu0 0.0
        %1099 = vmatmul.mubr.f32.gmra.mrb[0].mxu0 %v1029
        %v1100 = vpop.f32.mrb[0].mxu0
        %v1101 = vadd.f32 0.0, %v1100
        %v1102 = vpop.f32.mrb[0].mxu0
        %1103 = vmatprep.mubr.f32.mxu0 0.0
        %1104 = vmatmul.mubr.f32.gmra.mrb[0].mxu0 %v1032
        %v1105 = vpop.f32.mrb[0].mxu0
        %v1106 = vadd.f32 0.0, %v1105
        %v1107 = vpop.f32.mrb[0].mxu0
        %1108 = vdwg.mxu0
        %1111 = vrot.lane.b32.xlu0 %v1101, 48
        %v1112 = vpop.permute.xlu0 %1111
        %1113 = vrot.lane.b32.xlu0 %v1106, 48
        %v1114 = vpop.permute.xlu0 %1113
        %1117 = vxpose.xlu0.b32.start [1/16] %v1112, 128
        %1118 = vxpose.xlu0.b32.cont [2/16] %v1114, 128
        %1119 = vxpose.xlu0.b32.cont [3/16] 0.0, 128
        %1120 = vxpose.xlu0.b32.cont [4/16] 0.0, 128
        %1121 = vxpose.xlu0.b32.cont [5/16] 0.0, 128
        %1122 = vxpose.xlu0.b32.cont [6/16] 0.0, 128
        %1123 = vxpose.xlu0.b32.cont [7/16] 0.0, 128
        %1124 = vxpose.xlu0.b32.cont [8/16] 0.0, 128
        %1125 = vxpose.xlu0.b32.cont [9/16] 0.0, 128
        %1126 = vxpose.xlu0.b32.cont [10/16] 0.0, 128
        %1127 = vxpose.xlu0.b32.cont [11/16] 0.0, 128
        %1128 = vxpose.xlu0.b32.cont [12/16] 0.0, 128
        %1129 = vxpose.xlu0.b32.cont [13/16] 0.0, 128
        %1130 = vxpose.xlu0.b32.cont [14/16] 0.0, 128
        %1131 = vxpose.xlu0.b32.cont [15/16] 0.0, 128
        %1132 = vxpose.xlu0.b32.end [16/16] 0.0, 128
        %v1133 = vpop.trf.xlu0
        %v1134 = vpop.trf.xlu0
        %v1135 = vpop.trf.xlu0
        %v1136 = vpop.trf.xlu0
        %v1137 = vpop.trf.xlu0
        %v1138 = vpop.trf.xlu0
        %v1139 = vpop.trf.xlu0
        %v1140 = vpop.trf.xlu0
        %v1141 = vpop.trf.xlu0
        %v1142 = vpop.trf.xlu0
        %v1143 = vpop.trf.xlu0
        %v1144 = vpop.trf.xlu0
        %v1145 = vpop.trf.xlu0
        %v1146 = vpop.trf.xlu0
        %v1147 = vpop.trf.xlu0
        %v1148 = vpop.trf.xlu0
        %v1149 = vld [vmem:[%s5 + $0x1] sm:$0x1]
        %v1151 = vrot.slane %v1133, 1
        %1152 = vrot.lane.b32.xlu0 %v1151, 16
        %v1153 = vpop.permute.xlu0 %1152
        %v1155 = vrot.slane %v1133, 2
        %1156 = vrot.lane.b32.xlu0 %v1155, 32
        %v1157 = vpop.permute.xlu0 %1156
        %v1159 = vrot.slane %v1133, 3
        %1160 = vrot.lane.b32.xlu0 %v1159, 48
        %v1161 = vpop.permute.xlu0 %1160
        %v1163 = vrot.slane %v1133, 4
        %1164 = vrot.lane.b32.xlu0 %v1163, 64
        %v1165 = vpop.permute.xlu0 %1164
        %v1167 = vrot.slane %v1133, 5
        %1168 = vrot.lane.b32.xlu0 %v1167, 80
        %v1169 = vpop.permute.xlu0 %1168
        %v1171 = vrot.slane %v1133, 6
        %1172 = vrot.lane.b32.xlu0 %v1171, 96
        %v1173 = vpop.permute.xlu0 %1172
        %v1175 = vrot.slane %v1133, 7
        %1176 = vrot.lane.b32.xlu0 %v1175, 112
        %v1177 = vpop.permute.xlu0 %1176
        %vm1179 = vcmask 130048
        %v1180 = vsel %vm1179, %v1133, %v1153
        %v1181 = vsel %vm492, %v1180, %v1157
        %vm1182 = vcmask 392192
        %v1183 = vsel %vm1182, %v1181, %v1161
        %vm1184 = vcmask 523264
        %v1185 = vsel %vm1184, %v1183, %v1165
        %vm1186 = vcmask 654336
        %v1187 = vsel %vm1186, %v1185, %v1169
        %vm1188 = vcmask 785408
        %v1189 = vsel %vm1188, %v1187, %v1173
        %vm1190 = vcmask 916480
        %v1191 = vsel %vm1190, %v1189, %v1177
        %v1192 = vlaneseq
        %v1193 = vshrl.u32 %v1192, 7
        %v1194 = vsub.s32 0, %v1193
        %v1195 = vrot.slane %v1191, %v1194
        %1196 = vrot.lane.b32.xlu0 %v1101, 96
        %v1197 = vpop.permute.xlu0 %1196
        %1198 = vrot.lane.b32.xlu0 %v1106, 96
        %v1199 = vpop.permute.xlu0 %1198
        %vm1200 = vcmask 64512
        %v1201 = vsel %vm1200, %v1197, 0
        %v1203 = vsel %vm1200, %v1199, 0
        %1205 = vmatprep.subr.mxu0 0.0
        %1206 = vmatpush1.msra.mxu0 %v383
        %1207 = vmatprep.subr.mxu0 0.0
        %1208 = vmatpush1.msra.mxu0 0.0
        %1209 = vmatprep.subr.mxu0 0.0
        %1210 = vmatpush1.msra.mxu0 0.0
        %1211 = vmatprep.subr.mxu0 0.0
        %1212 = vmatpush1.msra.mxu0 0.0
        %1213 = vmatprep.subr.mxu0 0.0
        %1214 = vmatpush1.msra.mxu0 0.0
        %1215 = vmatprep.subr.mxu0 0.0
        %1216 = vmatpush1.msra.mxu0 0.0
        %1217 = vmatprep.subr.mxu0 0.0
        %1218 = vmatpush1.msra.mxu0 0.0
        %1219 = vmatprep.subr.mxu0 0.0
        %1220 = vmatpush1.msra.mxu0 0.0
        %1221 = vmatprep.subr.mxu0 0.0
        %1222 = vmatpush1.msra.mxu0 0.0
        %1223 = vmatprep.subr.mxu0 0.0
        %1224 = vmatpush1.msra.mxu0 0.0
        %1225 = vmatprep.subr.mxu0 0.0
        %1226 = vmatpush1.msra.mxu0 0.0
        %1227 = vmatprep.subr.mxu0 0.0
        %1228 = vmatpush1.msra.mxu0 0.0
        %1229 = vmatprep.subr.mxu0 0.0
        %1230 = vmatpush1.msra.mxu0 0.0
        %1231 = vmatprep.subr.mxu0 0.0
        %1232 = vmatpush1.msra.mxu0 0.0
        %1233 = vmatprep.subr.mxu0 0.0
        %1234 = vmatpush1.msra.mxu0 0.0
        %1235 = vmatprep.subr.mxu0 0.0
        %1236 = vmatpush1.msra.mxu0 0.0
        %1237 = vmatprep.subr.mxu0 0.0
        %1238 = vmatpush1.msra.mxu0 0.0
        %1239 = vmatprep.subr.mxu0 0.0
        %1240 = vmatpush1.msra.mxu0 0.0
        %1241 = vmatprep.subr.mxu0 0.0
        %1242 = vmatpush1.msra.mxu0 0.0
        %1243 = vmatprep.subr.mxu0 0.0
        %1244 = vmatpush1.msra.mxu0 0.0
        %1245 = vmatprep.subr.mxu0 0.0
        %1246 = vmatpush1.msra.mxu0 0.0
        %1247 = vmatprep.subr.mxu0 0.0
        %1248 = vmatpush1.msra.mxu0 0.0
        %1249 = vmatprep.subr.mxu0 0.0
        %1250 = vmatpush1.msra.mxu0 0.0
        %1251 = vmatprep.subr.mxu0 0.0
        %1252 = vmatpush1.msra.mxu0 0.0
        %1253 = vmatprep.subr.mxu0 0.0
        %1254 = vmatpush1.msra.mxu0 0.0
        %1255 = vmatprep.subr.mxu0 0.0
        %1256 = vmatpush1.msra.mxu0 0.0
        %1257 = vmatprep.subr.mxu0 0.0
        %1258 = vmatpush1.msra.mxu0 0.0
        %1259 = vmatprep.subr.mxu0 0.0
        %1260 = vmatpush1.msra.mxu0 0.0
        %1261 = vmatprep.subr.mxu0 0.0
        %1262 = vmatpush1.msra.mxu0 0.0
        %1263 = vmatprep.subr.mxu0 0.0
        %1264 = vmatpush1.msra.mxu0 0.0
        %1265 = vmatprep.subr.mxu0 0.0
        %1266 = vmatpush1.msra.mxu0 0.0
        %1267 = vmatprep.subr.mxu0 0.0
        %1268 = vmatpush1.msra.mxu0 0.0
        %1269 = vmatprep.mubr.f32.mxu0 0.0
        %1270 = vmatmul.mubr.f32.gmra.mrb[0].mxu0 %v1201
        %v1271 = vpop.f32.mrb[0].mxu0
        %v1272 = vadd.f32 %v1195, %v1271
        %v1273 = vpop.f32.mrb[0].mxu0
        %1274 = vmatprep.mubr.f32.mxu0 0.0
        %1275 = vmatmul.mubr.f32.gmra.mrb[0].mxu0 %v1203
        %v1276 = vpop.f32.mrb[0].mxu0
        %v1277 = vadd.f32 %v1195, %v1276
        %v1278 = vpop.f32.mrb[0].mxu0
        %1279 = vdwg.mxu0
        %v1280 = vld [vmem:[%s365] sm:$0xff]
        %v1281 = vld [vmem:[%s365 + $0x8] sm:$0xff]
        %v1282 = vadd.f32 %v1272, %v1280
        %v1283 = vadd.f32 %v1277, %v1281
        %vm1284 = vcmp.gt.f32.partialorder %v1282, 0.0
        %vm1285 = vcmp.gt.f32.partialorder %v1283, 0.0
        %v1286 = vmul.f32 %v1282, 0.2
        %v1287 = vmul.f32 %v1283, 0.2
        %v1288 = vsel %vm1284, %v1282, %v1286
        %v1289 = vsel %vm1285, %v1283, %v1287
        %1290 = vmax.xlane.f32.xlu0 %v1288
        %v1291 = vpop.xlane.xlu0 %1290
        %1292 = vmax.xlane.f32.xlu0 %v1289
        %v1293 = vpop.xlane.xlu0 %1292
        %v1294 = vsub.f32 %v1288, %v1291
        %v1295 = vsub.f32 %v1289, %v1293
        %v1296 = vmul.f32 %v1294, 1.442695
        %v1297 = vpow.pop %v1296
        %v1298 = vmul.f32 %v1295, 1.442695
        %v1299 = vpow.pop %v1298
        %1316 = vrot.lane.b32.xlu0 %v367, 80
        %v1317 = vpop.permute.xlu0 %1316
        %1318 = vrot.lane.b32.xlu0 %v368, 80
        %v1319 = vpop.permute.xlu0 %1318
        %1320 = vrot.lane.b32.xlu0 %v369, 80
        %v1321 = vpop.permute.xlu0 %1320
        %1322 = vrot.lane.b32.xlu0 %v370, 80
        %v1323 = vpop.permute.xlu0 %1322
        %1324 = vrot.lane.b32.xlu0 %v371, 80
        %v1325 = vpop.permute.xlu0 %1324
        %1326 = vrot.lane.b32.xlu0 %v372, 80
        %v1327 = vpop.permute.xlu0 %1326
        %1328 = vrot.lane.b32.xlu0 %v373, 80
        %v1329 = vpop.permute.xlu0 %1328
        %1330 = vrot.lane.b32.xlu0 %v374, 80
        %v1331 = vpop.permute.xlu0 %1330
        %1332 = vrot.lane.b32.xlu0 %v375, 80
        %v1333 = vpop.permute.xlu0 %1332
        %1334 = vrot.lane.b32.xlu0 %v376, 80
        %v1335 = vpop.permute.xlu0 %1334
        %1336 = vrot.lane.b32.xlu0 %v377, 80
        %v1337 = vpop.permute.xlu0 %1336
        %1338 = vrot.lane.b32.xlu0 %v378, 80
        %v1339 = vpop.permute.xlu0 %1338
        %1340 = vrot.lane.b32.xlu0 %v379, 80
        %v1341 = vpop.permute.xlu0 %1340
        %1342 = vrot.lane.b32.xlu0 %v380, 80
        %v1343 = vpop.permute.xlu0 %1342
        %1344 = vrot.lane.b32.xlu0 %v381, 80
        %v1345 = vpop.permute.xlu0 %1344
        %1346 = vrot.lane.b32.xlu0 %v382, 80
        %v1347 = vpop.permute.xlu0 %1346
        %1364 = vmatprep.subr.mxu0 0.0
        %1365 = vmatpush1.msra.mxu0 %v1317
        %1366 = vmatprep.subr.mxu0 0.0
        %1367 = vmatpush1.msra.mxu0 %v1319
        %1368 = vmatprep.subr.mxu0 0.0
        %1369 = vmatpush1.msra.mxu0 %v1321
        %1370 = vmatprep.subr.mxu0 0.0
        %1371 = vmatpush1.msra.mxu0 %v1323
        %1372 = vmatprep.subr.mxu0 0.0
        %1373 = vmatpush1.msra.mxu0 %v1325
        %1374 = vmatprep.subr.mxu0 0.0
        %1375 = vmatpush1.msra.mxu0 %v1327
        %1376 = vmatprep.subr.mxu0 0.0
        %1377 = vmatpush1.msra.mxu0 %v1329
        %1378 = vmatprep.subr.mxu0 0.0
        %1379 = vmatpush1.msra.mxu0 %v1331
        %1380 = vmatprep.subr.mxu0 0.0
        %1381 = vmatpush1.msra.mxu0 %v1333
        %1382 = vmatprep.subr.mxu0 0.0
        %1383 = vmatpush1.msra.mxu0 %v1335
        %1384 = vmatprep.subr.mxu0 0.0
        %1385 = vmatpush1.msra.mxu0 %v1337
        %1386 = vmatprep.subr.mxu0 0.0
        %1387 = vmatpush1.msra.mxu0 %v1339
        %1388 = vmatprep.subr.mxu0 0.0
        %1389 = vmatpush1.msra.mxu0 %v1341
        %1390 = vmatprep.subr.mxu0 0.0
        %1391 = vmatpush1.msra.mxu0 %v1343
        %1392 = vmatprep.subr.mxu0 0.0
        %1393 = vmatpush1.msra.mxu0 %v1345
        %1394 = vmatprep.subr.mxu0 0.0
        %1395 = vmatpush1.msra.mxu0 %v1347
        %1396 = vmatprep.subr.mxu0 0.0
        %1397 = vmatpush1.msra.mxu0 0.0
        %1398 = vmatprep.subr.mxu0 0.0
        %1399 = vmatpush1.msra.mxu0 0.0
        %1400 = vmatprep.subr.mxu0 0.0
        %1401 = vmatpush1.msra.mxu0 0.0
        %1402 = vmatprep.subr.mxu0 0.0
        %1403 = vmatpush1.msra.mxu0 0.0
        %1404 = vmatprep.subr.mxu0 0.0
        %1405 = vmatpush1.msra.mxu0 0.0
        %1406 = vmatprep.subr.mxu0 0.0
        %1407 = vmatpush1.msra.mxu0 0.0
        %1408 = vmatprep.subr.mxu0 0.0
        %1409 = vmatpush1.msra.mxu0 0.0
        %1410 = vmatprep.subr.mxu0 0.0
        %1411 = vmatpush1.msra.mxu0 0.0
        %1412 = vmatprep.subr.mxu0 0.0
        %1413 = vmatpush1.msra.mxu0 0.0
        %1414 = vmatprep.subr.mxu0 0.0
        %1415 = vmatpush1.msra.mxu0 0.0
        %1416 = vmatprep.subr.mxu0 0.0
        %1417 = vmatpush1.msra.mxu0 0.0
        %1418 = vmatprep.subr.mxu0 0.0
        %1419 = vmatpush1.msra.mxu0 0.0
        %1420 = vmatprep.subr.mxu0 0.0
        %1421 = vmatpush1.msra.mxu0 0.0
        %1422 = vmatprep.subr.mxu0 0.0
        %1423 = vmatpush1.msra.mxu0 0.0
        %1424 = vmatprep.subr.mxu0 0.0
        %1425 = vmatpush1.msra.mxu0 0.0
        %1426 = vmatprep.subr.mxu0 0.0
        %1427 = vmatpush1.msra.mxu0 0.0
        %1428 = vmatprep.mubr.f32.mxu0 0.0
        %1429 = vmatmul.mubr.f32.gmra.mrb[0].mxu0 %v1297
        %v1430 = vpop.f32.mrb[0].mxu0
        %v1431 = vadd.f32 0.0, %v1430
        %v1432 = vpop.f32.mrb[0].mxu0
        %1433 = vmatprep.mubr.f32.mxu0 0.0
        %1434 = vmatmul.mubr.f32.gmra.mrb[0].mxu0 %v1299
        %v1435 = vpop.f32.mrb[0].mxu0
        %v1436 = vadd.f32 0.0, %v1435
        %v1437 = vpop.f32.mrb[0].mxu0
        %1438 = vdwg.mxu0
        %v1439 = vmax.f32 %v1431, 1e-30
        %v1440 = vmax.f32 %v1436, 1e-30
        %v1441 = vrcp.pop %v1439
        %v1442 = vrcp.pop %v1440
        %v1444 = vsel %vm1200, %v1441, 0
        %v1447 = vsel %vm1200, %v1442, 0
        %1449 = vmatprep.subr.mxu0 0.0
        %1450 = vmatpush1.msra.mxu0 %v383
        %1451 = vmatprep.subr.mxu0 0.0
        %1452 = vmatpush1.msra.mxu0 0.0
        %1453 = vmatprep.subr.mxu0 0.0
        %1454 = vmatpush1.msra.mxu0 0.0
        %1455 = vmatprep.subr.mxu0 0.0
        %1456 = vmatpush1.msra.mxu0 0.0
        %1457 = vmatprep.subr.mxu0 0.0
        %1458 = vmatpush1.msra.mxu0 0.0
        %1459 = vmatprep.subr.mxu0 0.0
        %1460 = vmatpush1.msra.mxu0 0.0
        %1461 = vmatprep.subr.mxu0 0.0
        %1462 = vmatpush1.msra.mxu0 0.0
        %1463 = vmatprep.subr.mxu0 0.0
        %1464 = vmatpush1.msra.mxu0 0.0
        %1465 = vmatprep.subr.mxu0 0.0
        %1466 = vmatpush1.msra.mxu0 0.0
        %1467 = vmatprep.subr.mxu0 0.0
        %1468 = vmatpush1.msra.mxu0 0.0
        %1469 = vmatprep.subr.mxu0 0.0
        %1470 = vmatpush1.msra.mxu0 0.0
        %1471 = vmatprep.subr.mxu0 0.0
        %1472 = vmatpush1.msra.mxu0 0.0
        %1473 = vmatprep.subr.mxu0 0.0
        %1474 = vmatpush1.msra.mxu0 0.0
        %1475 = vmatprep.subr.mxu0 0.0
        %1476 = vmatpush1.msra.mxu0 0.0
        %1477 = vmatprep.subr.mxu0 0.0
        %1478 = vmatpush1.msra.mxu0 0.0
        %1479 = vmatprep.subr.mxu0 0.0
        %1480 = vmatpush1.msra.mxu0 0.0
        %1481 = vmatprep.subr.mxu0 0.0
        %1482 = vmatpush1.msra.mxu0 0.0
        %1483 = vmatprep.subr.mxu0 0.0
        %1484 = vmatpush1.msra.mxu0 0.0
        %1485 = vmatprep.subr.mxu0 0.0
        %1486 = vmatpush1.msra.mxu0 0.0
        %1487 = vmatprep.subr.mxu0 0.0
        %1488 = vmatpush1.msra.mxu0 0.0
        %1489 = vmatprep.subr.mxu0 0.0
        %1490 = vmatpush1.msra.mxu0 0.0
        %1491 = vmatprep.subr.mxu0 0.0
        %1492 = vmatpush1.msra.mxu0 0.0
        %1493 = vmatprep.subr.mxu0 0.0
        %1494 = vmatpush1.msra.mxu0 0.0
        %1495 = vmatprep.subr.mxu0 0.0
        %1496 = vmatpush1.msra.mxu0 0.0
        %1497 = vmatprep.subr.mxu0 0.0
        %1498 = vmatpush1.msra.mxu0 0.0
        %1499 = vmatprep.subr.mxu0 0.0
        %1500 = vmatpush1.msra.mxu0 0.0
        %1501 = vmatprep.subr.mxu0 0.0
        %1502 = vmatpush1.msra.mxu0 0.0
        %1503 = vmatprep.subr.mxu0 0.0
        %1504 = vmatpush1.msra.mxu0 0.0
        %1505 = vmatprep.subr.mxu0 0.0
        %1506 = vmatpush1.msra.mxu0 0.0
        %1507 = vmatprep.subr.mxu0 0.0
        %1508 = vmatpush1.msra.mxu0 0.0
        %1509 = vmatprep.subr.mxu0 0.0
        %1510 = vmatpush1.msra.mxu0 0.0
        %1511 = vmatprep.subr.mxu0 0.0
        %1512 = vmatpush1.msra.mxu0 0.0
        %1513 = vmatprep.mubr.f32.mxu0 0.0
        %1514 = vmatmul.mubr.f32.gmra.mrb[0].mxu0 %v1444
        %v1515 = vpop.f32.mrb[0].mxu0
        %v1516 = vadd.f32 0.0, %v1515
        %v1517 = vpop.f32.mrb[0].mxu0
        %1518 = vmatprep.mubr.f32.mxu0 0.0
        %1519 = vmatmul.mubr.f32.gmra.mrb[0].mxu0 %v1447
        %v1520 = vpop.f32.mrb[0].mxu0
        %v1521 = vadd.f32 0.0, %v1520
        %v1522 = vpop.f32.mrb[0].mxu0
        %1523 = vdwg.mxu0
        %v1524 = vmul.f32 %v1297, %v1516
        %v1525 = vmul.f32 %v1299, %v1521
        %v1526 = vsel %vm1179, %v367, 0
        %v1528 = vsel %vm1179, %v368, 0
        %v1530 = vsel %vm1179, %v369, 0
        %v1532 = vsel %vm1179, %v370, 0
        %v1534 = vsel %vm1179, %v371, 0
        %v1536 = vsel %vm1179, %v372, 0
        %v1538 = vsel %vm1179, %v373, 0
        %v1540 = vsel %vm1179, %v374, 0
        %v1542 = vsel %vm1179, %v375, 0
        %v1544 = vsel %vm1179, %v376, 0
        %v1546 = vsel %vm1179, %v377, 0
        %v1548 = vsel %vm1179, %v378, 0
        %v1550 = vsel %vm1179, %v379, 0
        %v1552 = vsel %vm1179, %v380, 0
        %v1554 = vsel %vm1179, %v381, 0
        %v1556 = vsel %vm1179, %v382, 0
        %1558 = vmatprep.subr.mxu0 0.0
        %1559 = vmatpush1.msra.mxu0 %v1101
        %1560 = vmatprep.subr.mxu0 0.0
        %1561 = vmatpush1.msra.mxu0 %v1106
        %1562 = vmatprep.subr.mxu0 0.0
        %1563 = vmatpush1.msra.mxu0 0.0
        %1564 = vmatprep.subr.mxu0 0.0
        %1565 = vmatpush1.msra.mxu0 0.0
        %1566 = vmatprep.subr.mxu0 0.0
        %1567 = vmatpush1.msra.mxu0 0.0
        %1568 = vmatprep.subr.mxu0 0.0
        %1569 = vmatpush1.msra.mxu0 0.0
        %1570 = vmatprep.subr.mxu0 0.0
        %1571 = vmatpush1.msra.mxu0 0.0
        %1572 = vmatprep.subr.mxu0 0.0
        %1573 = vmatpush1.msra.mxu0 0.0
        %1574 = vmatprep.subr.mxu0 0.0
        %1575 = vmatpush1.msra.mxu0 0.0
        %1576 = vmatprep.subr.mxu0 0.0
        %1577 = vmatpush1.msra.mxu0 0.0
        %1578 = vmatprep.subr.mxu0 0.0
        %1579 = vmatpush1.msra.mxu0 0.0
        %1580 = vmatprep.subr.mxu0 0.0
        %1581 = vmatpush1.msra.mxu0 0.0
        %1582 = vmatprep.subr.mxu0 0.0
        %1583 = vmatpush1.msra.mxu0 0.0
        %1584 = vmatprep.subr.mxu0 0.0
        %1585 = vmatpush1.msra.mxu0 0.0
        %1586 = vmatprep.subr.mxu0 0.0
        %1587 = vmatpush1.msra.mxu0 0.0
        %1588 = vmatprep.subr.mxu0 0.0
        %1589 = vmatpush1.msra.mxu0 0.0
        %1590 = vmatprep.subr.mxu0 0.0
        %1591 = vmatpush1.msra.mxu0 0.0
        %1592 = vmatprep.subr.mxu0 0.0
        %1593 = vmatpush1.msra.mxu0 0.0
        %1594 = vmatprep.subr.mxu0 0.0
        %1595 = vmatpush1.msra.mxu0 0.0
        %1596 = vmatprep.subr.mxu0 0.0
        %1597 = vmatpush1.msra.mxu0 0.0
        %1598 = vmatprep.subr.mxu0 0.0
        %1599 = vmatpush1.msra.mxu0 0.0
        %1600 = vmatprep.subr.mxu0 0.0
        %1601 = vmatpush1.msra.mxu0 0.0
        %1602 = vmatprep.subr.mxu0 0.0
        %1603 = vmatpush1.msra.mxu0 0.0
        %1604 = vmatprep.subr.mxu0 0.0
        %1605 = vmatpush1.msra.mxu0 0.0
        %1606 = vmatprep.subr.mxu0 0.0
        %1607 = vmatpush1.msra.mxu0 0.0
        %1608 = vmatprep.subr.mxu0 0.0
        %1609 = vmatpush1.msra.mxu0 0.0
        %1610 = vmatprep.subr.mxu0 0.0
        %1611 = vmatpush1.msra.mxu0 0.0
        %1612 = vmatprep.subr.mxu0 0.0
        %1613 = vmatpush1.msra.mxu0 0.0
        %1614 = vmatprep.subr.mxu0 0.0
        %1615 = vmatpush1.msra.mxu0 0.0
        %1616 = vmatprep.subr.mxu0 0.0
        %1617 = vmatpush1.msra.mxu0 0.0
        %1618 = vmatprep.subr.mxu0 0.0
        %1619 = vmatpush1.msra.mxu0 0.0
        %1620 = vmatprep.subr.mxu0 0.0
        %1621 = vmatpush1.msra.mxu0 0.0
        %1622 = vmatprep.mubr.f32.mxu0 0.0
        %1623 = vmatmul.mubr.f32.gmra.mrb[0].mxu0 %v1526
        %v1624 = vpop.f32.mrb[0].mxu0
        %v1625 = vadd.f32 0.0, %v1624
        %v1626 = vpop.f32.mrb[0].mxu0
        %1627 = vmatprep.mubr.f32.mxu0 0.0
        %1628 = vmatmul.mubr.f32.gmra.mrb[0].mxu0 %v1528
        %v1629 = vpop.f32.mrb[0].mxu0
        %v1630 = vadd.f32 0.0, %v1629
        %v1631 = vpop.f32.mrb[0].mxu0
        %1632 = vmatprep.mubr.f32.mxu0 0.0
        %1633 = vmatmul.mubr.f32.gmra.mrb[0].mxu0 %v1530
        %v1634 = vpop.f32.mrb[0].mxu0
        %v1635 = vadd.f32 0.0, %v1634
        %v1636 = vpop.f32.mrb[0].mxu0
        %1637 = vmatprep.mubr.f32.mxu0 0.0
        %1638 = vmatmul.mubr.f32.gmra.mrb[0].mxu0 %v1532
        %v1639 = vpop.f32.mrb[0].mxu0
        %v1640 = vadd.f32 0.0, %v1639
        %v1641 = vpop.f32.mrb[0].mxu0
        %1642 = vmatprep.mubr.f32.mxu0 0.0
        %1643 = vmatmul.mubr.f32.gmra.mrb[0].mxu0 %v1534
        %v1644 = vpop.f32.mrb[0].mxu0
        %v1645 = vadd.f32 0.0, %v1644
        %v1646 = vpop.f32.mrb[0].mxu0
        %1647 = vmatprep.mubr.f32.mxu0 0.0
        %1648 = vmatmul.mubr.f32.gmra.mrb[0].mxu0 %v1536
        %v1649 = vpop.f32.mrb[0].mxu0
        %v1650 = vadd.f32 0.0, %v1649
        %v1651 = vpop.f32.mrb[0].mxu0
        %1652 = vmatprep.mubr.f32.mxu0 0.0
        %1653 = vmatmul.mubr.f32.gmra.mrb[0].mxu0 %v1538
        %v1654 = vpop.f32.mrb[0].mxu0
        %v1655 = vadd.f32 0.0, %v1654
        %v1656 = vpop.f32.mrb[0].mxu0
        %1657 = vmatprep.mubr.f32.mxu0 0.0
        %1658 = vmatmul.mubr.f32.gmra.mrb[0].mxu0 %v1540
        %v1659 = vpop.f32.mrb[0].mxu0
        %v1660 = vadd.f32 0.0, %v1659
        %v1661 = vpop.f32.mrb[0].mxu0
        %1662 = vmatprep.mubr.f32.mxu0 0.0
        %1663 = vmatmul.mubr.f32.gmra.mrb[0].mxu0 %v1542
        %v1664 = vpop.f32.mrb[0].mxu0
        %v1665 = vadd.f32 0.0, %v1664
        %v1666 = vpop.f32.mrb[0].mxu0
        %1667 = vmatprep.mubr.f32.mxu0 0.0
        %1668 = vmatmul.mubr.f32.gmra.mrb[0].mxu0 %v1544
        %v1669 = vpop.f32.mrb[0].mxu0
        %v1670 = vadd.f32 0.0, %v1669
        %v1671 = vpop.f32.mrb[0].mxu0
        %1672 = vmatprep.mubr.f32.mxu0 0.0
        %1673 = vmatmul.mubr.f32.gmra.mrb[0].mxu0 %v1546
        %v1674 = vpop.f32.mrb[0].mxu0
        %v1675 = vadd.f32 0.0, %v1674
        %v1676 = vpop.f32.mrb[0].mxu0
        %1677 = vmatprep.mubr.f32.mxu0 0.0
        %1678 = vmatmul.mubr.f32.gmra.mrb[0].mxu0 %v1548
        %v1679 = vpop.f32.mrb[0].mxu0
        %v1680 = vadd.f32 0.0, %v1679
        %v1681 = vpop.f32.mrb[0].mxu0
        %1682 = vmatprep.mubr.f32.mxu0 0.0
        %1683 = vmatmul.mubr.f32.gmra.mrb[0].mxu0 %v1550
        %v1684 = vpop.f32.mrb[0].mxu0
        %v1685 = vadd.f32 0.0, %v1684
        %v1686 = vpop.f32.mrb[0].mxu0
        %1687 = vmatprep.mubr.f32.mxu0 0.0
        %1688 = vmatmul.mubr.f32.gmra.mrb[0].mxu0 %v1552
        %v1689 = vpop.f32.mrb[0].mxu0
        %v1690 = vadd.f32 0.0, %v1689
        %v1691 = vpop.f32.mrb[0].mxu0
        %1692 = vmatprep.mubr.f32.mxu0 0.0
        %1693 = vmatmul.mubr.f32.gmra.mrb[0].mxu0 %v1554
        %v1694 = vpop.f32.mrb[0].mxu0
        %v1695 = vadd.f32 0.0, %v1694
        %v1696 = vpop.f32.mrb[0].mxu0
        %1697 = vmatprep.mubr.f32.mxu0 0.0
        %1698 = vmatmul.mubr.f32.gmra.mrb[0].mxu0 %v1556
        %v1699 = vpop.f32.mrb[0].mxu0
        %v1700 = vadd.f32 0.0, %v1699
        %v1701 = vpop.f32.mrb[0].mxu0
        %1702 = vdwg.mxu0
        %1703 = vrot.lane.b32.xlu0 %v367, 112
        %v1704 = vpop.permute.xlu0 %1703
        %1705 = vrot.lane.b32.xlu0 %v368, 112
        %v1706 = vpop.permute.xlu0 %1705
        %1707 = vrot.lane.b32.xlu0 %v369, 112
        %v1708 = vpop.permute.xlu0 %1707
        %1709 = vrot.lane.b32.xlu0 %v370, 112
        %v1710 = vpop.permute.xlu0 %1709
        %1711 = vrot.lane.b32.xlu0 %v371, 112
        %v1712 = vpop.permute.xlu0 %1711
        %1713 = vrot.lane.b32.xlu0 %v372, 112
        %v1714 = vpop.permute.xlu0 %1713
        %1715 = vrot.lane.b32.xlu0 %v373, 112
        %v1716 = vpop.permute.xlu0 %1715
        %1717 = vrot.lane.b32.xlu0 %v374, 112
        %v1718 = vpop.permute.xlu0 %1717
        %1719 = vrot.lane.b32.xlu0 %v375, 112
        %v1720 = vpop.permute.xlu0 %1719
        %1721 = vrot.lane.b32.xlu0 %v376, 112
        %v1722 = vpop.permute.xlu0 %1721
        %1723 = vrot.lane.b32.xlu0 %v377, 112
        %v1724 = vpop.permute.xlu0 %1723
        %1725 = vrot.lane.b32.xlu0 %v378, 112
        %v1726 = vpop.permute.xlu0 %1725
        %1727 = vrot.lane.b32.xlu0 %v379, 112
        %v1728 = vpop.permute.xlu0 %1727
        %1729 = vrot.lane.b32.xlu0 %v380, 112
        %v1730 = vpop.permute.xlu0 %1729
        %1731 = vrot.lane.b32.xlu0 %v381, 112
        %v1732 = vpop.permute.xlu0 %1731
        %1733 = vrot.lane.b32.xlu0 %v382, 112
        %v1734 = vpop.permute.xlu0 %1733
        %v1751 = vmul.f32 %v1625, %v1704
        %v1752 = vmul.f32 %v1630, %v1706
        %v1753 = vmul.f32 %v1635, %v1708
        %v1754 = vmul.f32 %v1640, %v1710
        %v1755 = vmul.f32 %v1645, %v1712
        %v1756 = vmul.f32 %v1650, %v1714
        %v1757 = vmul.f32 %v1655, %v1716
        %v1758 = vmul.f32 %v1660, %v1718
        %v1759 = vmul.f32 %v1665, %v1720
        %v1760 = vmul.f32 %v1670, %v1722
        %v1761 = vmul.f32 %v1675, %v1724
        %v1762 = vmul.f32 %v1680, %v1726
        %v1763 = vmul.f32 %v1685, %v1728
        %v1764 = vmul.f32 %v1690, %v1730
        %v1765 = vmul.f32 %v1695, %v1732
        %v1766 = vmul.f32 %v1700, %v1734
        %1767 = vmatprep.subr.mxu0 0.0
        %1768 = vmatpush1.msra.mxu0 %v1751
        %1769 = vmatprep.subr.mxu0 0.0
        %1770 = vmatpush1.msra.mxu0 %v1752
        %1771 = vmatprep.subr.mxu0 0.0
        %1772 = vmatpush1.msra.mxu0 %v1753
        %1773 = vmatprep.subr.mxu0 0.0
        %1774 = vmatpush1.msra.mxu0 %v1754
        %1775 = vmatprep.subr.mxu0 0.0
        %1776 = vmatpush1.msra.mxu0 %v1755
        %1777 = vmatprep.subr.mxu0 0.0
        %1778 = vmatpush1.msra.mxu0 %v1756
        %1779 = vmatprep.subr.mxu0 0.0
        %1780 = vmatpush1.msra.mxu0 %v1757
        %1781 = vmatprep.subr.mxu0 0.0
        %1782 = vmatpush1.msra.mxu0 %v1758
        %1783 = vmatprep.subr.mxu0 0.0
        %1784 = vmatpush1.msra.mxu0 %v1759
        %1785 = vmatprep.subr.mxu0 0.0
        %1786 = vmatpush1.msra.mxu0 %v1760
        %1787 = vmatprep.subr.mxu0 0.0
        %1788 = vmatpush1.msra.mxu0 %v1761
        %1789 = vmatprep.subr.mxu0 0.0
        %1790 = vmatpush1.msra.mxu0 %v1762
        %1791 = vmatprep.subr.mxu0 0.0
        %1792 = vmatpush1.msra.mxu0 %v1763
        %1793 = vmatprep.subr.mxu0 0.0
        %1794 = vmatpush1.msra.mxu0 %v1764
        %1795 = vmatprep.subr.mxu0 0.0
        %1796 = vmatpush1.msra.mxu0 %v1765
        %1797 = vmatprep.subr.mxu0 0.0
        %1798 = vmatpush1.msra.mxu0 %v1766
        %1799 = vmatprep.subr.mxu0 0.0
        %1800 = vmatpush1.msra.mxu0 0.0
        %1801 = vmatprep.subr.mxu0 0.0
        %1802 = vmatpush1.msra.mxu0 0.0
        %1803 = vmatprep.subr.mxu0 0.0
        %1804 = vmatpush1.msra.mxu0 0.0
        %1805 = vmatprep.subr.mxu0 0.0
        %1806 = vmatpush1.msra.mxu0 0.0
        %1807 = vmatprep.subr.mxu0 0.0
        %1808 = vmatpush1.msra.mxu0 0.0
        %1809 = vmatprep.subr.mxu0 0.0
        %1810 = vmatpush1.msra.mxu0 0.0
        %1811 = vmatprep.subr.mxu0 0.0
        %1812 = vmatpush1.msra.mxu0 0.0
        %1813 = vmatprep.subr.mxu0 0.0
        %1814 = vmatpush1.msra.mxu0 0.0
        %1815 = vmatprep.subr.mxu0 0.0
        %1816 = vmatpush1.msra.mxu0 0.0
        %1817 = vmatprep.subr.mxu0 0.0
        %1818 = vmatpush1.msra.mxu0 0.0
        %1819 = vmatprep.subr.mxu0 0.0
        %1820 = vmatpush1.msra.mxu0 0.0
        %1821 = vmatprep.subr.mxu0 0.0
        %1822 = vmatpush1.msra.mxu0 0.0
        %1823 = vmatprep.subr.mxu0 0.0
        %1824 = vmatpush1.msra.mxu0 0.0
        %1825 = vmatprep.subr.mxu0 0.0
        %1826 = vmatpush1.msra.mxu0 0.0
        %1827 = vmatprep.subr.mxu0 0.0
        %1828 = vmatpush1.msra.mxu0 0.0
        %1829 = vmatprep.subr.mxu0 0.0
        %1830 = vmatpush1.msra.mxu0 0.0
        %1831 = vmatprep.mubr.f32.mxu0 0.0
        %1832 = vmatmul.mubr.f32.gmra.mrb[0].mxu0 %v1524
        %v1833 = vpop.f32.mrb[0].mxu0
        %v1834 = vadd.f32 0.0, %v1833
        %v1835 = vpop.f32.mrb[0].mxu0
        %1836 = vmatprep.mubr.f32.mxu0 0.0
        %1837 = vmatmul.mubr.f32.gmra.mrb[0].mxu0 %v1525
        %v1838 = vpop.f32.mrb[0].mxu0
        %v1839 = vadd.f32 0.0, %v1838
        %v1840 = vpop.f32.mrb[0].mxu0
        %1841 = vdwg.mxu0
        %v1842 = vlaneseq
        %v1843 = vshrl.u32 %v1842, 7
        %v1844 = vsub.s32 0, %v1843
        %v1845 = vrot.slane %v1149, %v1844
        %v1846 = vadd.f32 %v1845, %v1834
        %v1847 = vadd.f32 %v1845, %v1839
        %v1849 = vrot.slane %v1134, 1
        %1850 = vrot.lane.b32.xlu0 %v1849, 16
        %v1851 = vpop.permute.xlu0 %1850
        %v1853 = vrot.slane %v1134, 2
        %1854 = vrot.lane.b32.xlu0 %v1853, 32
        %v1855 = vpop.permute.xlu0 %1854
        %v1857 = vrot.slane %v1134, 3
        %1858 = vrot.lane.b32.xlu0 %v1857, 48
        %v1859 = vpop.permute.xlu0 %1858
        %v1861 = vrot.slane %v1134, 4
        %1862 = vrot.lane.b32.xlu0 %v1861, 64
        %v1863 = vpop.permute.xlu0 %1862
        %v1865 = vrot.slane %v1134, 5
        %1866 = vrot.lane.b32.xlu0 %v1865, 80
        %v1867 = vpop.permute.xlu0 %1866
        %v1869 = vrot.slane %v1134, 6
        %1870 = vrot.lane.b32.xlu0 %v1869, 96
        %v1871 = vpop.permute.xlu0 %1870
        %v1873 = vrot.slane %v1134, 7
        %1874 = vrot.lane.b32.xlu0 %v1873, 112
        %v1875 = vpop.permute.xlu0 %1874
        %v1877 = vsel %vm1179, %v1134, %v1851
        %v1878 = vsel %vm492, %v1877, %v1855
        %v1879 = vsel %vm1182, %v1878, %v1859
        %v1880 = vsel %vm1184, %v1879, %v1863
        %v1881 = vsel %vm1186, %v1880, %v1867
        %v1882 = vsel %vm1188, %v1881, %v1871
        %v1883 = vsel %vm1190, %v1882, %v1875
        %v1884 = vlaneseq
        %v1885 = vshrl.u32 %v1884, 7
        %v1886 = vsub.s32 0, %v1885
        %v1887 = vrot.slane %v1883, %v1886
        %1888 = vrot.lane.b32.xlu0 %v1101, 56
        %v1889 = vpop.permute.xlu0 %1888
        %1890 = vrot.lane.b32.xlu0 %v1106, 56
        %v1891 = vpop.permute.xlu0 %1890
        %v1892 = vsel %vm1200, %v1889, 0
        %v1894 = vsel %vm1200, %v1891, 0
        %1896 = vmatprep.subr.mxu0 0.0
        %1897 = vmatpush1.msra.mxu0 %v383
        %1898 = vmatprep.subr.mxu0 0.0
        %1899 = vmatpush1.msra.mxu0 0.0
        %1900 = vmatprep.subr.mxu0 0.0
        %1901 = vmatpush1.msra.mxu0 0.0
        %1902 = vmatprep.subr.mxu0 0.0
        %1903 = vmatpush1.msra.mxu0 0.0
        %1904 = vmatprep.subr.mxu0 0.0
        %1905 = vmatpush1.msra.mxu0 0.0
        %1906 = vmatprep.subr.mxu0 0.0
        %1907 = vmatpush1.msra.mxu0 0.0
        %1908 = vmatprep.subr.mxu0 0.0
        %1909 = vmatpush1.msra.mxu0 0.0
        %1910 = vmatprep.subr.mxu0 0.0
        %1911 = vmatpush1.msra.mxu0 0.0
        %1912 = vmatprep.subr.mxu0 0.0
        %1913 = vmatpush1.msra.mxu0 0.0
        %1914 = vmatprep.subr.mxu0 0.0
        %1915 = vmatpush1.msra.mxu0 0.0
        %1916 = vmatprep.subr.mxu0 0.0
        %1917 = vmatpush1.msra.mxu0 0.0
        %1918 = vmatprep.subr.mxu0 0.0
        %1919 = vmatpush1.msra.mxu0 0.0
        %1920 = vmatprep.subr.mxu0 0.0
        %1921 = vmatpush1.msra.mxu0 0.0
        %1922 = vmatprep.subr.mxu0 0.0
        %1923 = vmatpush1.msra.mxu0 0.0
        %1924 = vmatprep.subr.mxu0 0.0
        %1925 = vmatpush1.msra.mxu0 0.0
        %1926 = vmatprep.subr.mxu0 0.0
        %1927 = vmatpush1.msra.mxu0 0.0
        %1928 = vmatprep.subr.mxu0 0.0
        %1929 = vmatpush1.msra.mxu0 0.0
        %1930 = vmatprep.subr.mxu0 0.0
        %1931 = vmatpush1.msra.mxu0 0.0
        %1932 = vmatprep.subr.mxu0 0.0
        %1933 = vmatpush1.msra.mxu0 0.0
        %1934 = vmatprep.subr.mxu0 0.0
        %1935 = vmatpush1.msra.mxu0 0.0
        %1936 = vmatprep.subr.mxu0 0.0
        %1937 = vmatpush1.msra.mxu0 0.0
        %1938 = vmatprep.subr.mxu0 0.0
        %1939 = vmatpush1.msra.mxu0 0.0
        %1940 = vmatprep.subr.mxu0 0.0
        %1941 = vmatpush1.msra.mxu0 0.0
        %1942 = vmatprep.subr.mxu0 0.0
        %1943 = vmatpush1.msra.mxu0 0.0
        %1944 = vmatprep.subr.mxu0 0.0
        %1945 = vmatpush1.msra.mxu0 0.0
        %1946 = vmatprep.subr.mxu0 0.0
        %1947 = vmatpush1.msra.mxu0 0.0
        %1948 = vmatprep.subr.mxu0 0.0
        %1949 = vmatpush1.msra.mxu0 0.0
        %1950 = vmatprep.subr.mxu0 0.0
        %1951 = vmatpush1.msra.mxu0 0.0
        %1952 = vmatprep.subr.mxu0 0.0
        %1953 = vmatpush1.msra.mxu0 0.0
        %1954 = vmatprep.subr.mxu0 0.0
        %1955 = vmatpush1.msra.mxu0 0.0
        %1956 = vmatprep.subr.mxu0 0.0
        %1957 = vmatpush1.msra.mxu0 0.0
        %1958 = vmatprep.subr.mxu0 0.0
        %1959 = vmatpush1.msra.mxu0 0.0
        %1960 = vmatprep.mubr.f32.mxu0 0.0
        %1961 = vmatmul.mubr.f32.gmra.mrb[0].mxu0 %v1892
        %v1962 = vpop.f32.mrb[0].mxu0
        %v1963 = vadd.f32 %v1887, %v1962
        %v1964 = vpop.f32.mrb[0].mxu0
        %1965 = vmatprep.mubr.f32.mxu0 0.0
        %1966 = vmatmul.mubr.f32.gmra.mrb[0].mxu0 %v1894
        %v1967 = vpop.f32.mrb[0].mxu0
        %v1968 = vadd.f32 %v1887, %v1967
        %v1969 = vpop.f32.mrb[0].mxu0
        %1970 = vdwg.mxu0
        %s1971 = scalar_lea.vmem %s365, 16
        %v1972 = vld [vmem:[%s1971] sm:$0xff]
        %v1973 = vld [vmem:[%s1971 + $0x8] sm:$0xff]
        %v1974 = vadd.f32 %v1963, %v1972
        %v1975 = vadd.f32 %v1968, %v1973
        %vm1976 = vcmp.gt.f32.partialorder %v1974, 0.0
        %vm1977 = vcmp.gt.f32.partialorder %v1975, 0.0
        %v1978 = vmul.f32 %v1974, 0.2
        %v1979 = vmul.f32 %v1975, 0.2
        %v1980 = vsel %vm1976, %v1974, %v1978
        %v1981 = vsel %vm1977, %v1975, %v1979
        %1982 = vmax.xlane.f32.xlu0 %v1980
        %v1983 = vpop.xlane.xlu0 %1982
        %1984 = vmax.xlane.f32.xlu0 %v1981
        %v1985 = vpop.xlane.xlu0 %1984
        %v1986 = vsub.f32 %v1980, %v1983
        %v1987 = vsub.f32 %v1981, %v1985
        %v1988 = vmul.f32 %v1986, 1.442695
        %v1989 = vpow.pop %v1988
        %v1990 = vmul.f32 %v1987, 1.442695
        %v1991 = vpow.pop %v1990
        %1992 = vmatprep.subr.mxu0 0.0
        %1993 = vmatpush1.msra.mxu0 %v1317
        %1994 = vmatprep.subr.mxu0 0.0
        %1995 = vmatpush1.msra.mxu0 %v1319
        %1996 = vmatprep.subr.mxu0 0.0
        %1997 = vmatpush1.msra.mxu0 %v1321
        %1998 = vmatprep.subr.mxu0 0.0
        %1999 = vmatpush1.msra.mxu0 %v1323
        %2000 = vmatprep.subr.mxu0 0.0
        %2001 = vmatpush1.msra.mxu0 %v1325
        %2002 = vmatprep.subr.mxu0 0.0
        %2003 = vmatpush1.msra.mxu0 %v1327
        %2004 = vmatprep.subr.mxu0 0.0
        %2005 = vmatpush1.msra.mxu0 %v1329
        %2006 = vmatprep.subr.mxu0 0.0
        %2007 = vmatpush1.msra.mxu0 %v1331
        %2008 = vmatprep.subr.mxu0 0.0
        %2009 = vmatpush1.msra.mxu0 %v1333
        %2010 = vmatprep.subr.mxu0 0.0
        %2011 = vmatpush1.msra.mxu0 %v1335
        %2012 = vmatprep.subr.mxu0 0.0
        %2013 = vmatpush1.msra.mxu0 %v1337
        %2014 = vmatprep.subr.mxu0 0.0
        %2015 = vmatpush1.msra.mxu0 %v1339
        %2016 = vmatprep.subr.mxu0 0.0
        %2017 = vmatpush1.msra.mxu0 %v1341
        %2018 = vmatprep.subr.mxu0 0.0
        %2019 = vmatpush1.msra.mxu0 %v1343
        %2020 = vmatprep.subr.mxu0 0.0
        %2021 = vmatpush1.msra.mxu0 %v1345
        %2022 = vmatprep.subr.mxu0 0.0
        %2023 = vmatpush1.msra.mxu0 %v1347
        %2024 = vmatprep.subr.mxu0 0.0
        %2025 = vmatpush1.msra.mxu0 0.0
        %2026 = vmatprep.subr.mxu0 0.0
        %2027 = vmatpush1.msra.mxu0 0.0
        %2028 = vmatprep.subr.mxu0 0.0
        %2029 = vmatpush1.msra.mxu0 0.0
        %2030 = vmatprep.subr.mxu0 0.0
        %2031 = vmatpush1.msra.mxu0 0.0
        %2032 = vmatprep.subr.mxu0 0.0
        %2033 = vmatpush1.msra.mxu0 0.0
        %2034 = vmatprep.subr.mxu0 0.0
        %2035 = vmatpush1.msra.mxu0 0.0
        %2036 = vmatprep.subr.mxu0 0.0
        %2037 = vmatpush1.msra.mxu0 0.0
        %2038 = vmatprep.subr.mxu0 0.0
        %2039 = vmatpush1.msra.mxu0 0.0
        %2040 = vmatprep.subr.mxu0 0.0
        %2041 = vmatpush1.msra.mxu0 0.0
        %2042 = vmatprep.subr.mxu0 0.0
        %2043 = vmatpush1.msra.mxu0 0.0
        %2044 = vmatprep.subr.mxu0 0.0
        %2045 = vmatpush1.msra.mxu0 0.0
        %2046 = vmatprep.subr.mxu0 0.0
        %2047 = vmatpush1.msra.mxu0 0.0
        %2048 = vmatprep.subr.mxu0 0.0
        %2049 = vmatpush1.msra.mxu0 0.0
        %2050 = vmatprep.subr.mxu0 0.0
        %2051 = vmatpush1.msra.mxu0 0.0
        %2052 = vmatprep.subr.mxu0 0.0
        %2053 = vmatpush1.msra.mxu0 0.0
        %2054 = vmatprep.subr.mxu0 0.0
        %2055 = vmatpush1.msra.mxu0 0.0
        %2056 = vmatprep.mubr.f32.mxu0 0.0
        %2057 = vmatmul.mubr.f32.gmra.mrb[0].mxu0 %v1989
        %v2058 = vpop.f32.mrb[0].mxu0
        %v2059 = vadd.f32 0.0, %v2058
        %v2060 = vpop.f32.mrb[0].mxu0
        %2061 = vmatprep.mubr.f32.mxu0 0.0
        %2062 = vmatmul.mubr.f32.gmra.mrb[0].mxu0 %v1991
        %v2063 = vpop.f32.mrb[0].mxu0
        %v2064 = vadd.f32 0.0, %v2063
        %v2065 = vpop.f32.mrb[0].mxu0
        %2066 = vdwg.mxu0
        %v2067 = vmax.f32 %v2059, 1e-30
        %v2068 = vmax.f32 %v2064, 1e-30
        %v2069 = vrcp.pop %v2067
        %v2070 = vrcp.pop %v2068
        %v2072 = vsel %vm1200, %v2069, 0
        %v2075 = vsel %vm1200, %v2070, 0
        %2077 = vmatprep.subr.mxu0 0.0
        %2078 = vmatpush1.msra.mxu0 %v383
        %2079 = vmatprep.subr.mxu0 0.0
        %2080 = vmatpush1.msra.mxu0 0.0
        %2081 = vmatprep.subr.mxu0 0.0
        %2082 = vmatpush1.msra.mxu0 0.0
        %2083 = vmatprep.subr.mxu0 0.0
        %2084 = vmatpush1.msra.mxu0 0.0
        %2085 = vmatprep.subr.mxu0 0.0
        %2086 = vmatpush1.msra.mxu0 0.0
        %2087 = vmatprep.subr.mxu0 0.0
        %2088 = vmatpush1.msra.mxu0 0.0
        %2089 = vmatprep.subr.mxu0 0.0
        %2090 = vmatpush1.msra.mxu0 0.0
        %2091 = vmatprep.subr.mxu0 0.0
        %2092 = vmatpush1.msra.mxu0 0.0
        %2093 = vmatprep.subr.mxu0 0.0
        %2094 = vmatpush1.msra.mxu0 0.0
        %2095 = vmatprep.subr.mxu0 0.0
        %2096 = vmatpush1.msra.mxu0 0.0
        %2097 = vmatprep.subr.mxu0 0.0
        %2098 = vmatpush1.msra.mxu0 0.0
        %2099 = vmatprep.subr.mxu0 0.0
        %2100 = vmatpush1.msra.mxu0 0.0
        %2101 = vmatprep.subr.mxu0 0.0
        %2102 = vmatpush1.msra.mxu0 0.0
        %2103 = vmatprep.subr.mxu0 0.0
        %2104 = vmatpush1.msra.mxu0 0.0
        %2105 = vmatprep.subr.mxu0 0.0
        %2106 = vmatpush1.msra.mxu0 0.0
        %2107 = vmatprep.subr.mxu0 0.0
        %2108 = vmatpush1.msra.mxu0 0.0
        %2109 = vmatprep.subr.mxu0 0.0
        %2110 = vmatpush1.msra.mxu0 0.0
        %2111 = vmatprep.subr.mxu0 0.0
        %2112 = vmatpush1.msra.mxu0 0.0
        %2113 = vmatprep.subr.mxu0 0.0
        %2114 = vmatpush1.msra.mxu0 0.0
        %2115 = vmatprep.subr.mxu0 0.0
        %2116 = vmatpush1.msra.mxu0 0.0
        %2117 = vmatprep.subr.mxu0 0.0
        %2118 = vmatpush1.msra.mxu0 0.0
        %2119 = vmatprep.subr.mxu0 0.0
        %2120 = vmatpush1.msra.mxu0 0.0
        %2121 = vmatprep.subr.mxu0 0.0
        %2122 = vmatpush1.msra.mxu0 0.0
        %2123 = vmatprep.subr.mxu0 0.0
        %2124 = vmatpush1.msra.mxu0 0.0
        %2125 = vmatprep.subr.mxu0 0.0
        %2126 = vmatpush1.msra.mxu0 0.0
        %2127 = vmatprep.subr.mxu0 0.0
        %2128 = vmatpush1.msra.mxu0 0.0
        %2129 = vmatprep.subr.mxu0 0.0
        %2130 = vmatpush1.msra.mxu0 0.0
        %2131 = vmatprep.subr.mxu0 0.0
        %2132 = vmatpush1.msra.mxu0 0.0
        %2133 = vmatprep.subr.mxu0 0.0
        %2134 = vmatpush1.msra.mxu0 0.0
        %2135 = vmatprep.subr.mxu0 0.0
        %2136 = vmatpush1.msra.mxu0 0.0
        %2137 = vmatprep.subr.mxu0 0.0
        %2138 = vmatpush1.msra.mxu0 0.0
        %2139 = vmatprep.subr.mxu0 0.0
        %2140 = vmatpush1.msra.mxu0 0.0
        %2141 = vmatprep.mubr.f32.mxu0 0.0
        %2142 = vmatmul.mubr.f32.gmra.mrb[0].mxu0 %v2072
        %v2143 = vpop.f32.mrb[0].mxu0
        %v2144 = vadd.f32 0.0, %v2143
        %v2145 = vpop.f32.mrb[0].mxu0
        %2146 = vmatprep.mubr.f32.mxu0 0.0
        %2147 = vmatmul.mubr.f32.gmra.mrb[0].mxu0 %v2075
        %v2148 = vpop.f32.mrb[0].mxu0
        %v2149 = vadd.f32 0.0, %v2148
        %v2150 = vpop.f32.mrb[0].mxu0
        %2151 = vdwg.mxu0
        %v2152 = vmul.f32 %v1989, %v2144
        %v2153 = vmul.f32 %v1991, %v2149
        %2154 = vrot.lane.b32.xlu0 %v1101, 88
        %v2155 = vpop.permute.xlu0 %2154
        %2156 = vrot.lane.b32.xlu0 %v1106, 88
        %v2157 = vpop.permute.xlu0 %2156
        %2160 = vmatprep.subr.mxu0 0.0
        %2161 = vmatpush1.msra.mxu0 %v2155
        %2162 = vmatprep.subr.mxu0 0.0
        %2163 = vmatpush1.msra.mxu0 %v2157
        %2164 = vmatprep.subr.mxu0 0.0
        %2165 = vmatpush1.msra.mxu0 0.0
        %2166 = vmatprep.subr.mxu0 0.0
        %2167 = vmatpush1.msra.mxu0 0.0
        %2168 = vmatprep.subr.mxu0 0.0
        %2169 = vmatpush1.msra.mxu0 0.0
        %2170 = vmatprep.subr.mxu0 0.0
        %2171 = vmatpush1.msra.mxu0 0.0
        %2172 = vmatprep.subr.mxu0 0.0
        %2173 = vmatpush1.msra.mxu0 0.0
        %2174 = vmatprep.subr.mxu0 0.0
        %2175 = vmatpush1.msra.mxu0 0.0
        %2176 = vmatprep.subr.mxu0 0.0
        %2177 = vmatpush1.msra.mxu0 0.0
        %2178 = vmatprep.subr.mxu0 0.0
        %2179 = vmatpush1.msra.mxu0 0.0
        %2180 = vmatprep.subr.mxu0 0.0
        %2181 = vmatpush1.msra.mxu0 0.0
        %2182 = vmatprep.subr.mxu0 0.0
        %2183 = vmatpush1.msra.mxu0 0.0
        %2184 = vmatprep.subr.mxu0 0.0
        %2185 = vmatpush1.msra.mxu0 0.0
        %2186 = vmatprep.subr.mxu0 0.0
        %2187 = vmatpush1.msra.mxu0 0.0
        %2188 = vmatprep.subr.mxu0 0.0
        %2189 = vmatpush1.msra.mxu0 0.0
        %2190 = vmatprep.subr.mxu0 0.0
        %2191 = vmatpush1.msra.mxu0 0.0
        %2192 = vmatprep.subr.mxu0 0.0
        %2193 = vmatpush1.msra.mxu0 0.0
        %2194 = vmatprep.subr.mxu0 0.0
        %2195 = vmatpush1.msra.mxu0 0.0
        %2196 = vmatprep.subr.mxu0 0.0
        %2197 = vmatpush1.msra.mxu0 0.0
        %2198 = vmatprep.subr.mxu0 0.0
        %2199 = vmatpush1.msra.mxu0 0.0
        %2200 = vmatprep.subr.mxu0 0.0
        %2201 = vmatpush1.msra.mxu0 0.0
        %2202 = vmatprep.subr.mxu0 0.0
        %2203 = vmatpush1.msra.mxu0 0.0
        %2204 = vmatprep.subr.mxu0 0.0
        %2205 = vmatpush1.msra.mxu0 0.0
        %2206 = vmatprep.subr.mxu0 0.0
        %2207 = vmatpush1.msra.mxu0 0.0
        %2208 = vmatprep.subr.mxu0 0.0
        %2209 = vmatpush1.msra.mxu0 0.0
        %2210 = vmatprep.subr.mxu0 0.0
        %2211 = vmatpush1.msra.mxu0 0.0
        %2212 = vmatprep.subr.mxu0 0.0
        %2213 = vmatpush1.msra.mxu0 0.0
        %2214 = vmatprep.subr.mxu0 0.0
        %2215 = vmatpush1.msra.mxu0 0.0
        %2216 = vmatprep.subr.mxu0 0.0
        %2217 = vmatpush1.msra.mxu0 0.0
        %2218 = vmatprep.subr.mxu0 0.0
        %2219 = vmatpush1.msra.mxu0 0.0
        %2220 = vmatprep.subr.mxu0 0.0
        %2221 = vmatpush1.msra.mxu0 0.0
        %2222 = vmatprep.subr.mxu0 0.0
        %2223 = vmatpush1.msra.mxu0 0.0
        %2224 = vmatprep.mubr.f32.mxu0 0.0
        %2225 = vmatmul.mubr.f32.gmra.mrb[0].mxu0 %v1526
        %v2226 = vpop.f32.mrb[0].mxu0
        %v2227 = vadd.f32 0.0, %v2226
        %v2228 = vpop.f32.mrb[0].mxu0
        %2229 = vmatprep.mubr.f32.mxu0 0.0
        %2230 = vmatmul.mubr.f32.gmra.mrb[0].mxu0 %v1528
        %v2231 = vpop.f32.mrb[0].mxu0
        %v2232 = vadd.f32 0.0, %v2231
        %v2233 = vpop.f32.mrb[0].mxu0
        %2234 = vmatprep.mubr.f32.mxu0 0.0
        %2235 = vmatmul.mubr.f32.gmra.mrb[0].mxu0 %v1530
        %v2236 = vpop.f32.mrb[0].mxu0
        %v2237 = vadd.f32 0.0, %v2236
        %v2238 = vpop.f32.mrb[0].mxu0
        %2239 = vmatprep.mubr.f32.mxu0 0.0
        %2240 = vmatmul.mubr.f32.gmra.mrb[0].mxu0 %v1532
        %v2241 = vpop.f32.mrb[0].mxu0
        %v2242 = vadd.f32 0.0, %v2241
        %v2243 = vpop.f32.mrb[0].mxu0
        %2244 = vmatprep.mubr.f32.mxu0 0.0
        %2245 = vmatmul.mubr.f32.gmra.mrb[0].mxu0 %v1534
        %v2246 = vpop.f32.mrb[0].mxu0
        %v2247 = vadd.f32 0.0, %v2246
        %v2248 = vpop.f32.mrb[0].mxu0
        %2249 = vmatprep.mubr.f32.mxu0 0.0
        %2250 = vmatmul.mubr.f32.gmra.mrb[0].mxu0 %v1536
        %v2251 = vpop.f32.mrb[0].mxu0
        %v2252 = vadd.f32 0.0, %v2251
        %v2253 = vpop.f32.mrb[0].mxu0
        %2254 = vmatprep.mubr.f32.mxu0 0.0
        %2255 = vmatmul.mubr.f32.gmra.mrb[0].mxu0 %v1538
        %v2256 = vpop.f32.mrb[0].mxu0
        %v2257 = vadd.f32 0.0, %v2256
        %v2258 = vpop.f32.mrb[0].mxu0
        %2259 = vmatprep.mubr.f32.mxu0 0.0
        %2260 = vmatmul.mubr.f32.gmra.mrb[0].mxu0 %v1540
        %v2261 = vpop.f32.mrb[0].mxu0
        %v2262 = vadd.f32 0.0, %v2261
        %v2263 = vpop.f32.mrb[0].mxu0
        %2264 = vmatprep.mubr.f32.mxu0 0.0
        %2265 = vmatmul.mubr.f32.gmra.mrb[0].mxu0 %v1542
        %v2266 = vpop.f32.mrb[0].mxu0
        %v2267 = vadd.f32 0.0, %v2266
        %v2268 = vpop.f32.mrb[0].mxu0
        %2269 = vmatprep.mubr.f32.mxu0 0.0
        %2270 = vmatmul.mubr.f32.gmra.mrb[0].mxu0 %v1544
        %v2271 = vpop.f32.mrb[0].mxu0
        %v2272 = vadd.f32 0.0, %v2271
        %v2273 = vpop.f32.mrb[0].mxu0
        %2274 = vmatprep.mubr.f32.mxu0 0.0
        %2275 = vmatmul.mubr.f32.gmra.mrb[0].mxu0 %v1546
        %v2276 = vpop.f32.mrb[0].mxu0
        %v2277 = vadd.f32 0.0, %v2276
        %v2278 = vpop.f32.mrb[0].mxu0
        %2279 = vmatprep.mubr.f32.mxu0 0.0
        %2280 = vmatmul.mubr.f32.gmra.mrb[0].mxu0 %v1548
        %v2281 = vpop.f32.mrb[0].mxu0
        %v2282 = vadd.f32 0.0, %v2281
        %v2283 = vpop.f32.mrb[0].mxu0
        %2284 = vmatprep.mubr.f32.mxu0 0.0
        %2285 = vmatmul.mubr.f32.gmra.mrb[0].mxu0 %v1550
        %v2286 = vpop.f32.mrb[0].mxu0
        %v2287 = vadd.f32 0.0, %v2286
        %v2288 = vpop.f32.mrb[0].mxu0
        %2289 = vmatprep.mubr.f32.mxu0 0.0
        %2290 = vmatmul.mubr.f32.gmra.mrb[0].mxu0 %v1552
        %v2291 = vpop.f32.mrb[0].mxu0
        %v2292 = vadd.f32 0.0, %v2291
        %v2293 = vpop.f32.mrb[0].mxu0
        %2294 = vmatprep.mubr.f32.mxu0 0.0
        %2295 = vmatmul.mubr.f32.gmra.mrb[0].mxu0 %v1554
        %v2296 = vpop.f32.mrb[0].mxu0
        %v2297 = vadd.f32 0.0, %v2296
        %v2298 = vpop.f32.mrb[0].mxu0
        %2299 = vmatprep.mubr.f32.mxu0 0.0
        %2300 = vmatmul.mubr.f32.gmra.mrb[0].mxu0 %v1556
        %v2301 = vpop.f32.mrb[0].mxu0
        %v2302 = vadd.f32 0.0, %v2301
        %v2303 = vpop.f32.mrb[0].mxu0
        %2304 = vdwg.mxu0
        %v2305 = vmul.f32 %v2227, %v1704
        %v2306 = vmul.f32 %v2232, %v1706
        %v2307 = vmul.f32 %v2237, %v1708
        %v2308 = vmul.f32 %v2242, %v1710
        %v2309 = vmul.f32 %v2247, %v1712
        %v2310 = vmul.f32 %v2252, %v1714
        %v2311 = vmul.f32 %v2257, %v1716
        %v2312 = vmul.f32 %v2262, %v1718
        %v2313 = vmul.f32 %v2267, %v1720
        %v2314 = vmul.f32 %v2272, %v1722
        %v2315 = vmul.f32 %v2277, %v1724
        %v2316 = vmul.f32 %v2282, %v1726
        %v2317 = vmul.f32 %v2287, %v1728
        %v2318 = vmul.f32 %v2292, %v1730
        %v2319 = vmul.f32 %v2297, %v1732
        %v2320 = vmul.f32 %v2302, %v1734
        %2321 = vmatprep.subr.mxu0 0.0
        %2322 = vmatpush1.msra.mxu0 %v2305
        %2323 = vmatprep.subr.mxu0 0.0
        %2324 = vmatpush1.msra.mxu0 %v2306
        %2325 = vmatprep.subr.mxu0 0.0
        %2326 = vmatpush1.msra.mxu0 %v2307
        %2327 = vmatprep.subr.mxu0 0.0
        %2328 = vmatpush1.msra.mxu0 %v2308
        %2329 = vmatprep.subr.mxu0 0.0
        %2330 = vmatpush1.msra.mxu0 %v2309
        %2331 = vmatprep.subr.mxu0 0.0
        %2332 = vmatpush1.msra.mxu0 %v2310
        %2333 = vmatprep.subr.mxu0 0.0
        %2334 = vmatpush1.msra.mxu0 %v2311
        %2335 = vmatprep.subr.mxu0 0.0
        %2336 = vmatpush1.msra.mxu0 %v2312
        %2337 = vmatprep.subr.mxu0 0.0
        %2338 = vmatpush1.msra.mxu0 %v2313
        %2339 = vmatprep.subr.mxu0 0.0
        %2340 = vmatpush1.msra.mxu0 %v2314
        %2341 = vmatprep.subr.mxu0 0.0
        %2342 = vmatpush1.msra.mxu0 %v2315
        %2343 = vmatprep.subr.mxu0 0.0
        %2344 = vmatpush1.msra.mxu0 %v2316
        %2345 = vmatprep.subr.mxu0 0.0
        %2346 = vmatpush1.msra.mxu0 %v2317
        %2347 = vmatprep.subr.mxu0 0.0
        %2348 = vmatpush1.msra.mxu0 %v2318
        %2349 = vmatprep.subr.mxu0 0.0
        %2350 = vmatpush1.msra.mxu0 %v2319
        %2351 = vmatprep.subr.mxu0 0.0
        %2352 = vmatpush1.msra.mxu0 %v2320
        %2353 = vmatprep.subr.mxu0 0.0
        %2354 = vmatpush1.msra.mxu0 0.0
        %2355 = vmatprep.subr.mxu0 0.0
        %2356 = vmatpush1.msra.mxu0 0.0
        %2357 = vmatprep.subr.mxu0 0.0
        %2358 = vmatpush1.msra.mxu0 0.0
        %2359 = vmatprep.subr.mxu0 0.0
        %2360 = vmatpush1.msra.mxu0 0.0
        %2361 = vmatprep.subr.mxu0 0.0
        %2362 = vmatpush1.msra.mxu0 0.0
        %2363 = vmatprep.subr.mxu0 0.0
        %2364 = vmatpush1.msra.mxu0 0.0
        %2365 = vmatprep.subr.mxu0 0.0
        %2366 = vmatpush1.msra.mxu0 0.0
        %2367 = vmatprep.subr.mxu0 0.0
        %2368 = vmatpush1.msra.mxu0 0.0
        %2369 = vmatprep.subr.mxu0 0.0
        %2370 = vmatpush1.msra.mxu0 0.0
        %2371 = vmatprep.subr.mxu0 0.0
        %2372 = vmatpush1.msra.mxu0 0.0
        %2373 = vmatprep.subr.mxu0 0.0
        %2374 = vmatpush1.msra.mxu0 0.0
        %2375 = vmatprep.subr.mxu0 0.0
        %2376 = vmatpush1.msra.mxu0 0.0
        %2377 = vmatprep.subr.mxu0 0.0
        %2378 = vmatpush1.msra.mxu0 0.0
        %2379 = vmatprep.subr.mxu0 0.0
        %2380 = vmatpush1.msra.mxu0 0.0
        %2381 = vmatprep.subr.mxu0 0.0
        %2382 = vmatpush1.msra.mxu0 0.0
        %2383 = vmatprep.subr.mxu0 0.0
        %2384 = vmatpush1.msra.mxu0 0.0
        %2385 = vmatprep.mubr.f32.mxu0 0.0
        %2386 = vmatmul.mubr.f32.gmra.mrb[0].mxu0 %v2152
        %v2387 = vpop.f32.mrb[0].mxu0
        %v2388 = vadd.f32 0.0, %v2387
        %v2389 = vpop.f32.mrb[0].mxu0
        %2390 = vmatprep.mubr.f32.mxu0 0.0
        %2391 = vmatmul.mubr.f32.gmra.mrb[0].mxu0 %v2153
        %v2392 = vpop.f32.mrb[0].mxu0
        %v2393 = vadd.f32 0.0, %v2392
        %v2394 = vpop.f32.mrb[0].mxu0
        %2395 = vdwg.mxu0
        %v2396 = vadd.f32 %v1846, %v2388
        %v2397 = vadd.f32 %v1847, %v2393
        %v2398 = vmax.f32 %v2396, 0.0
        %v2399 = vmax.f32 %v2397, 0.0
        %v2400 = vsel %vm492, %v2398, 0.0
        %2401 = vadd.xlane.f32.xlu0 %v2400
        %v2402 = vpop.xlane.xlu0 %2401
        %v2403 = vsel %vm492, %v2399, 0.0
        %2404 = vadd.xlane.f32.xlu0 %v2403
        %v2405 = vpop.xlane.xlu0 %2404
        %v2406 = vrcp.pop 32.0
        %v2407 = vmul.f32 %v2402, %v2406
        %v2408 = vmul.f32 %v2405, %v2406
        %v2409 = vsub.f32 %v2398, %v2407
        %v2410 = vsub.f32 %v2399, %v2408
        %v2411 = vmul.f32 %v2409, %v2409
        %v2412 = vmul.f32 %v2410, %v2410
        %v2413 = vsel %vm492, %v2411, 0.0
        %2414 = vadd.xlane.f32.xlu0 %v2413
        %v2415 = vpop.xlane.xlu0 %2414
        %v2416 = vsel %vm492, %v2412, 0.0
        %2417 = vadd.xlane.f32.xlu0 %v2416
        %v2418 = vpop.xlane.xlu0 %2417
        %v2419 = vmul.f32 %v2415, %v2406
        %v2420 = vmul.f32 %v2418, %v2406
        %v2421 = vadd.f32 %v2419, 1e-05
        %v2422 = vadd.f32 %v2420, 1e-05
        %v2423 = vrsqrt.pop %v2421
        %v2424 = vrsqrt.pop %v2422
        %v2425 = vmul.f32 %v2409, %v2423
        %v2426 = vmul.f32 %v2410, %v2424
        %v2427 = vld [vmem:[%s5 + $0x3] sm:$0x1]
        %v2428 = vlaneseq
        %v2429 = vshrl.u32 %v2428, 7
        %v2430 = vsub.s32 0, %v2429
        %v2431 = vrot.slane %v2427, %v2430
        %v2432 = vmul.f32 %v2425, %v2431
        %v2433 = vmul.f32 %v2426, %v2431
        %v2434 = vld [vmem:[%s5 + $0x5] sm:$0x1]
        %v2435 = vlaneseq
        %v2436 = vshrl.u32 %v2435, 7
        %v2437 = vsub.s32 0, %v2436
        %v2438 = vrot.slane %v2434, %v2437
        %v2439 = vadd.f32 %v2432, %v2438
        %v2440 = vadd.f32 %v2433, %v2438
        %v2441 = vld [vmem:[#allocation5 + $0x10] sm:$0xff]
        %v2442 = vld [vmem:[#allocation5 + $0x30] sm:$0xff]
        %v2443 = vld [vmem:[#allocation5 + $0x50] sm:$0xff]
        %v2444 = vld [vmem:[#allocation5 + $0x70] sm:$0xff]
        %v2446 = vsel %vm492, %v2439, 0
        %v2449 = vsel %vm492, %v2440, 0
        %2451 = vmatprep.subr.mxu0 0.0
        %2452 = vmatpush1.msra.mxu0 %v2441
        %2453 = vmatprep.subr.mxu0 0.0
        %2454 = vmatpush1.msra.mxu0 %v2442
        %2455 = vmatprep.subr.mxu0 0.0
        %2456 = vmatpush1.msra.mxu0 %v2443
        %2457 = vmatprep.subr.mxu0 0.0
        %2458 = vmatpush1.msra.mxu0 %v2444
        %2459 = vmatprep.subr.mxu0 0.0
        %2460 = vmatpush1.msra.mxu0 0.0
        %2461 = vmatprep.subr.mxu0 0.0
        %2462 = vmatpush1.msra.mxu0 0.0
        %2463 = vmatprep.subr.mxu0 0.0
        %2464 = vmatpush1.msra.mxu0 0.0
        %2465 = vmatprep.subr.mxu0 0.0
        %2466 = vmatpush1.msra.mxu0 0.0
        %2467 = vmatprep.subr.mxu0 0.0
        %2468 = vmatpush1.msra.mxu0 0.0
        %2469 = vmatprep.subr.mxu0 0.0
        %2470 = vmatpush1.msra.mxu0 0.0
        %2471 = vmatprep.subr.mxu0 0.0
        %2472 = vmatpush1.msra.mxu0 0.0
        %2473 = vmatprep.subr.mxu0 0.0
        %2474 = vmatpush1.msra.mxu0 0.0
        %2475 = vmatprep.subr.mxu0 0.0
        %2476 = vmatpush1.msra.mxu0 0.0
        %2477 = vmatprep.subr.mxu0 0.0
        %2478 = vmatpush1.msra.mxu0 0.0
        %2479 = vmatprep.subr.mxu0 0.0
        %2480 = vmatpush1.msra.mxu0 0.0
        %2481 = vmatprep.subr.mxu0 0.0
        %2482 = vmatpush1.msra.mxu0 0.0
        %2483 = vmatprep.subr.mxu0 0.0
        %2484 = vmatpush1.msra.mxu0 0.0
        %2485 = vmatprep.subr.mxu0 0.0
        %2486 = vmatpush1.msra.mxu0 0.0
        %2487 = vmatprep.subr.mxu0 0.0
        %2488 = vmatpush1.msra.mxu0 0.0
        %2489 = vmatprep.subr.mxu0 0.0
        %2490 = vmatpush1.msra.mxu0 0.0
        %2491 = vmatprep.subr.mxu0 0.0
        %2492 = vmatpush1.msra.mxu0 0.0
        %2493 = vmatprep.subr.mxu0 0.0
        %2494 = vmatpush1.msra.mxu0 0.0
        %2495 = vmatprep.subr.mxu0 0.0
        %2496 = vmatpush1.msra.mxu0 0.0
        %2497 = vmatprep.subr.mxu0 0.0
        %2498 = vmatpush1.msra.mxu0 0.0
        %2499 = vmatprep.subr.mxu0 0.0
        %2500 = vmatpush1.msra.mxu0 0.0
        %2501 = vmatprep.subr.mxu0 0.0
        %2502 = vmatpush1.msra.mxu0 0.0
        %2503 = vmatprep.subr.mxu0 0.0
        %2504 = vmatpush1.msra.mxu0 0.0
        %2505 = vmatprep.subr.mxu0 0.0
        %2506 = vmatpush1.msra.mxu0 0.0
        %2507 = vmatprep.subr.mxu0 0.0
        %2508 = vmatpush1.msra.mxu0 0.0
        %2509 = vmatprep.subr.mxu0 0.0
        %2510 = vmatpush1.msra.mxu0 0.0
        %2511 = vmatprep.subr.mxu0 0.0
        %2512 = vmatpush1.msra.mxu0 0.0
        %2513 = vmatprep.subr.mxu0 0.0
        %2514 = vmatpush1.msra.mxu0 0.0
        %2515 = vmatprep.mubr.f32.mxu0 0.0
        %2516 = vmatmul.mubr.f32.gmra.mrb[0].mxu0 %v2446
        %v2517 = vpop.f32.mrb[0].mxu0
        %v2518 = vadd.f32 0.0, %v2517
        %v2519 = vpop.f32.mrb[0].mxu0
        %2520 = vmatprep.mubr.f32.mxu0 0.0
        %2521 = vmatmul.mubr.f32.gmra.mrb[0].mxu0 %v2449
        %v2522 = vpop.f32.mrb[0].mxu0
        %v2523 = vadd.f32 0.0, %v2522
        %v2524 = vpop.f32.mrb[0].mxu0
        %2525 = vdwg.mxu0
        %2528 = vrot.lane.b32.xlu0 %v2518, 48
        %v2529 = vpop.permute.xlu0 %2528
        %2530 = vrot.lane.b32.xlu0 %v2523, 48
        %v2531 = vpop.permute.xlu0 %2530
        %2534 = vxpose.xlu0.b32.start [1/16] %v2529, 128
        %2535 = vxpose.xlu0.b32.cont [2/16] %v2531, 128
        %2536 = vxpose.xlu0.b32.cont [3/16] 0.0, 128
        %2537 = vxpose.xlu0.b32.cont [4/16] 0.0, 128
        %2538 = vxpose.xlu0.b32.cont [5/16] 0.0, 128
        %2539 = vxpose.xlu0.b32.cont [6/16] 0.0, 128
        %2540 = vxpose.xlu0.b32.cont [7/16] 0.0, 128
        %2541 = vxpose.xlu0.b32.cont [8/16] 0.0, 128
        %2542 = vxpose.xlu0.b32.cont [9/16] 0.0, 128
        %2543 = vxpose.xlu0.b32.cont [10/16] 0.0, 128
        %2544 = vxpose.xlu0.b32.cont [11/16] 0.0, 128
        %2545 = vxpose.xlu0.b32.cont [12/16] 0.0, 128
        %2546 = vxpose.xlu0.b32.cont [13/16] 0.0, 128
        %2547 = vxpose.xlu0.b32.cont [14/16] 0.0, 128
        %2548 = vxpose.xlu0.b32.cont [15/16] 0.0, 128
        %2549 = vxpose.xlu0.b32.end [16/16] 0.0, 128
        %v2550 = vpop.trf.xlu0
        %v2551 = vpop.trf.xlu0
        %v2552 = vpop.trf.xlu0
        %v2553 = vpop.trf.xlu0
        %v2554 = vpop.trf.xlu0
        %v2555 = vpop.trf.xlu0
        %v2556 = vpop.trf.xlu0
        %v2557 = vpop.trf.xlu0
        %v2558 = vpop.trf.xlu0
        %v2559 = vpop.trf.xlu0
        %v2560 = vpop.trf.xlu0
        %v2561 = vpop.trf.xlu0
        %v2562 = vpop.trf.xlu0
        %v2563 = vpop.trf.xlu0
        %v2564 = vpop.trf.xlu0
        %v2565 = vpop.trf.xlu0
        %v2566 = vld [vmem:[%s5 + $0x2] sm:$0x1]
        %v2568 = vrot.slane %v2550, 1
        %2569 = vrot.lane.b32.xlu0 %v2568, 16
        %v2570 = vpop.permute.xlu0 %2569
        %v2572 = vrot.slane %v2550, 2
        %2573 = vrot.lane.b32.xlu0 %v2572, 32
        %v2574 = vpop.permute.xlu0 %2573
        %v2576 = vrot.slane %v2550, 3
        %2577 = vrot.lane.b32.xlu0 %v2576, 48
        %v2578 = vpop.permute.xlu0 %2577
        %v2580 = vrot.slane %v2550, 4
        %2581 = vrot.lane.b32.xlu0 %v2580, 64
        %v2582 = vpop.permute.xlu0 %2581
        %v2584 = vrot.slane %v2550, 5
        %2585 = vrot.lane.b32.xlu0 %v2584, 80
        %v2586 = vpop.permute.xlu0 %2585
        %v2588 = vrot.slane %v2550, 6
        %2589 = vrot.lane.b32.xlu0 %v2588, 96
        %v2590 = vpop.permute.xlu0 %2589
        %v2592 = vrot.slane %v2550, 7
        %2593 = vrot.lane.b32.xlu0 %v2592, 112
        %v2594 = vpop.permute.xlu0 %2593
        %v2596 = vsel %vm1179, %v2550, %v2570
        %v2597 = vsel %vm492, %v2596, %v2574
        %v2598 = vsel %vm1182, %v2597, %v2578
        %v2599 = vsel %vm1184, %v2598, %v2582
        %v2600 = vsel %vm1186, %v2599, %v2586
        %v2601 = vsel %vm1188, %v2600, %v2590
        %v2602 = vsel %vm1190, %v2601, %v2594
        %v2603 = vlaneseq
        %v2604 = vshrl.u32 %v2603, 7
        %v2605 = vsub.s32 0, %v2604
        %v2606 = vrot.slane %v2602, %v2605
        %2607 = vrot.lane.b32.xlu0 %v2518, 96
        %v2608 = vpop.permute.xlu0 %2607
        %2609 = vrot.lane.b32.xlu0 %v2523, 96
        %v2610 = vpop.permute.xlu0 %2609
        %v2611 = vsel %vm1200, %v2608, 0
        %v2613 = vsel %vm1200, %v2610, 0
        %2615 = vmatprep.subr.mxu0 0.0
        %2616 = vmatpush1.msra.mxu0 %v383
        %2617 = vmatprep.subr.mxu0 0.0
        %2618 = vmatpush1.msra.mxu0 0.0
        %2619 = vmatprep.subr.mxu0 0.0
        %2620 = vmatpush1.msra.mxu0 0.0
        %2621 = vmatprep.subr.mxu0 0.0
        %2622 = vmatpush1.msra.mxu0 0.0
        %2623 = vmatprep.subr.mxu0 0.0
        %2624 = vmatpush1.msra.mxu0 0.0
        %2625 = vmatprep.subr.mxu0 0.0
        %2626 = vmatpush1.msra.mxu0 0.0
        %2627 = vmatprep.subr.mxu0 0.0
        %2628 = vmatpush1.msra.mxu0 0.0
        %2629 = vmatprep.subr.mxu0 0.0
        %2630 = vmatpush1.msra.mxu0 0.0
        %2631 = vmatprep.subr.mxu0 0.0
        %2632 = vmatpush1.msra.mxu0 0.0
        %2633 = vmatprep.subr.mxu0 0.0
        %2634 = vmatpush1.msra.mxu0 0.0
        %2635 = vmatprep.subr.mxu0 0.0
        %2636 = vmatpush1.msra.mxu0 0.0
        %2637 = vmatprep.subr.mxu0 0.0
        %2638 = vmatpush1.msra.mxu0 0.0
        %2639 = vmatprep.subr.mxu0 0.0
        %2640 = vmatpush1.msra.mxu0 0.0
        %2641 = vmatprep.subr.mxu0 0.0
        %2642 = vmatpush1.msra.mxu0 0.0
        %2643 = vmatprep.subr.mxu0 0.0
        %2644 = vmatpush1.msra.mxu0 0.0
        %2645 = vmatprep.subr.mxu0 0.0
        %2646 = vmatpush1.msra.mxu0 0.0
        %2647 = vmatprep.subr.mxu0 0.0
        %2648 = vmatpush1.msra.mxu0 0.0
        %2649 = vmatprep.subr.mxu0 0.0
        %2650 = vmatpush1.msra.mxu0 0.0
        %2651 = vmatprep.subr.mxu0 0.0
        %2652 = vmatpush1.msra.mxu0 0.0
        %2653 = vmatprep.subr.mxu0 0.0
        %2654 = vmatpush1.msra.mxu0 0.0
        %2655 = vmatprep.subr.mxu0 0.0
        %2656 = vmatpush1.msra.mxu0 0.0
        %2657 = vmatprep.subr.mxu0 0.0
        %2658 = vmatpush1.msra.mxu0 0.0
        %2659 = vmatprep.subr.mxu0 0.0
        %2660 = vmatpush1.msra.mxu0 0.0
        %2661 = vmatprep.subr.mxu0 0.0
        %2662 = vmatpush1.msra.mxu0 0.0
        %2663 = vmatprep.subr.mxu0 0.0
        %2664 = vmatpush1.msra.mxu0 0.0
        %2665 = vmatprep.subr.mxu0 0.0
        %2666 = vmatpush1.msra.mxu0 0.0
        %2667 = vmatprep.subr.mxu0 0.0
        %2668 = vmatpush1.msra.mxu0 0.0
        %2669 = vmatprep.subr.mxu0 0.0
        %2670 = vmatpush1.msra.mxu0 0.0
        %2671 = vmatprep.subr.mxu0 0.0
        %2672 = vmatpush1.msra.mxu0 0.0
        %2673 = vmatprep.subr.mxu0 0.0
        %2674 = vmatpush1.msra.mxu0 0.0
        %2675 = vmatprep.subr.mxu0 0.0
        %2676 = vmatpush1.msra.mxu0 0.0
        %2677 = vmatprep.subr.mxu0 0.0
        %2678 = vmatpush1.msra.mxu0 0.0
        %2679 = vmatprep.mubr.f32.mxu0 0.0
        %2680 = vmatmul.mubr.f32.gmra.mrb[0].mxu0 %v2611
        %v2681 = vpop.f32.mrb[0].mxu0
        %v2682 = vadd.f32 %v2606, %v2681
        %v2683 = vpop.f32.mrb[0].mxu0
        %2684 = vmatprep.mubr.f32.mxu0 0.0
        %2685 = vmatmul.mubr.f32.gmra.mrb[0].mxu0 %v2613
        %v2686 = vpop.f32.mrb[0].mxu0
        %v2687 = vadd.f32 %v2606, %v2686
        %v2688 = vpop.f32.mrb[0].mxu0
        %2689 = vdwg.mxu0
        %s2690 = scalar_lea.vmem %s365, 32
        %v2691 = vld [vmem:[%s2690] sm:$0xff]
        %v2692 = vld [vmem:[%s2690 + $0x8] sm:$0xff]
        %v2693 = vadd.f32 %v2682, %v2691
        %v2694 = vadd.f32 %v2687, %v2692
        %vm2695 = vcmp.gt.f32.partialorder %v2693, 0.0
        %vm2696 = vcmp.gt.f32.partialorder %v2694, 0.0
        %v2697 = vmul.f32 %v2693, 0.2
        %v2698 = vmul.f32 %v2694, 0.2
        %v2699 = vsel %vm2695, %v2693, %v2697
        %v2700 = vsel %vm2696, %v2694, %v2698
        %2701 = vmax.xlane.f32.xlu0 %v2699
        %v2702 = vpop.xlane.xlu0 %2701
        %2703 = vmax.xlane.f32.xlu0 %v2700
        %v2704 = vpop.xlane.xlu0 %2703
        %v2705 = vsub.f32 %v2699, %v2702
        %v2706 = vsub.f32 %v2700, %v2704
        %v2707 = vmul.f32 %v2705, 1.442695
        %v2708 = vpow.pop %v2707
        %v2709 = vmul.f32 %v2706, 1.442695
        %v2710 = vpow.pop %v2709
        %2711 = vmatprep.subr.mxu0 0.0
        %2712 = vmatpush1.msra.mxu0 %v1317
        %2713 = vmatprep.subr.mxu0 0.0
        %2714 = vmatpush1.msra.mxu0 %v1319
        %2715 = vmatprep.subr.mxu0 0.0
        %2716 = vmatpush1.msra.mxu0 %v1321
        %2717 = vmatprep.subr.mxu0 0.0
        %2718 = vmatpush1.msra.mxu0 %v1323
        %2719 = vmatprep.subr.mxu0 0.0
        %2720 = vmatpush1.msra.mxu0 %v1325
        %2721 = vmatprep.subr.mxu0 0.0
        %2722 = vmatpush1.msra.mxu0 %v1327
        %2723 = vmatprep.subr.mxu0 0.0
        %2724 = vmatpush1.msra.mxu0 %v1329
        %2725 = vmatprep.subr.mxu0 0.0
        %2726 = vmatpush1.msra.mxu0 %v1331
        %2727 = vmatprep.subr.mxu0 0.0
        %2728 = vmatpush1.msra.mxu0 %v1333
        %2729 = vmatprep.subr.mxu0 0.0
        %2730 = vmatpush1.msra.mxu0 %v1335
        %2731 = vmatprep.subr.mxu0 0.0
        %2732 = vmatpush1.msra.mxu0 %v1337
        %2733 = vmatprep.subr.mxu0 0.0
        %2734 = vmatpush1.msra.mxu0 %v1339
        %2735 = vmatprep.subr.mxu0 0.0
        %2736 = vmatpush1.msra.mxu0 %v1341
        %2737 = vmatprep.subr.mxu0 0.0
        %2738 = vmatpush1.msra.mxu0 %v1343
        %2739 = vmatprep.subr.mxu0 0.0
        %2740 = vmatpush1.msra.mxu0 %v1345
        %2741 = vmatprep.subr.mxu0 0.0
        %2742 = vmatpush1.msra.mxu0 %v1347
        %2743 = vmatprep.subr.mxu0 0.0
        %2744 = vmatpush1.msra.mxu0 0.0
        %2745 = vmatprep.subr.mxu0 0.0
        %2746 = vmatpush1.msra.mxu0 0.0
        %2747 = vmatprep.subr.mxu0 0.0
        %2748 = vmatpush1.msra.mxu0 0.0
        %2749 = vmatprep.subr.mxu0 0.0
        %2750 = vmatpush1.msra.mxu0 0.0
        %2751 = vmatprep.subr.mxu0 0.0
        %2752 = vmatpush1.msra.mxu0 0.0
        %2753 = vmatprep.subr.mxu0 0.0
        %2754 = vmatpush1.msra.mxu0 0.0
        %2755 = vmatprep.subr.mxu0 0.0
        %2756 = vmatpush1.msra.mxu0 0.0
        %2757 = vmatprep.subr.mxu0 0.0
        %2758 = vmatpush1.msra.mxu0 0.0
        %2759 = vmatprep.subr.mxu0 0.0
        %2760 = vmatpush1.msra.mxu0 0.0
        %2761 = vmatprep.subr.mxu0 0.0
        %2762 = vmatpush1.msra.mxu0 0.0
        %2763 = vmatprep.subr.mxu0 0.0
        %2764 = vmatpush1.msra.mxu0 0.0
        %2765 = vmatprep.subr.mxu0 0.0
        %2766 = vmatpush1.msra.mxu0 0.0
        %2767 = vmatprep.subr.mxu0 0.0
        %2768 = vmatpush1.msra.mxu0 0.0
        %2769 = vmatprep.subr.mxu0 0.0
        %2770 = vmatpush1.msra.mxu0 0.0
        %2771 = vmatprep.subr.mxu0 0.0
        %2772 = vmatpush1.msra.mxu0 0.0
        %2773 = vmatprep.subr.mxu0 0.0
        %2774 = vmatpush1.msra.mxu0 0.0
        %2775 = vmatprep.mubr.f32.mxu0 0.0
        %2776 = vmatmul.mubr.f32.gmra.mrb[0].mxu0 %v2708
        %v2777 = vpop.f32.mrb[0].mxu0
        %v2778 = vadd.f32 0.0, %v2777
        %v2779 = vpop.f32.mrb[0].mxu0
        %2780 = vmatprep.mubr.f32.mxu0 0.0
        %2781 = vmatmul.mubr.f32.gmra.mrb[0].mxu0 %v2710
        %v2782 = vpop.f32.mrb[0].mxu0
        %v2783 = vadd.f32 0.0, %v2782
        %v2784 = vpop.f32.mrb[0].mxu0
        %2785 = vdwg.mxu0
        %v2786 = vmax.f32 %v2778, 1e-30
        %v2787 = vmax.f32 %v2783, 1e-30
        %v2788 = vrcp.pop %v2786
        %v2789 = vrcp.pop %v2787
        %v2791 = vsel %vm1200, %v2788, 0
        %v2794 = vsel %vm1200, %v2789, 0
        %2796 = vmatprep.subr.mxu0 0.0
        %2797 = vmatpush1.msra.mxu0 %v383
        %2798 = vmatprep.subr.mxu0 0.0
        %2799 = vmatpush1.msra.mxu0 0.0
        %2800 = vmatprep.subr.mxu0 0.0
        %2801 = vmatpush1.msra.mxu0 0.0
        %2802 = vmatprep.subr.mxu0 0.0
        %2803 = vmatpush1.msra.mxu0 0.0
        %2804 = vmatprep.subr.mxu0 0.0
        %2805 = vmatpush1.msra.mxu0 0.0
        %2806 = vmatprep.subr.mxu0 0.0
        %2807 = vmatpush1.msra.mxu0 0.0
        %2808 = vmatprep.subr.mxu0 0.0
        %2809 = vmatpush1.msra.mxu0 0.0
        %2810 = vmatprep.subr.mxu0 0.0
        %2811 = vmatpush1.msra.mxu0 0.0
        %2812 = vmatprep.subr.mxu0 0.0
        %2813 = vmatpush1.msra.mxu0 0.0
        %2814 = vmatprep.subr.mxu0 0.0
        %2815 = vmatpush1.msra.mxu0 0.0
        %2816 = vmatprep.subr.mxu0 0.0
        %2817 = vmatpush1.msra.mxu0 0.0
        %2818 = vmatprep.subr.mxu0 0.0
        %2819 = vmatpush1.msra.mxu0 0.0
        %2820 = vmatprep.subr.mxu0 0.0
        %2821 = vmatpush1.msra.mxu0 0.0
        %2822 = vmatprep.subr.mxu0 0.0
        %2823 = vmatpush1.msra.mxu0 0.0
        %2824 = vmatprep.subr.mxu0 0.0
        %2825 = vmatpush1.msra.mxu0 0.0
        %2826 = vmatprep.subr.mxu0 0.0
        %2827 = vmatpush1.msra.mxu0 0.0
        %2828 = vmatprep.subr.mxu0 0.0
        %2829 = vmatpush1.msra.mxu0 0.0
        %2830 = vmatprep.subr.mxu0 0.0
        %2831 = vmatpush1.msra.mxu0 0.0
        %2832 = vmatprep.subr.mxu0 0.0
        %2833 = vmatpush1.msra.mxu0 0.0
        %2834 = vmatprep.subr.mxu0 0.0
        %2835 = vmatpush1.msra.mxu0 0.0
        %2836 = vmatprep.subr.mxu0 0.0
        %2837 = vmatpush1.msra.mxu0 0.0
        %2838 = vmatprep.subr.mxu0 0.0
        %2839 = vmatpush1.msra.mxu0 0.0
        %2840 = vmatprep.subr.mxu0 0.0
        %2841 = vmatpush1.msra.mxu0 0.0
        %2842 = vmatprep.subr.mxu0 0.0
        %2843 = vmatpush1.msra.mxu0 0.0
        %2844 = vmatprep.subr.mxu0 0.0
        %2845 = vmatpush1.msra.mxu0 0.0
        %2846 = vmatprep.subr.mxu0 0.0
        %2847 = vmatpush1.msra.mxu0 0.0
        %2848 = vmatprep.subr.mxu0 0.0
        %2849 = vmatpush1.msra.mxu0 0.0
        %2850 = vmatprep.subr.mxu0 0.0
        %2851 = vmatpush1.msra.mxu0 0.0
        %2852 = vmatprep.subr.mxu0 0.0
        %2853 = vmatpush1.msra.mxu0 0.0
        %2854 = vmatprep.subr.mxu0 0.0
        %2855 = vmatpush1.msra.mxu0 0.0
        %2856 = vmatprep.subr.mxu0 0.0
        %2857 = vmatpush1.msra.mxu0 0.0
        %2858 = vmatprep.subr.mxu0 0.0
        %2859 = vmatpush1.msra.mxu0 0.0
        %2860 = vmatprep.mubr.f32.mxu0 0.0
        %2861 = vmatmul.mubr.f32.gmra.mrb[0].mxu0 %v2791
        %v2862 = vpop.f32.mrb[0].mxu0
        %v2863 = vadd.f32 0.0, %v2862
        %v2864 = vpop.f32.mrb[0].mxu0
        %2865 = vmatprep.mubr.f32.mxu0 0.0
        %2866 = vmatmul.mubr.f32.gmra.mrb[0].mxu0 %v2794
        %v2867 = vpop.f32.mrb[0].mxu0
        %v2868 = vadd.f32 0.0, %v2867
        %v2869 = vpop.f32.mrb[0].mxu0
        %2870 = vdwg.mxu0
        %v2871 = vmul.f32 %v2708, %v2863
        %v2872 = vmul.f32 %v2710, %v2868
        %2873 = vmatprep.subr.mxu0 0.0
        %2874 = vmatpush1.msra.mxu0 %v2518
        %2875 = vmatprep.subr.mxu0 0.0
        %2876 = vmatpush1.msra.mxu0 %v2523
        %2877 = vmatprep.subr.mxu0 0.0
        %2878 = vmatpush1.msra.mxu0 0.0
        %2879 = vmatprep.subr.mxu0 0.0
        %2880 = vmatpush1.msra.mxu0 0.0
        %2881 = vmatprep.subr.mxu0 0.0
        %2882 = vmatpush1.msra.mxu0 0.0
        %2883 = vmatprep.subr.mxu0 0.0
        %2884 = vmatpush1.msra.mxu0 0.0
        %2885 = vmatprep.subr.mxu0 0.0
        %2886 = vmatpush1.msra.mxu0 0.0
        %2887 = vmatprep.subr.mxu0 0.0
        %2888 = vmatpush1.msra.mxu0 0.0
        %2889 = vmatprep.subr.mxu0 0.0
        %2890 = vmatpush1.msra.mxu0 0.0
        %2891 = vmatprep.subr.mxu0 0.0
        %2892 = vmatpush1.msra.mxu0 0.0
        %2893 = vmatprep.subr.mxu0 0.0
        %2894 = vmatpush1.msra.mxu0 0.0
        %2895 = vmatprep.subr.mxu0 0.0
        %2896 = vmatpush1.msra.mxu0 0.0
        %2897 = vmatprep.subr.mxu0 0.0
        %2898 = vmatpush1.msra.mxu0 0.0
        %2899 = vmatprep.subr.mxu0 0.0
        %2900 = vmatpush1.msra.mxu0 0.0
        %2901 = vmatprep.subr.mxu0 0.0
        %2902 = vmatpush1.msra.mxu0 0.0
        %2903 = vmatprep.subr.mxu0 0.0
        %2904 = vmatpush1.msra.mxu0 0.0
        %2905 = vmatprep.subr.mxu0 0.0
        %2906 = vmatpush1.msra.mxu0 0.0
        %2907 = vmatprep.subr.mxu0 0.0
        %2908 = vmatpush1.msra.mxu0 0.0
        %2909 = vmatprep.subr.mxu0 0.0
        %2910 = vmatpush1.msra.mxu0 0.0
        %2911 = vmatprep.subr.mxu0 0.0
        %2912 = vmatpush1.msra.mxu0 0.0
        %2913 = vmatprep.subr.mxu0 0.0
        %2914 = vmatpush1.msra.mxu0 0.0
        %2915 = vmatprep.subr.mxu0 0.0
        %2916 = vmatpush1.msra.mxu0 0.0
        %2917 = vmatprep.subr.mxu0 0.0
        %2918 = vmatpush1.msra.mxu0 0.0
        %2919 = vmatprep.subr.mxu0 0.0
        %2920 = vmatpush1.msra.mxu0 0.0
        %2921 = vmatprep.subr.mxu0 0.0
        %2922 = vmatpush1.msra.mxu0 0.0
        %2923 = vmatprep.subr.mxu0 0.0
        %2924 = vmatpush1.msra.mxu0 0.0
        %2925 = vmatprep.subr.mxu0 0.0
        %2926 = vmatpush1.msra.mxu0 0.0
        %2927 = vmatprep.subr.mxu0 0.0
        %2928 = vmatpush1.msra.mxu0 0.0
        %2929 = vmatprep.subr.mxu0 0.0
        %2930 = vmatpush1.msra.mxu0 0.0
        %2931 = vmatprep.subr.mxu0 0.0
        %2932 = vmatpush1.msra.mxu0 0.0
        %2933 = vmatprep.subr.mxu0 0.0
        %2934 = vmatpush1.msra.mxu0 0.0
        %2935 = vmatprep.subr.mxu0 0.0
        %2936 = vmatpush1.msra.mxu0 0.0
        %2937 = vmatprep.mubr.f32.mxu0 0.0
        %2938 = vmatmul.mubr.f32.gmra.mrb[0].mxu0 %v1526
        %v2939 = vpop.f32.mrb[0].mxu0
        %v2940 = vadd.f32 0.0, %v2939
        %v2941 = vpop.f32.mrb[0].mxu0
        %2942 = vmatprep.mubr.f32.mxu0 0.0
        %2943 = vmatmul.mubr.f32.gmra.mrb[0].mxu0 %v1528
        %v2944 = vpop.f32.mrb[0].mxu0
        %v2945 = vadd.f32 0.0, %v2944
        %v2946 = vpop.f32.mrb[0].mxu0
        %2947 = vmatprep.mubr.f32.mxu0 0.0
        %2948 = vmatmul.mubr.f32.gmra.mrb[0].mxu0 %v1530
        %v2949 = vpop.f32.mrb[0].mxu0
        %v2950 = vadd.f32 0.0, %v2949
        %v2951 = vpop.f32.mrb[0].mxu0
        %2952 = vmatprep.mubr.f32.mxu0 0.0
        %2953 = vmatmul.mubr.f32.gmra.mrb[0].mxu0 %v1532
        %v2954 = vpop.f32.mrb[0].mxu0
        %v2955 = vadd.f32 0.0, %v2954
        %v2956 = vpop.f32.mrb[0].mxu0
        %2957 = vmatprep.mubr.f32.mxu0 0.0
        %2958 = vmatmul.mubr.f32.gmra.mrb[0].mxu0 %v1534
        %v2959 = vpop.f32.mrb[0].mxu0
        %v2960 = vadd.f32 0.0, %v2959
        %v2961 = vpop.f32.mrb[0].mxu0
        %2962 = vmatprep.mubr.f32.mxu0 0.0
        %2963 = vmatmul.mubr.f32.gmra.mrb[0].mxu0 %v1536
        %v2964 = vpop.f32.mrb[0].mxu0
        %v2965 = vadd.f32 0.0, %v2964
        %v2966 = vpop.f32.mrb[0].mxu0
        %2967 = vmatprep.mubr.f32.mxu0 0.0
        %2968 = vmatmul.mubr.f32.gmra.mrb[0].mxu0 %v1538
        %v2969 = vpop.f32.mrb[0].mxu0
        %v2970 = vadd.f32 0.0, %v2969
        %v2971 = vpop.f32.mrb[0].mxu0
        %2972 = vmatprep.mubr.f32.mxu0 0.0
        %2973 = vmatmul.mubr.f32.gmra.mrb[0].mxu0 %v1540
        %v2974 = vpop.f32.mrb[0].mxu0
        %v2975 = vadd.f32 0.0, %v2974
        %v2976 = vpop.f32.mrb[0].mxu0
        %2977 = vmatprep.mubr.f32.mxu0 0.0
        %2978 = vmatmul.mubr.f32.gmra.mrb[0].mxu0 %v1542
        %v2979 = vpop.f32.mrb[0].mxu0
        %v2980 = vadd.f32 0.0, %v2979
        %v2981 = vpop.f32.mrb[0].mxu0
        %2982 = vmatprep.mubr.f32.mxu0 0.0
        %2983 = vmatmul.mubr.f32.gmra.mrb[0].mxu0 %v1544
        %v2984 = vpop.f32.mrb[0].mxu0
        %v2985 = vadd.f32 0.0, %v2984
        %v2986 = vpop.f32.mrb[0].mxu0
        %2987 = vmatprep.mubr.f32.mxu0 0.0
        %2988 = vmatmul.mubr.f32.gmra.mrb[0].mxu0 %v1546
        %v2989 = vpop.f32.mrb[0].mxu0
        %v2990 = vadd.f32 0.0, %v2989
        %v2991 = vpop.f32.mrb[0].mxu0
        %2992 = vmatprep.mubr.f32.mxu0 0.0
        %2993 = vmatmul.mubr.f32.gmra.mrb[0].mxu0 %v1548
        %v2994 = vpop.f32.mrb[0].mxu0
        %v2995 = vadd.f32 0.0, %v2994
        %v2996 = vpop.f32.mrb[0].mxu0
        %2997 = vmatprep.mubr.f32.mxu0 0.0
        %2998 = vmatmul.mubr.f32.gmra.mrb[0].mxu0 %v1550
        %v2999 = vpop.f32.mrb[0].mxu0
        %v3000 = vadd.f32 0.0, %v2999
        %v3001 = vpop.f32.mrb[0].mxu0
        %3002 = vmatprep.mubr.f32.mxu0 0.0
        %3003 = vmatmul.mubr.f32.gmra.mrb[0].mxu0 %v1552
        %v3004 = vpop.f32.mrb[0].mxu0
        %v3005 = vadd.f32 0.0, %v3004
        %v3006 = vpop.f32.mrb[0].mxu0
        %3007 = vmatprep.mubr.f32.mxu0 0.0
        %3008 = vmatmul.mubr.f32.gmra.mrb[0].mxu0 %v1554
        %v3009 = vpop.f32.mrb[0].mxu0
        %v3010 = vadd.f32 0.0, %v3009
        %v3011 = vpop.f32.mrb[0].mxu0
        %3012 = vmatprep.mubr.f32.mxu0 0.0
        %3013 = vmatmul.mubr.f32.gmra.mrb[0].mxu0 %v1556
        %v3014 = vpop.f32.mrb[0].mxu0
        %v3015 = vadd.f32 0.0, %v3014
        %v3016 = vpop.f32.mrb[0].mxu0
        %3017 = vdwg.mxu0
        %v3018 = vmul.f32 %v2940, %v1704
        %v3019 = vmul.f32 %v2945, %v1706
        %v3020 = vmul.f32 %v2950, %v1708
        %v3021 = vmul.f32 %v2955, %v1710
        %v3022 = vmul.f32 %v2960, %v1712
        %v3023 = vmul.f32 %v2965, %v1714
        %v3024 = vmul.f32 %v2970, %v1716
        %v3025 = vmul.f32 %v2975, %v1718
        %v3026 = vmul.f32 %v2980, %v1720
        %v3027 = vmul.f32 %v2985, %v1722
        %v3028 = vmul.f32 %v2990, %v1724
        %v3029 = vmul.f32 %v2995, %v1726
        %v3030 = vmul.f32 %v3000, %v1728
        %v3031 = vmul.f32 %v3005, %v1730
        %v3032 = vmul.f32 %v3010, %v1732
        %v3033 = vmul.f32 %v3015, %v1734
        %3034 = vmatprep.subr.mxu0 0.0
        %3035 = vmatpush1.msra.mxu0 %v3018
        %3036 = vmatprep.subr.mxu0 0.0
        %3037 = vmatpush1.msra.mxu0 %v3019
        %3038 = vmatprep.subr.mxu0 0.0
        %3039 = vmatpush1.msra.mxu0 %v3020
        %3040 = vmatprep.subr.mxu0 0.0
        %3041 = vmatpush1.msra.mxu0 %v3021
        %3042 = vmatprep.subr.mxu0 0.0
        %3043 = vmatpush1.msra.mxu0 %v3022
        %3044 = vmatprep.subr.mxu0 0.0
        %3045 = vmatpush1.msra.mxu0 %v3023
        %3046 = vmatprep.subr.mxu0 0.0
        %3047 = vmatpush1.msra.mxu0 %v3024
        %3048 = vmatprep.subr.mxu0 0.0
        %3049 = vmatpush1.msra.mxu0 %v3025
        %3050 = vmatprep.subr.mxu0 0.0
        %3051 = vmatpush1.msra.mxu0 %v3026
        %3052 = vmatprep.subr.mxu0 0.0
        %3053 = vmatpush1.msra.mxu0 %v3027
        %3054 = vmatprep.subr.mxu0 0.0
        %3055 = vmatpush1.msra.mxu0 %v3028
        %3056 = vmatprep.subr.mxu0 0.0
        %3057 = vmatpush1.msra.mxu0 %v3029
        %3058 = vmatprep.subr.mxu0 0.0
        %3059 = vmatpush1.msra.mxu0 %v3030
        %3060 = vmatprep.subr.mxu0 0.0
        %3061 = vmatpush1.msra.mxu0 %v3031
        %3062 = vmatprep.subr.mxu0 0.0
        %3063 = vmatpush1.msra.mxu0 %v3032
        %3064 = vmatprep.subr.mxu0 0.0
        %3065 = vmatpush1.msra.mxu0 %v3033
        %3066 = vmatprep.subr.mxu0 0.0
        %3067 = vmatpush1.msra.mxu0 0.0
        %3068 = vmatprep.subr.mxu0 0.0
        %3069 = vmatpush1.msra.mxu0 0.0
        %3070 = vmatprep.subr.mxu0 0.0
        %3071 = vmatpush1.msra.mxu0 0.0
        %3072 = vmatprep.subr.mxu0 0.0
        %3073 = vmatpush1.msra.mxu0 0.0
        %3074 = vmatprep.subr.mxu0 0.0
        %3075 = vmatpush1.msra.mxu0 0.0
        %3076 = vmatprep.subr.mxu0 0.0
        %3077 = vmatpush1.msra.mxu0 0.0
        %3078 = vmatprep.subr.mxu0 0.0
        %3079 = vmatpush1.msra.mxu0 0.0
        %3080 = vmatprep.subr.mxu0 0.0
        %3081 = vmatpush1.msra.mxu0 0.0
        %3082 = vmatprep.subr.mxu0 0.0
        %3083 = vmatpush1.msra.mxu0 0.0
        %3084 = vmatprep.subr.mxu0 0.0
        %3085 = vmatpush1.msra.mxu0 0.0
        %3086 = vmatprep.subr.mxu0 0.0
        %3087 = vmatpush1.msra.mxu0 0.0
        %3088 = vmatprep.subr.mxu0 0.0
        %3089 = vmatpush1.msra.mxu0 0.0
        %3090 = vmatprep.subr.mxu0 0.0
        %3091 = vmatpush1.msra.mxu0 0.0
        %3092 = vmatprep.subr.mxu0 0.0
        %3093 = vmatpush1.msra.mxu0 0.0
        %3094 = vmatprep.subr.mxu0 0.0
        %3095 = vmatpush1.msra.mxu0 0.0
        %3096 = vmatprep.subr.mxu0 0.0
        %3097 = vmatpush1.msra.mxu0 0.0
        %3098 = vmatprep.mubr.f32.mxu0 0.0
        %3099 = vmatmul.mubr.f32.gmra.mrb[0].mxu0 %v2871
        %v3100 = vpop.f32.mrb[0].mxu0
        %v3101 = vadd.f32 0.0, %v3100
        %v3102 = vpop.f32.mrb[0].mxu0
        %3103 = vmatprep.mubr.f32.mxu0 0.0
        %3104 = vmatmul.mubr.f32.gmra.mrb[0].mxu0 %v2872
        %v3105 = vpop.f32.mrb[0].mxu0
        %v3106 = vadd.f32 0.0, %v3105
        %v3107 = vpop.f32.mrb[0].mxu0
        %3108 = vdwg.mxu0
        %v3109 = vlaneseq
        %v3110 = vshrl.u32 %v3109, 7
        %v3111 = vsub.s32 0, %v3110
        %v3112 = vrot.slane %v2566, %v3111
        %v3113 = vadd.f32 %v3112, %v3101
        %v3114 = vadd.f32 %v3112, %v3106
        %v3116 = vrot.slane %v2551, 1
        %3117 = vrot.lane.b32.xlu0 %v3116, 16
        %v3118 = vpop.permute.xlu0 %3117
        %v3120 = vrot.slane %v2551, 2
        %3121 = vrot.lane.b32.xlu0 %v3120, 32
        %v3122 = vpop.permute.xlu0 %3121
        %v3124 = vrot.slane %v2551, 3
        %3125 = vrot.lane.b32.xlu0 %v3124, 48
        %v3126 = vpop.permute.xlu0 %3125
        %v3128 = vrot.slane %v2551, 4
        %3129 = vrot.lane.b32.xlu0 %v3128, 64
        %v3130 = vpop.permute.xlu0 %3129
        %v3132 = vrot.slane %v2551, 5
        %3133 = vrot.lane.b32.xlu0 %v3132, 80
        %v3134 = vpop.permute.xlu0 %3133
        %v3136 = vrot.slane %v2551, 6
        %3137 = vrot.lane.b32.xlu0 %v3136, 96
        %v3138 = vpop.permute.xlu0 %3137
        %v3140 = vrot.slane %v2551, 7
        %3141 = vrot.lane.b32.xlu0 %v3140, 112
        %v3142 = vpop.permute.xlu0 %3141
        %v3144 = vsel %vm1179, %v2551, %v3118
        %v3145 = vsel %vm492, %v3144, %v3122
        %v3146 = vsel %vm1182, %v3145, %v3126
        %v3147 = vsel %vm1184, %v3146, %v3130
        %v3148 = vsel %vm1186, %v3147, %v3134
        %v3149 = vsel %vm1188, %v3148, %v3138
        %v3150 = vsel %vm1190, %v3149, %v3142
        %v3151 = vlaneseq
        %v3152 = vshrl.u32 %v3151, 7
        %v3153 = vsub.s32 0, %v3152
        %v3154 = vrot.slane %v3150, %v3153
        %3155 = vrot.lane.b32.xlu0 %v2518, 56
        %v3156 = vpop.permute.xlu0 %3155
        %3157 = vrot.lane.b32.xlu0 %v2523, 56
        %v3158 = vpop.permute.xlu0 %3157
        %v3159 = vsel %vm1200, %v3156, 0
        %v3161 = vsel %vm1200, %v3158, 0
        %3163 = vmatprep.subr.mxu0 0.0
        %3164 = vmatpush1.msra.mxu0 %v383
        %3165 = vmatprep.subr.mxu0 0.0
        %3166 = vmatpush1.msra.mxu0 0.0
        %3167 = vmatprep.subr.mxu0 0.0
        %3168 = vmatpush1.msra.mxu0 0.0
        %3169 = vmatprep.subr.mxu0 0.0
        %3170 = vmatpush1.msra.mxu0 0.0
        %3171 = vmatprep.subr.mxu0 0.0
        %3172 = vmatpush1.msra.mxu0 0.0
        %3173 = vmatprep.subr.mxu0 0.0
        %3174 = vmatpush1.msra.mxu0 0.0
        %3175 = vmatprep.subr.mxu0 0.0
        %3176 = vmatpush1.msra.mxu0 0.0
        %3177 = vmatprep.subr.mxu0 0.0
        %3178 = vmatpush1.msra.mxu0 0.0
        %3179 = vmatprep.subr.mxu0 0.0
        %3180 = vmatpush1.msra.mxu0 0.0
        %3181 = vmatprep.subr.mxu0 0.0
        %3182 = vmatpush1.msra.mxu0 0.0
        %3183 = vmatprep.subr.mxu0 0.0
        %3184 = vmatpush1.msra.mxu0 0.0
        %3185 = vmatprep.subr.mxu0 0.0
        %3186 = vmatpush1.msra.mxu0 0.0
        %3187 = vmatprep.subr.mxu0 0.0
        %3188 = vmatpush1.msra.mxu0 0.0
        %3189 = vmatprep.subr.mxu0 0.0
        %3190 = vmatpush1.msra.mxu0 0.0
        %3191 = vmatprep.subr.mxu0 0.0
        %3192 = vmatpush1.msra.mxu0 0.0
        %3193 = vmatprep.subr.mxu0 0.0
        %3194 = vmatpush1.msra.mxu0 0.0
        %3195 = vmatprep.subr.mxu0 0.0
        %3196 = vmatpush1.msra.mxu0 0.0
        %3197 = vmatprep.subr.mxu0 0.0
        %3198 = vmatpush1.msra.mxu0 0.0
        %3199 = vmatprep.subr.mxu0 0.0
        %3200 = vmatpush1.msra.mxu0 0.0
        %3201 = vmatprep.subr.mxu0 0.0
        %3202 = vmatpush1.msra.mxu0 0.0
        %3203 = vmatprep.subr.mxu0 0.0
        %3204 = vmatpush1.msra.mxu0 0.0
        %3205 = vmatprep.subr.mxu0 0.0
        %3206 = vmatpush1.msra.mxu0 0.0
        %3207 = vmatprep.subr.mxu0 0.0
        %3208 = vmatpush1.msra.mxu0 0.0
        %3209 = vmatprep.subr.mxu0 0.0
        %3210 = vmatpush1.msra.mxu0 0.0
        %3211 = vmatprep.subr.mxu0 0.0
        %3212 = vmatpush1.msra.mxu0 0.0
        %3213 = vmatprep.subr.mxu0 0.0
        %3214 = vmatpush1.msra.mxu0 0.0
        %3215 = vmatprep.subr.mxu0 0.0
        %3216 = vmatpush1.msra.mxu0 0.0
        %3217 = vmatprep.subr.mxu0 0.0
        %3218 = vmatpush1.msra.mxu0 0.0
        %3219 = vmatprep.subr.mxu0 0.0
        %3220 = vmatpush1.msra.mxu0 0.0
        %3221 = vmatprep.subr.mxu0 0.0
        %3222 = vmatpush1.msra.mxu0 0.0
        %3223 = vmatprep.subr.mxu0 0.0
        %3224 = vmatpush1.msra.mxu0 0.0
        %3225 = vmatprep.subr.mxu0 0.0
        %3226 = vmatpush1.msra.mxu0 0.0
        %3227 = vmatprep.mubr.f32.mxu0 0.0
        %3228 = vmatmul.mubr.f32.gmra.mrb[0].mxu0 %v3159
        %v3229 = vpop.f32.mrb[0].mxu0
        %v3230 = vadd.f32 %v3154, %v3229
        %v3231 = vpop.f32.mrb[0].mxu0
        %3232 = vmatprep.mubr.f32.mxu0 0.0
        %3233 = vmatmul.mubr.f32.gmra.mrb[0].mxu0 %v3161
        %v3234 = vpop.f32.mrb[0].mxu0
        %v3235 = vadd.f32 %v3154, %v3234
        %v3236 = vpop.f32.mrb[0].mxu0
        %3237 = vdwg.mxu0
        %s3238 = scalar_lea.vmem %s365, 48
        %v3239 = vld [vmem:[%s3238] sm:$0xff]
        %v3240 = vld [vmem:[%s3238 + $0x8] sm:$0xff]
        %v3241 = vadd.f32 %v3230, %v3239
        %v3242 = vadd.f32 %v3235, %v3240
        %vm3243 = vcmp.gt.f32.partialorder %v3241, 0.0
        %vm3244 = vcmp.gt.f32.partialorder %v3242, 0.0
        %v3245 = vmul.f32 %v3241, 0.2
        %v3246 = vmul.f32 %v3242, 0.2
        %v3247 = vsel %vm3243, %v3241, %v3245
        %v3248 = vsel %vm3244, %v3242, %v3246
        %3249 = vmax.xlane.f32.xlu0 %v3247
        %v3250 = vpop.xlane.xlu0 %3249
        %3251 = vmax.xlane.f32.xlu0 %v3248
        %v3252 = vpop.xlane.xlu0 %3251
        %v3253 = vsub.f32 %v3247, %v3250
        %v3254 = vsub.f32 %v3248, %v3252
        %v3255 = vmul.f32 %v3253, 1.442695
        %v3256 = vpow.pop %v3255
        %v3257 = vmul.f32 %v3254, 1.442695
        %v3258 = vpow.pop %v3257
        %3259 = vmatprep.subr.mxu0 0.0
        %3260 = vmatpush1.msra.mxu0 %v1317
        %3261 = vmatprep.subr.mxu0 0.0
        %3262 = vmatpush1.msra.mxu0 %v1319
        %3263 = vmatprep.subr.mxu0 0.0
        %3264 = vmatpush1.msra.mxu0 %v1321
        %3265 = vmatprep.subr.mxu0 0.0
        %3266 = vmatpush1.msra.mxu0 %v1323
        %3267 = vmatprep.subr.mxu0 0.0
        %3268 = vmatpush1.msra.mxu0 %v1325
        %3269 = vmatprep.subr.mxu0 0.0
        %3270 = vmatpush1.msra.mxu0 %v1327
        %3271 = vmatprep.subr.mxu0 0.0
        %3272 = vmatpush1.msra.mxu0 %v1329
        %3273 = vmatprep.subr.mxu0 0.0
        %3274 = vmatpush1.msra.mxu0 %v1331
        %3275 = vmatprep.subr.mxu0 0.0
        %3276 = vmatpush1.msra.mxu0 %v1333
        %3277 = vmatprep.subr.mxu0 0.0
        %3278 = vmatpush1.msra.mxu0 %v1335
        %3279 = vmatprep.subr.mxu0 0.0
        %3280 = vmatpush1.msra.mxu0 %v1337
        %3281 = vmatprep.subr.mxu0 0.0
        %3282 = vmatpush1.msra.mxu0 %v1339
        %3283 = vmatprep.subr.mxu0 0.0
        %3284 = vmatpush1.msra.mxu0 %v1341
        %3285 = vmatprep.subr.mxu0 0.0
        %3286 = vmatpush1.msra.mxu0 %v1343
        %3287 = vmatprep.subr.mxu0 0.0
        %3288 = vmatpush1.msra.mxu0 %v1345
        %3289 = vmatprep.subr.mxu0 0.0
        %3290 = vmatpush1.msra.mxu0 %v1347
        %3291 = vmatprep.subr.mxu0 0.0
        %3292 = vmatpush1.msra.mxu0 0.0
        %3293 = vmatprep.subr.mxu0 0.0
        %3294 = vmatpush1.msra.mxu0 0.0
        %3295 = vmatprep.subr.mxu0 0.0
        %3296 = vmatpush1.msra.mxu0 0.0
        %3297 = vmatprep.subr.mxu0 0.0
        %3298 = vmatpush1.msra.mxu0 0.0
        %3299 = vmatprep.subr.mxu0 0.0
        %3300 = vmatpush1.msra.mxu0 0.0
        %3301 = vmatprep.subr.mxu0 0.0
        %3302 = vmatpush1.msra.mxu0 0.0
        %3303 = vmatprep.subr.mxu0 0.0
        %3304 = vmatpush1.msra.mxu0 0.0
        %3305 = vmatprep.subr.mxu0 0.0
        %3306 = vmatpush1.msra.mxu0 0.0
        %3307 = vmatprep.subr.mxu0 0.0
        %3308 = vmatpush1.msra.mxu0 0.0
        %3309 = vmatprep.subr.mxu0 0.0
        %3310 = vmatpush1.msra.mxu0 0.0
        %3311 = vmatprep.subr.mxu0 0.0
        %3312 = vmatpush1.msra.mxu0 0.0
        %3313 = vmatprep.subr.mxu0 0.0
        %3314 = vmatpush1.msra.mxu0 0.0
        %3315 = vmatprep.subr.mxu0 0.0
        %3316 = vmatpush1.msra.mxu0 0.0
        %3317 = vmatprep.subr.mxu0 0.0
        %3318 = vmatpush1.msra.mxu0 0.0
        %3319 = vmatprep.subr.mxu0 0.0
        %3320 = vmatpush1.msra.mxu0 0.0
        %3321 = vmatprep.subr.mxu0 0.0
        %3322 = vmatpush1.msra.mxu0 0.0
        %3323 = vmatprep.mubr.f32.mxu0 0.0
        %3324 = vmatmul.mubr.f32.gmra.mrb[0].mxu0 %v3256
        %v3325 = vpop.f32.mrb[0].mxu0
        %v3326 = vadd.f32 0.0, %v3325
        %v3327 = vpop.f32.mrb[0].mxu0
        %3328 = vmatprep.mubr.f32.mxu0 0.0
        %3329 = vmatmul.mubr.f32.gmra.mrb[0].mxu0 %v3258
        %v3330 = vpop.f32.mrb[0].mxu0
        %v3331 = vadd.f32 0.0, %v3330
        %v3332 = vpop.f32.mrb[0].mxu0
        %3333 = vdwg.mxu0
        %v3334 = vmax.f32 %v3326, 1e-30
        %v3335 = vmax.f32 %v3331, 1e-30
        %v3336 = vrcp.pop %v3334
        %v3337 = vrcp.pop %v3335
        %v3339 = vsel %vm1200, %v3336, 0
        %v3342 = vsel %vm1200, %v3337, 0
        %3344 = vmatprep.subr.mxu0 0.0
        %3345 = vmatpush1.msra.mxu0 %v383
        %3346 = vmatprep.subr.mxu0 0.0
        %3347 = vmatpush1.msra.mxu0 0.0
        %3348 = vmatprep.subr.mxu0 0.0
        %3349 = vmatpush1.msra.mxu0 0.0
        %3350 = vmatprep.subr.mxu0 0.0
        %3351 = vmatpush1.msra.mxu0 0.0
        %3352 = vmatprep.subr.mxu0 0.0
        %3353 = vmatpush1.msra.mxu0 0.0
        %3354 = vmatprep.subr.mxu0 0.0
        %3355 = vmatpush1.msra.mxu0 0.0
        %3356 = vmatprep.subr.mxu0 0.0
        %3357 = vmatpush1.msra.mxu0 0.0
        %3358 = vmatprep.subr.mxu0 0.0
        %3359 = vmatpush1.msra.mxu0 0.0
        %3360 = vmatprep.subr.mxu0 0.0
        %3361 = vmatpush1.msra.mxu0 0.0
        %3362 = vmatprep.subr.mxu0 0.0
        %3363 = vmatpush1.msra.mxu0 0.0
        %3364 = vmatprep.subr.mxu0 0.0
        %3365 = vmatpush1.msra.mxu0 0.0
        %3366 = vmatprep.subr.mxu0 0.0
        %3367 = vmatpush1.msra.mxu0 0.0
        %3368 = vmatprep.subr.mxu0 0.0
        %3369 = vmatpush1.msra.mxu0 0.0
        %3370 = vmatprep.subr.mxu0 0.0
        %3371 = vmatpush1.msra.mxu0 0.0
        %3372 = vmatprep.subr.mxu0 0.0
        %3373 = vmatpush1.msra.mxu0 0.0
        %3374 = vmatprep.subr.mxu0 0.0
        %3375 = vmatpush1.msra.mxu0 0.0
        %3376 = vmatprep.subr.mxu0 0.0
        %3377 = vmatpush1.msra.mxu0 0.0
        %3378 = vmatprep.subr.mxu0 0.0
        %3379 = vmatpush1.msra.mxu0 0.0
        %3380 = vmatprep.subr.mxu0 0.0
        %3381 = vmatpush1.msra.mxu0 0.0
        %3382 = vmatprep.subr.mxu0 0.0
        %3383 = vmatpush1.msra.mxu0 0.0
        %3384 = vmatprep.subr.mxu0 0.0
        %3385 = vmatpush1.msra.mxu0 0.0
        %3386 = vmatprep.subr.mxu0 0.0
        %3387 = vmatpush1.msra.mxu0 0.0
        %3388 = vmatprep.subr.mxu0 0.0
        %3389 = vmatpush1.msra.mxu0 0.0
        %3390 = vmatprep.subr.mxu0 0.0
        %3391 = vmatpush1.msra.mxu0 0.0
        %3392 = vmatprep.subr.mxu0 0.0
        %3393 = vmatpush1.msra.mxu0 0.0
        %3394 = vmatprep.subr.mxu0 0.0
        %3395 = vmatpush1.msra.mxu0 0.0
        %3396 = vmatprep.subr.mxu0 0.0
        %3397 = vmatpush1.msra.mxu0 0.0
        %3398 = vmatprep.subr.mxu0 0.0
        %3399 = vmatpush1.msra.mxu0 0.0
        %3400 = vmatprep.subr.mxu0 0.0
        %3401 = vmatpush1.msra.mxu0 0.0
        %3402 = vmatprep.subr.mxu0 0.0
        %3403 = vmatpush1.msra.mxu0 0.0
        %3404 = vmatprep.subr.mxu0 0.0
        %3405 = vmatpush1.msra.mxu0 0.0
        %3406 = vmatprep.subr.mxu0 0.0
        %3407 = vmatpush1.msra.mxu0 0.0
        %3408 = vmatprep.mubr.f32.mxu0 0.0
        %3409 = vmatmul.mubr.f32.gmra.mrb[0].mxu0 %v3339
        %v3410 = vpop.f32.mrb[0].mxu0
        %v3411 = vadd.f32 0.0, %v3410
        %v3412 = vpop.f32.mrb[0].mxu0
        %3413 = vmatprep.mubr.f32.mxu0 0.0
        %3414 = vmatmul.mubr.f32.gmra.mrb[0].mxu0 %v3342
        %v3415 = vpop.f32.mrb[0].mxu0
        %v3416 = vadd.f32 0.0, %v3415
        %v3417 = vpop.f32.mrb[0].mxu0
        %3418 = vdwg.mxu0
        %v3419 = vmul.f32 %v3256, %v3411
        %v3420 = vmul.f32 %v3258, %v3416
        %3421 = vrot.lane.b32.xlu0 %v2518, 88
        %v3422 = vpop.permute.xlu0 %3421
        %3423 = vrot.lane.b32.xlu0 %v2523, 88
        %v3424 = vpop.permute.xlu0 %3423
        %3427 = vmatprep.subr.mxu0 0.0
        %3428 = vmatpush1.msra.mxu0 %v3422
        %3429 = vmatprep.subr.mxu0 0.0
        %3430 = vmatpush1.msra.mxu0 %v3424
        %3431 = vmatprep.subr.mxu0 0.0
        %3432 = vmatpush1.msra.mxu0 0.0
        %3433 = vmatprep.subr.mxu0 0.0
        %3434 = vmatpush1.msra.mxu0 0.0
        %3435 = vmatprep.subr.mxu0 0.0
        %3436 = vmatpush1.msra.mxu0 0.0
        %3437 = vmatprep.subr.mxu0 0.0
        %3438 = vmatpush1.msra.mxu0 0.0
        %3439 = vmatprep.subr.mxu0 0.0
        %3440 = vmatpush1.msra.mxu0 0.0
        %3441 = vmatprep.subr.mxu0 0.0
        %3442 = vmatpush1.msra.mxu0 0.0
        %3443 = vmatprep.subr.mxu0 0.0
        %3444 = vmatpush1.msra.mxu0 0.0
        %3445 = vmatprep.subr.mxu0 0.0
        %3446 = vmatpush1.msra.mxu0 0.0
        %3447 = vmatprep.subr.mxu0 0.0
        %3448 = vmatpush1.msra.mxu0 0.0
        %3449 = vmatprep.subr.mxu0 0.0
        %3450 = vmatpush1.msra.mxu0 0.0
        %3451 = vmatprep.subr.mxu0 0.0
        %3452 = vmatpush1.msra.mxu0 0.0
        %3453 = vmatprep.subr.mxu0 0.0
        %3454 = vmatpush1.msra.mxu0 0.0
        %3455 = vmatprep.subr.mxu0 0.0
        %3456 = vmatpush1.msra.mxu0 0.0
        %3457 = vmatprep.subr.mxu0 0.0
        %3458 = vmatpush1.msra.mxu0 0.0
        %3459 = vmatprep.subr.mxu0 0.0
        %3460 = vmatpush1.msra.mxu0 0.0
        %3461 = vmatprep.subr.mxu0 0.0
        %3462 = vmatpush1.msra.mxu0 0.0
        %3463 = vmatprep.subr.mxu0 0.0
        %3464 = vmatpush1.msra.mxu0 0.0
        %3465 = vmatprep.subr.mxu0 0.0
        %3466 = vmatpush1.msra.mxu0 0.0
        %3467 = vmatprep.subr.mxu0 0.0
        %3468 = vmatpush1.msra.mxu0 0.0
        %3469 = vmatprep.subr.mxu0 0.0
        %3470 = vmatpush1.msra.mxu0 0.0
        %3471 = vmatprep.subr.mxu0 0.0
        %3472 = vmatpush1.msra.mxu0 0.0
        %3473 = vmatprep.subr.mxu0 0.0
        %3474 = vmatpush1.msra.mxu0 0.0
        %3475 = vmatprep.subr.mxu0 0.0
        %3476 = vmatpush1.msra.mxu0 0.0
        %3477 = vmatprep.subr.mxu0 0.0
        %3478 = vmatpush1.msra.mxu0 0.0
        %3479 = vmatprep.subr.mxu0 0.0
        %3480 = vmatpush1.msra.mxu0 0.0
        %3481 = vmatprep.subr.mxu0 0.0
        %3482 = vmatpush1.msra.mxu0 0.0
        %3483 = vmatprep.subr.mxu0 0.0
        %3484 = vmatpush1.msra.mxu0 0.0
        %3485 = vmatprep.subr.mxu0 0.0
        %3486 = vmatpush1.msra.mxu0 0.0
        %3487 = vmatprep.subr.mxu0 0.0
        %3488 = vmatpush1.msra.mxu0 0.0
        %3489 = vmatprep.subr.mxu0 0.0
        %3490 = vmatpush1.msra.mxu0 0.0
        %3491 = vmatprep.mubr.f32.mxu0 0.0
        %3492 = vmatmul.mubr.f32.gmra.mrb[0].mxu0 %v1526
        %v3493 = vpop.f32.mrb[0].mxu0
        %v3494 = vadd.f32 0.0, %v3493
        %v3495 = vpop.f32.mrb[0].mxu0
        %3496 = vmatprep.mubr.f32.mxu0 0.0
        %3497 = vmatmul.mubr.f32.gmra.mrb[0].mxu0 %v1528
        %v3498 = vpop.f32.mrb[0].mxu0
        %v3499 = vadd.f32 0.0, %v3498
        %v3500 = vpop.f32.mrb[0].mxu0
        %3501 = vmatprep.mubr.f32.mxu0 0.0
        %3502 = vmatmul.mubr.f32.gmra.mrb[0].mxu0 %v1530
        %v3503 = vpop.f32.mrb[0].mxu0
        %v3504 = vadd.f32 0.0, %v3503
        %v3505 = vpop.f32.mrb[0].mxu0
        %3506 = vmatprep.mubr.f32.mxu0 0.0
        %3507 = vmatmul.mubr.f32.gmra.mrb[0].mxu0 %v1532
        %v3508 = vpop.f32.mrb[0].mxu0
        %v3509 = vadd.f32 0.0, %v3508
        %v3510 = vpop.f32.mrb[0].mxu0
        %3511 = vmatprep.mubr.f32.mxu0 0.0
        %3512 = vmatmul.mubr.f32.gmra.mrb[0].mxu0 %v1534
        %v3513 = vpop.f32.mrb[0].mxu0
        %v3514 = vadd.f32 0.0, %v3513
        %v3515 = vpop.f32.mrb[0].mxu0
        %3516 = vmatprep.mubr.f32.mxu0 0.0
        %3517 = vmatmul.mubr.f32.gmra.mrb[0].mxu0 %v1536
        %v3518 = vpop.f32.mrb[0].mxu0
        %v3519 = vadd.f32 0.0, %v3518
        %v3520 = vpop.f32.mrb[0].mxu0
        %3521 = vmatprep.mubr.f32.mxu0 0.0
        %3522 = vmatmul.mubr.f32.gmra.mrb[0].mxu0 %v1538
        %v3523 = vpop.f32.mrb[0].mxu0
        %v3524 = vadd.f32 0.0, %v3523
        %v3525 = vpop.f32.mrb[0].mxu0
        %3526 = vmatprep.mubr.f32.mxu0 0.0
        %3527 = vmatmul.mubr.f32.gmra.mrb[0].mxu0 %v1540
        %v3528 = vpop.f32.mrb[0].mxu0
        %v3529 = vadd.f32 0.0, %v3528
        %v3530 = vpop.f32.mrb[0].mxu0
        %3531 = vmatprep.mubr.f32.mxu0 0.0
        %3532 = vmatmul.mubr.f32.gmra.mrb[0].mxu0 %v1542
        %v3533 = vpop.f32.mrb[0].mxu0
        %v3534 = vadd.f32 0.0, %v3533
        %v3535 = vpop.f32.mrb[0].mxu0
        %3536 = vmatprep.mubr.f32.mxu0 0.0
        %3537 = vmatmul.mubr.f32.gmra.mrb[0].mxu0 %v1544
        %v3538 = vpop.f32.mrb[0].mxu0
        %v3539 = vadd.f32 0.0, %v3538
        %v3540 = vpop.f32.mrb[0].mxu0
        %3541 = vmatprep.mubr.f32.mxu0 0.0
        %3542 = vmatmul.mubr.f32.gmra.mrb[0].mxu0 %v1546
        %v3543 = vpop.f32.mrb[0].mxu0
        %v3544 = vadd.f32 0.0, %v3543
        %v3545 = vpop.f32.mrb[0].mxu0
        %3546 = vmatprep.mubr.f32.mxu0 0.0
        %3547 = vmatmul.mubr.f32.gmra.mrb[0].mxu0 %v1548
        %v3548 = vpop.f32.mrb[0].mxu0
        %v3549 = vadd.f32 0.0, %v3548
        %v3550 = vpop.f32.mrb[0].mxu0
        %3551 = vmatprep.mubr.f32.mxu0 0.0
        %3552 = vmatmul.mubr.f32.gmra.mrb[0].mxu0 %v1550
        %v3553 = vpop.f32.mrb[0].mxu0
        %v3554 = vadd.f32 0.0, %v3553
        %v3555 = vpop.f32.mrb[0].mxu0
        %3556 = vmatprep.mubr.f32.mxu0 0.0
        %3557 = vmatmul.mubr.f32.gmra.mrb[0].mxu0 %v1552
        %v3558 = vpop.f32.mrb[0].mxu0
        %v3559 = vadd.f32 0.0, %v3558
        %v3560 = vpop.f32.mrb[0].mxu0
        %3561 = vmatprep.mubr.f32.mxu0 0.0
        %3562 = vmatmul.mubr.f32.gmra.mrb[0].mxu0 %v1554
        %v3563 = vpop.f32.mrb[0].mxu0
        %v3564 = vadd.f32 0.0, %v3563
        %v3565 = vpop.f32.mrb[0].mxu0
        %3566 = vmatprep.mubr.f32.mxu0 0.0
        %3567 = vmatmul.mubr.f32.gmra.mrb[0].mxu0 %v1556
        %v3568 = vpop.f32.mrb[0].mxu0
        %v3569 = vadd.f32 0.0, %v3568
        %v3570 = vpop.f32.mrb[0].mxu0
        %3571 = vdwg.mxu0
        %v3572 = vmul.f32 %v3494, %v1704
        %v3573 = vmul.f32 %v3499, %v1706
        %v3574 = vmul.f32 %v3504, %v1708
        %v3575 = vmul.f32 %v3509, %v1710
        %v3576 = vmul.f32 %v3514, %v1712
        %v3577 = vmul.f32 %v3519, %v1714
        %v3578 = vmul.f32 %v3524, %v1716
        %v3579 = vmul.f32 %v3529, %v1718
        %v3580 = vmul.f32 %v3534, %v1720
        %v3581 = vmul.f32 %v3539, %v1722
        %v3582 = vmul.f32 %v3544, %v1724
        %v3583 = vmul.f32 %v3549, %v1726
        %v3584 = vmul.f32 %v3554, %v1728
        %v3585 = vmul.f32 %v3559, %v1730
        %v3586 = vmul.f32 %v3564, %v1732
        %v3587 = vmul.f32 %v3569, %v1734
        %3588 = vmatprep.subr.mxu0 0.0
        %3589 = vmatpush1.msra.mxu0 %v3572
        %3590 = vmatprep.subr.mxu0 0.0
        %3591 = vmatpush1.msra.mxu0 %v3573
        %3592 = vmatprep.subr.mxu0 0.0
        %3593 = vmatpush1.msra.mxu0 %v3574
        %3594 = vmatprep.subr.mxu0 0.0
        %3595 = vmatpush1.msra.mxu0 %v3575
        %3596 = vmatprep.subr.mxu0 0.0
        %3597 = vmatpush1.msra.mxu0 %v3576
        %3598 = vmatprep.subr.mxu0 0.0
        %3599 = vmatpush1.msra.mxu0 %v3577
        %3600 = vmatprep.subr.mxu0 0.0
        %3601 = vmatpush1.msra.mxu0 %v3578
        %3602 = vmatprep.subr.mxu0 0.0
        %3603 = vmatpush1.msra.mxu0 %v3579
        %3604 = vmatprep.subr.mxu0 0.0
        %3605 = vmatpush1.msra.mxu0 %v3580
        %3606 = vmatprep.subr.mxu0 0.0
        %3607 = vmatpush1.msra.mxu0 %v3581
        %3608 = vmatprep.subr.mxu0 0.0
        %3609 = vmatpush1.msra.mxu0 %v3582
        %3610 = vmatprep.subr.mxu0 0.0
        %3611 = vmatpush1.msra.mxu0 %v3583
        %3612 = vmatprep.subr.mxu0 0.0
        %3613 = vmatpush1.msra.mxu0 %v3584
        %3614 = vmatprep.subr.mxu0 0.0
        %3615 = vmatpush1.msra.mxu0 %v3585
        %3616 = vmatprep.subr.mxu0 0.0
        %3617 = vmatpush1.msra.mxu0 %v3586
        %3618 = vmatprep.subr.mxu0 0.0
        %3619 = vmatpush1.msra.mxu0 %v3587
        %3620 = vmatprep.subr.mxu0 0.0
        %3621 = vmatpush1.msra.mxu0 0.0
        %3622 = vmatprep.subr.mxu0 0.0
        %3623 = vmatpush1.msra.mxu0 0.0
        %3624 = vmatprep.subr.mxu0 0.0
        %3625 = vmatpush1.msra.mxu0 0.0
        %3626 = vmatprep.subr.mxu0 0.0
        %3627 = vmatpush1.msra.mxu0 0.0
        %3628 = vmatprep.subr.mxu0 0.0
        %3629 = vmatpush1.msra.mxu0 0.0
        %3630 = vmatprep.subr.mxu0 0.0
        %3631 = vmatpush1.msra.mxu0 0.0
        %3632 = vmatprep.subr.mxu0 0.0
        %3633 = vmatpush1.msra.mxu0 0.0
        %3634 = vmatprep.subr.mxu0 0.0
        %3635 = vmatpush1.msra.mxu0 0.0
        %3636 = vmatprep.subr.mxu0 0.0
        %3637 = vmatpush1.msra.mxu0 0.0
        %3638 = vmatprep.subr.mxu0 0.0
        %3639 = vmatpush1.msra.mxu0 0.0
        %3640 = vmatprep.subr.mxu0 0.0
        %3641 = vmatpush1.msra.mxu0 0.0
        %3642 = vmatprep.subr.mxu0 0.0
        %3643 = vmatpush1.msra.mxu0 0.0
        %3644 = vmatprep.subr.mxu0 0.0
        %3645 = vmatpush1.msra.mxu0 0.0
        %3646 = vmatprep.subr.mxu0 0.0
        %3647 = vmatpush1.msra.mxu0 0.0
        %3648 = vmatprep.subr.mxu0 0.0
        %3649 = vmatpush1.msra.mxu0 0.0
        %3650 = vmatprep.subr.mxu0 0.0
        %3651 = vmatpush1.msra.mxu0 0.0
        %3652 = vmatprep.mubr.f32.mxu0 0.0
        %3653 = vmatmul.mubr.f32.gmra.mrb[0].mxu0 %v3419
        %v3654 = vpop.f32.mrb[0].mxu0
        %v3655 = vadd.f32 0.0, %v3654
        %v3656 = vpop.f32.mrb[0].mxu0
        %3657 = vmatprep.mubr.f32.mxu0 0.0
        %3658 = vmatmul.mubr.f32.gmra.mrb[0].mxu0 %v3420
        %v3659 = vpop.f32.mrb[0].mxu0
        %v3660 = vadd.f32 0.0, %v3659
        %v3661 = vpop.f32.mrb[0].mxu0
        %3662 = vdwg.mxu0
        %v3663 = vadd.f32 %v3113, %v3655
        %v3664 = vadd.f32 %v3114, %v3660
        %v3665 = vmax.f32 %v3663, 0.0
        %v3666 = vmax.f32 %v3664, 0.0
        %v3667 = vsel %vm492, %v3665, 0.0
        %3668 = vadd.xlane.f32.xlu0 %v3667
        %v3669 = vpop.xlane.xlu0 %3668
        %v3670 = vsel %vm492, %v3666, 0.0
        %3671 = vadd.xlane.f32.xlu0 %v3670
        %v3672 = vpop.xlane.xlu0 %3671
        %v3673 = vmul.f32 %v3669, %v2406
        %v3674 = vmul.f32 %v3672, %v2406
        %v3675 = vsub.f32 %v3665, %v3673
        %v3676 = vsub.f32 %v3666, %v3674
        %v3677 = vmul.f32 %v3675, %v3675
        %v3678 = vmul.f32 %v3676, %v3676
        %v3679 = vsel %vm492, %v3677, 0.0
        %3680 = vadd.xlane.f32.xlu0 %v3679
        %v3681 = vpop.xlane.xlu0 %3680
        %v3682 = vsel %vm492, %v3678, 0.0
        %3683 = vadd.xlane.f32.xlu0 %v3682
        %v3684 = vpop.xlane.xlu0 %3683
        %v3685 = vmul.f32 %v3681, %v2406
        %v3686 = vmul.f32 %v3684, %v2406
        %v3687 = vadd.f32 %v3685, 1e-05
        %v3688 = vadd.f32 %v3686, 1e-05
        %v3689 = vrsqrt.pop %v3687
        %v3690 = vrsqrt.pop %v3688
        %v3691 = vmul.f32 %v3675, %v3689
        %v3692 = vmul.f32 %v3676, %v3690
        %v3693 = vld [vmem:[%s5 + $0x4] sm:$0x1]
        %v3694 = vlaneseq
        %v3695 = vshrl.u32 %v3694, 7
        %v3696 = vsub.s32 0, %v3695
        %v3697 = vrot.slane %v3693, %v3696
        %v3698 = vmul.f32 %v3691, %v3697
        %v3699 = vmul.f32 %v3692, %v3697
        %v3700 = vld [vmem:[%s5 + $0x6] sm:$0x1]
        %v3701 = vlaneseq
        %v3702 = vshrl.u32 %v3701, 7
        %v3703 = vsub.s32 0, %v3702
        %v3704 = vrot.slane %v3700, %v3703
        %v3705 = vadd.f32 %v3698, %v3704
        %v3706 = vadd.f32 %v3699, %v3704
        %v3707 = vadd.f32 %v3705, %v1022
        %v3708 = vadd.f32 %v3706, %v1023
        %v3709 = vld [vmem:[#allocation5 + $0x18] sm:$0xff]
        %v3710 = vld [vmem:[#allocation5 + $0x38] sm:$0xff]
        %v3711 = vld [vmem:[#allocation5 + $0x58] sm:$0xff]
        %v3712 = vld [vmem:[#allocation5 + $0x78] sm:$0xff]
        %v3713 = vld [vmem:[%s5 + $0x7] sm:$0x1]
        %v3714 = vlaneseq
        %v3715 = vshrl.u32 %v3714, 7
        %v3716 = vsub.s32 0, %v3715
        %v3717 = vrot.slane %v3713, %v3716
        %v3719 = vsel %vm492, %v3707, 0
        %v3722 = vsel %vm492, %v3708, 0
        %3724 = vmatprep.subr.mxu0 0.0
        %3725 = vmatpush1.msra.mxu0 %v3709
        %3726 = vmatprep.subr.mxu0 0.0
        %3727 = vmatpush1.msra.mxu0 %v3710
        %3728 = vmatprep.subr.mxu0 0.0
        %3729 = vmatpush1.msra.mxu0 %v3711
        %3730 = vmatprep.subr.mxu0 0.0
        %3731 = vmatpush1.msra.mxu0 %v3712
        %3732 = vmatprep.subr.mxu0 0.0
        %3733 = vmatpush1.msra.mxu0 0.0
        %3734 = vmatprep.subr.mxu0 0.0
        %3735 = vmatpush1.msra.mxu0 0.0
        %3736 = vmatprep.subr.mxu0 0.0
        %3737 = vmatpush1.msra.mxu0 0.0
        %3738 = vmatprep.subr.mxu0 0.0
        %3739 = vmatpush1.msra.mxu0 0.0
        %3740 = vmatprep.subr.mxu0 0.0
        %3741 = vmatpush1.msra.mxu0 0.0
        %3742 = vmatprep.subr.mxu0 0.0
        %3743 = vmatpush1.msra.mxu0 0.0
        %3744 = vmatprep.subr.mxu0 0.0
        %3745 = vmatpush1.msra.mxu0 0.0
        %3746 = vmatprep.subr.mxu0 0.0
        %3747 = vmatpush1.msra.mxu0 0.0
        %3748 = vmatprep.subr.mxu0 0.0
        %3749 = vmatpush1.msra.mxu0 0.0
        %3750 = vmatprep.subr.mxu0 0.0
        %3751 = vmatpush1.msra.mxu0 0.0
        %3752 = vmatprep.subr.mxu0 0.0
        %3753 = vmatpush1.msra.mxu0 0.0
        %3754 = vmatprep.subr.mxu0 0.0
        %3755 = vmatpush1.msra.mxu0 0.0
        %3756 = vmatprep.subr.mxu0 0.0
        %3757 = vmatpush1.msra.mxu0 0.0
        %3758 = vmatprep.subr.mxu0 0.0
        %3759 = vmatpush1.msra.mxu0 0.0
        %3760 = vmatprep.subr.mxu0 0.0
        %3761 = vmatpush1.msra.mxu0 0.0
        %3762 = vmatprep.subr.mxu0 0.0
        %3763 = vmatpush1.msra.mxu0 0.0
        %3764 = vmatprep.subr.mxu0 0.0
        %3765 = vmatpush1.msra.mxu0 0.0
        %3766 = vmatprep.subr.mxu0 0.0
        %3767 = vmatpush1.msra.mxu0 0.0
        %3768 = vmatprep.subr.mxu0 0.0
        %3769 = vmatpush1.msra.mxu0 0.0
        %3770 = vmatprep.subr.mxu0 0.0
        %3771 = vmatpush1.msra.mxu0 0.0
        %3772 = vmatprep.subr.mxu0 0.0
        %3773 = vmatpush1.msra.mxu0 0.0
        %3774 = vmatprep.subr.mxu0 0.0
        %3775 = vmatpush1.msra.mxu0 0.0
        %3776 = vmatprep.subr.mxu0 0.0
        %3777 = vmatpush1.msra.mxu0 0.0
        %3778 = vmatprep.subr.mxu0 0.0
        %3779 = vmatpush1.msra.mxu0 0.0
        %3780 = vmatprep.subr.mxu0 0.0
        %3781 = vmatpush1.msra.mxu0 0.0
        %3782 = vmatprep.subr.mxu0 0.0
        %3783 = vmatpush1.msra.mxu0 0.0
        %3784 = vmatprep.subr.mxu0 0.0
        %3785 = vmatpush1.msra.mxu0 0.0
        %3786 = vmatprep.subr.mxu0 0.0
        %3787 = vmatpush1.msra.mxu0 0.0
        %3788 = vmatprep.mubr.f32.mxu0 0.0
        %3789 = vmatmul.mubr.f32.gmra.mrb[0].mxu0 %v3719
        %v3790 = vpop.f32.mrb[0].mxu0
        %v3791 = vadd.f32 %v3717, %v3790
        %v3792 = vpop.f32.mrb[0].mxu0
        %3793 = vmatprep.mubr.f32.mxu0 0.0
        %3794 = vmatmul.mubr.f32.gmra.mrb[0].mxu0 %v3722
        %v3795 = vpop.f32.mrb[0].mxu0
        %v3796 = vadd.f32 %v3717, %v3795
        %v3797 = vpop.f32.mrb[0].mxu0
        %3798 = vdwg.mxu0
        %3799 = vst [vmem:[%s355] sm:$0xff] %v3791
        %3800 = vst [vmem:[%s355 + $0x8] sm:$0xff] %v3796
        %s3801 = sand.u32 %s195, 1
        %s3802 = scalar_lea.sflag [#allocation4], %s3801
        %s3803 = sand.u32 %s195, 1
        %s3804 = smul.addr %s3803, 16
        %s3805 = scalar_lea.vmem [#allocation8], %s3804
        // Predicated region
        $region61: #{tpu_custom_call.1} parent=47 // pred_check
          %p3806 = pneg %p205
        $region62: #{tpu_custom_call.1} parent=47 // pred_check_branch
          %3808 = sbr.rel (%p3806) target = $region64
        $region63: #{tpu_custom_call.1} parent=47 // pred_region
          %s3810 = ssub.s32 256, 256
          %3811 = vsyncadd %s3802, %s3810
          %s3812 = smul.addr %s25, 2
          %s3813 = smul.addr %s3812, 128
          %s3814 = scalar_lea.hbm %s7, %s3813
          %s3815 = sshll.u32 %s3805, 4
          %s3816 = int_to_ptr.vmem [resolvable:$true] %s3815
          %3821 = dma.vmem_to_hbm [thread:$0]  %s3816, 256, %s3814, %s3802, 128, 128, 8
        $region64: #{tpu_custom_call.1} parent=47 // pred_fallthru
          _
      $region48: #{tpu_custom_call.1} parent=5 // pred_fallthru
        _
      %p3822 = scmp.le.s32.totalorder 2, %s20
      // Predicated region
      $region65: #{tpu_custom_call.1} parent=5 // pred_check
        %p3823 = pneg %p3822
      $region66: #{tpu_custom_call.1} parent=5 // pred_check_branch
        %3825 = sbr.rel (%p3823) target = $region68
      $region67: #{tpu_custom_call.1} parent=5 // pred_region
        %s3826 = ssub.s32 %s20, 2
        // Predicated region
        $region69: #{tpu_custom_call.1} parent=67 // pred_check
          %p3827 = pneg %p211
        $region70: #{tpu_custom_call.1} parent=67 // pred_check_branch
          %3829 = sbr.rel (%p3827) target = $region72
        $region71: #{tpu_custom_call.1} parent=67 // pred_region
          %s3830 = sand.u32 %s196, 1
          %s3831 = scalar_lea.sflag [#allocation4], %s3830
          %s3832 = sand.u32 %s196, 1
          %s3833 = smul.addr %s3832, 16
          %s3834 = scalar_lea.vmem [#allocation8], %s3833
          %3835 = dma.done %s3831, 256
        $region72: #{tpu_custom_call.1} parent=67 // pred_fallthru
          _
      $region68: #{tpu_custom_call.1} parent=5 // pred_fallthru
        _
    $region6: #{tpu_custom_call.1} parent=1 // loop_footer
      %s24 = sadd.s32 1, %s20
    $region7: #{tpu_custom_call.1} parent=1 // loop_footer_branch
      %19 = sbr.rel target = $region3
    $region8: #{tpu_custom_call.1} parent=1 // loop_exit
      _
    %3836 = vsyncpa [#allocation3], 1
    %s3837 = scalar_lea.sflag [#allocation3], 1
    %3838 = vsyncpa %s3837, 1
    %3839 = vsyncpa [#allocation6], 1
    %3840 = vsyncpa [#allocation4], 1
    %s3841 = scalar_lea.sflag [#allocation4], 1
    %3842 = vsyncpa %s3841, 1

</llo_original>
